<compile_context>
chip_gen: v7x
topology: tpu7x:2x2x1
jax: 0.10.0
libtpu: 0.0.40
codegen_flags: <defaults>
</compile_context>

<pallas_src>
import functools

import jax
import jax.numpy as jnp
import numpy as np
from jax.experimental import pallas as pl
from jax.experimental.pallas import tpu as pltpu

EPS = 1e-6      # VN eps (norms, LeakyReLU denom, Linear bias direction)
LN_EPS = 1e-5   # torch.nn.LayerNorm default eps
BN_EPS = 1e-5   # torch.nn.BatchNorm1d default eps


def _bias_dir(bias, eps=EPS):
    # eps * bias / ||bias||.  NOTE: the clamp only deviates from PyTorch for an
    # exactly-zero bias row (torch would produce inf/NaN there).
    nrm = jnp.linalg.norm(bias, axis=1, keepdims=True)
    return eps * bias / jnp.maximum(nrm, 1e-12)


def _choose_nt(n, c, bytes_per_elem=4, vmem_budget=16 << 20):
    """Points-axis tile sized from a VMEM budget.

    Per-step footprint ~ (in + out) * 2 buffers * C * 8 (3->8 sublane pad) * nt * 4B.
    Keeps the budget well under the 32 MiB scoped default (v7x-safe).
    """
    per_point = 4 * c * 8 * bytes_per_elem
    max_nt = max(128, vmem_budget // per_point)
    if n <= max_nt:
        return n
    t = (max_nt // 128) * 128
    while t >= 128:
        if n % t == 0:
            return t
        t -= 128
    # TODO(synk): ragged/huge prime N would need pl.cdiv + masked tail handling.
    return n


# ---------------------------------------------------------------------------
# Pass 1: QKZ proj + multi-head VN attention + Wo + LayerNorm1 + residual,
#          and BatchNorm statistics of the first MLP linear output.
# ---------------------------------------------------------------------------
def _attn_ln1_kernel(x_ref, w4_ref, u4_ref, g1_ref, b1_ref, w1t_ref, u1_ref,
                     y_ref, st_ref, *, num_heads, scale):
    # x_ref : (1, C, 3, N)   original [B, C, 3, N] layout, N lane-dense
    # w4_ref: (4, C, C)      [wq^T, wk^T, wz^T, wo^T], resident
    # u4_ref: (4, C, 3)      eps-scaled bias directions
    # g1/b1 : (C, 1)         LayerNorm1 affine
    # w1t   : (C, C), u1: (C, 3)   first MLP linear (for BN statistics)
    # y_ref : (1, C, 3, N)   attention + LN1 + residual output
    # st_ref: (1, C, 2)      per-channel [sum, sumsq] of ||W1 y + u1|| + EPS over N
    C = x_ref.shape[1]
    ch = C // num_heads

    x = [x_ref[0, :, d, :] for d in range(3)]                       # 3 x (C, N)

    def proj(i):
        w = w4_ref[i]
        return [jnp.dot(w, x[d], preferred_element_type=jnp.float32)
                + u4_ref[i, :, d:d + 1] for d in range(3)]

    q, k, z = proj(0), proj(1), proj(2)

    # Multi-head VN (Frobenius) attention.  No Q transpose: contract channel
    # dim 0 of both operands (transposed-LHS matmul on the MXU).
    heads = [[None] * num_heads for _ in range(3)]                  # [d][h] -> (ch, M)
    for h in range(num_heads):
        sl = slice(h * ch, (h + 1) * ch)
        s = None
        for d in range(3):
            sd = jax.lax.dot_general(q[d][sl, :], k[d][sl, :],
                                     (((0,), (0,)), ((), ())),
                                     preferred_element_type=jnp.float32)   # (M, N)
            s = sd if s is None else s + sd
        s = s * scale
        s = s - jnp.max(s, axis=-1, keepdims=True)
        p = jnp.exp(s)
        p = p / jnp.sum(p, axis=-1, keepdims=True)
        for d in range(3):
            # out[c, m] = sum_n z[c, n] * p[m, n]
            heads[d][h] = jax.lax.dot_general(z[d][sl, :], p,
                                              (((1,), (1,)), ((), ())),
                                              preferred_element_type=jnp.float32)
    a = [jnp.concatenate(heads[d], axis=0) for d in range(3)]       # (C, M)

    # Output projection Wo.
    wo = w4_ref[3]
    y = [jnp.dot(wo, a[d], preferred_element_type=jnp.float32)
         + u4_ref[3, :, d:d + 1] for d in range(3)]

    # VN LayerNorm1 (over channels) + residual (identity == x).
    nrm = jnp.sqrt(y[0] * y[0] + y[1] * y[1] + y[2] * y[2]) + EPS    # (C, N)
    mu = jnp.mean(nrm, axis=0, keepdims=True)
    var = jnp.mean((nrm - mu) ** 2, axis=0, keepdims=True)
    ln = (nrm - mu) * jax.lax.rsqrt(var + LN_EPS) * g1_ref[...] + b1_ref[...]
    sc = ln / nrm
    yres = [y[d] * sc + x[d] for d in range(3)]
    for d in range(3):
        y_ref[0, :, d, :] = yres[d].astype(y_ref.dtype)

    # BatchNorm statistics of the first MLP linear output (recomputed in pass 2).
    w1t = w1t_ref[...]
    y1 = [jnp.dot(w1t, yres[d], preferred_element_type=jnp.float32)
          + u1_ref[:, d:d + 1] for d in range(3)]
    nrm1 = jnp.sqrt(y1[0] ** 2 + y1[1] ** 2 + y1[2] ** 2) + EPS      # (C, N)
    st_ref[0, :, 0:1] = jnp.sum(nrm1, axis=1, keepdims=True)
    st_ref[0, :, 1:2] = jnp.sum(nrm1 * nrm1, axis=1, keepdims=True)


def _attention_ln1_residual(x, p, ln1_g, ln1_b, w1, b1, num_heads):
    B, C, three, N = x.shape
    assert three == 3 and C % num_heads == 0
    ch = C // num_heads
    w4 = jnp.stack([p["wq"].T, p["wk"].T, p["wz"].T, p["wo"].T], axis=0)
    u4 = jnp.stack([_bias_dir(p["bq"]), _bias_dir(p["bk"]),
                    _bias_dir(p["bz"]), _bias_dir(p["bo"])], axis=0)
    g1 = ln1_g.reshape(C, 1).astype(x.dtype)
    b1r = ln1_b.reshape(C, 1).astype(x.dtype)
    scale = float(1.0 / np.sqrt(3 * ch))
    kernel = functools.partial(_attn_ln1_kernel, num_heads=num_heads, scale=scale)
    return pl.pallas_call(
        kernel,
        out_shape=(jax.ShapeDtypeStruct((B, C, 3, N), x.dtype),
                   jax.ShapeDtypeStruct((B, C, 2), jnp.float32)),
        grid=(B,),
        in_specs=[
            pl.BlockSpec((1, C, 3, N), lambda b: (b, 0, 0, 0)),
            pl.BlockSpec((4, C, C), lambda b: (0, 0, 0)),
            pl.BlockSpec((4, C, 3), lambda b: (0, 0, 0)),
            pl.BlockSpec((C, 1), lambda b: (0, 0)),
            pl.BlockSpec((C, 1), lambda b: (0, 0)),
            pl.BlockSpec((C, C), lambda b: (0, 0)),
            pl.BlockSpec((C, 3), lambda b: (0, 0)),
        ],
        out_specs=(pl.BlockSpec((1, C, 3, N), lambda b: (b, 0, 0, 0)),
                   pl.BlockSpec((1, C, 2), lambda b: (b, 0, 0))),
        compiler_params=pltpu.CompilerParams(dimension_semantics=("parallel",)),
    )(x, w4, u4, g1, b1r, w1.T, _bias_dir(b1))


# ---------------------------------------------------------------------------
# Pass 2: MLP linear1 (recomputed) + BatchNorm apply + VN LeakyReLU
#         + MLP linear2 + LayerNorm2 + residual.
# ---------------------------------------------------------------------------
def _mlp_ln2_kernel(y_ref, w1t_ref, wlrt_ref, w2t_ref, u1_ref, u2_ref,
                    bnsc_ref, bnsh_ref, g2_ref, b2_ref, o_ref, *, slope):
    x = [y_ref[0, :, d, :] for d in range(3)]                        # residual too

    # Recompute MLP linear1 (cheaper than an extra HBM round trip of y1).
    w1t = w1t_ref[...]
    y1 = [jnp.dot(w1t, x[d], preferred_element_type=jnp.float32)
          + u1_ref[:, d:d + 1] for d in range(3)]

    # VN BatchNorm apply (scale/shift of the 3-norm, precomputed from pass-1 stats).
    nrm1 = jnp.sqrt(y1[0] ** 2 + y1[1] ** 2 + y1[2] ** 2) + EPS
    s_bn = (bnsc_ref[...] * nrm1 + bnsh_ref[...]) / nrm1
    yb = [y1[d] * s_bn for d in range(3)]

    # VN LeakyReLU.
    wlrt = wlrt_ref[...]
    dv = [jnp.dot(wlrt, yb[d], preferred_element_type=jnp.float32) for d in range(3)]
    dot = yb[0] * dv[0] + yb[1] * dv[1] + yb[2] * dv[2]
    dsq = dv[0] * dv[0] + dv[1] * dv[1] + dv[2] * dv[2]
    keep = dot >= 0.0
    coef = dot / (dsq + EPS)
    ylr = [slope * yb[d]
           + (1.0 - slope) * jnp.where(keep, yb[d], yb[d] - coef * dv[d])
           for d in range(3)]

    # MLP linear2.
    w2t = w2t_ref[...]
    y2 = [jnp.dot(w2t, ylr[d], preferred_element_type=jnp.float32)
          + u2_ref[:, d:d + 1] for d in range(3)]

    # VN LayerNorm2 + residual.
    nrm2 = jnp.sqrt(y2[0] ** 2 + y2[1] ** 2 + y2[2] ** 2) + EPS
    mu = jnp.mean(nrm2, axis=0, keepdims=True)
    var = jnp.mean((nrm2 - mu) ** 2, axis=0, keepdims=True)
    ln = (nrm2 - mu) * jax.lax.rsqrt(var + LN_EPS) * g2_ref[...] + b2_ref[...]
    s2 = ln / nrm2
    for d in range(3):
        o_ref[0, :, d, :] = (y2[d] * s2 + x[d]).astype(o_ref.dtype)


def _mlp_ln2_residual(y, w1, b1, wlr, w2, b2, bn_scale, bn_shift,
                      ln2_g, ln2_b, slope):
    B, C, _, N = y.shape
    nt = _choose_nt(N, C)
    kernel = functools.partial(_mlp_ln2_kernel, slope=float(slope))
    return pl.pallas_call(
        kernel,
        out_shape=jax.ShapeDtypeStruct(y.shape, y.dtype),
        grid=(B, N // nt),
        in_specs=[
            pl.BlockSpec((1, C, 3, nt), lambda b, n: (b, 0, 0, n)),
            pl.BlockSpec((C, C), lambda b, n: (0, 0)),
            pl.BlockSpec((C, C), lambda b, n: (0, 0)),
            pl.BlockSpec((C, C), lambda b, n: (0, 0)),
            pl.BlockSpec((C, 3), lambda b, n: (0, 0)),
            pl.BlockSpec((C, 3), lambda b, n: (0, 0)),
            pl.BlockSpec((C, 1), lambda b, n: (0, 0)),
            pl.BlockSpec((C, 1), lambda b, n: (0, 0)),
            pl.BlockSpec((C, 1), lambda b, n: (0, 0)),
            pl.BlockSpec((C, 1), lambda b, n: (0, 0)),
        ],
        out_specs=pl.BlockSpec((1, C, 3, nt), lambda b, n: (b, 0, 0, n)),
        compiler_params=pltpu.CompilerParams(
            dimension_semantics=("parallel", "parallel")),
    )(y, w1.T, wlr.T, w2.T, _bias_dir(b1), _bias_dir(b2),
      bn_scale.reshape(C, 1).astype(y.dtype),
      bn_shift.reshape(C, 1).astype(y.dtype),
      ln2_g.reshape(C, 1).astype(y.dtype),
      ln2_b.reshape(C, 1).astype(y.dtype))


# ------------------------------- TransformerBlock -----------------------------
@functools.partial(jax.jit, static_argnames=("num_heads", "leaky"))
def transformer_block(x, params, *, num_heads, leaky=0.0):
    # TODO(synk): PerceiverIO-style separate `queries` input not exercised (== x).
    B, C, _, N = x.shape

    # Pass 1: attention block + LN1 + residual, plus BN statistics.
    y_res1, stats = _attention_ln1_residual(
        x, params["attn"], params["ln1_g"], params["ln1_b"],
        params["mlp_w1"], params["mlp_b1"], num_heads)

    # Tiny (C,)-sized BatchNorm moment math (training-mode, biased variance).
    totals = jnp.sum(stats, axis=0)                   # (C, 2)
    cnt = float(B * N)
    mean = totals[:, 0] / cnt
    var = totals[:, 1] / cnt - mean * mean
    bn_scale = params["bn_w"] * jax.lax.rsqrt(var + BN_EPS)
    bn_shift = params["bn_b"] - mean * bn_scale

    # Pass 2: fused MLP + LN2 + residual.
    return _mlp_ln2_residual(
        y_res1, params["mlp_w1"], params["mlp_b1"], params["lrelu_w"],
        params["mlp_w2"], params["mlp_b2"], bn_scale, bn_shift,
        params["ln2_g"], params["ln2_b"], leaky)


# ------------------------------ Pure-JAX reference ----------------------------
def transformer_block_ref(x, params, *, num_heads, leaky=0.0):
    hp = jax.lax.Precision.HIGHEST
    queries = x
    p = params["attn"]
    B, C, _, M = queries.shape
    N = x.shape[-1]
    ch = C // num_heads

    def lin(v, w, b):
        y = jnp.einsum("bidn,io->bodn", v, w, precision=hp)
        return y + _bias_dir(b)[None, :, :, None]

    def ln(v, g, b_):
        nrm = jnp.sqrt(jnp.sum(v * v, axis=2)) + EPS
        mu = jnp.mean(nrm, axis=1, keepdims=True)
        var = jnp.mean((nrm - mu) ** 2, axis=1, keepdims=True)
        s = (nrm - mu) / jnp.sqrt(var + LN_EPS) * g[None, :, None] + b_[None, :, None]
        return v / nrm[:, :, None, :] * s[:, :, None, :]

    qh = lin(queries, p["wq"], p["bq"]).reshape(B, num_heads, ch, 3, M)
    kh = lin(x, p["wk"], p["bk"]).reshape(B, num_heads, ch, 3, N)
    zh = lin(x, p["wz"], p["bz"]).reshape(B, num_heads, ch, 3, N)
    frob = jnp.einsum("bhcdm,bhcdn->bhmn", qh, kh, precision=hp)
    att = jax.nn.softmax(frob / np.sqrt(3 * ch), axis=-1)
    out = jnp.einsum("bhcdn,bhmn->bhcdm", zh, att, precision=hp)
    y = lin(out.reshape(B, C, 3, M), p["wo"], p["bo"])

    y = ln(y, params["ln1_g"], params["ln1_b"])
    y = y + queries
    new_identity = y

    y = lin(y, params["mlp_w1"], params["mlp_b1"])

    nrm = jnp.sqrt(jnp.sum(y * y, axis=2)) + EPS
    mu = jnp.mean(nrm, axis=(0, 2), keepdims=True)
    var = jnp.mean((nrm - mu) ** 2, axis=(0, 2), keepdims=True)
    bn = (nrm - mu) / jnp.sqrt(var + BN_EPS) * params["bn_w"][None, :, None] \
         + params["bn_b"][None, :, None]
    y = y / nrm[:, :, None, :] * bn[:, :, None, :]

    d = jnp.einsum("bidn,io->bodn", y, params["lrelu_w"], precision=hp)
    dot = jnp.sum(y * d, axis=2, keepdims=True)
    dsq = jnp.sum(d * d, axis=2, keepdims=True)
    mask = (dot >= 0).astype(y.dtype)
    y = leaky * y + (1 - leaky) * (mask * y + (1 - mask) * (y - dot / (dsq + EPS) * d))

    y = lin(y, params["mlp_w2"], params["mlp_b2"])
    y = ln(y, params["ln2_g"], params["ln2_b"])
    y = y + new_identity
    return y


if __name__ == "__main__":
    key = jax.random.PRNGKey(0)
    B, C, N, H = 2, 8, 16, 2          # f_dim=8, num_heads=2, 16 points
    bound = 1.0 / np.sqrt(C)
    keys = jax.random.split(key, 16)

    def uni(k, shape):
        return jax.random.uniform(k, shape, jnp.float32, -bound, bound)

    params = {
        "attn": {
            "wq": uni(keys[0], (C, C)), "bq": uni(keys[1], (C, 3)),
            "wk": uni(keys[2], (C, C)), "bk": uni(keys[3], (C, 3)),
            "wz": uni(keys[4], (C, C)), "bz": uni(keys[5], (C, 3)),
            "wo": uni(keys[6], (C, C)), "bo": uni(keys[7], (C, 3)),
        },
        "ln1_g": jnp.ones((C,), jnp.float32), "ln1_b": jnp.zeros((C,), jnp.float32),
        "mlp_w1": uni(keys[8], (C, C)), "mlp_b1": uni(keys[9], (C, 3)),
        "bn_w": jnp.ones((C,), jnp.float32), "bn_b": jnp.zeros((C,), jnp.float32),
        "lrelu_w": uni(keys[10], (C, C)),
        "mlp_w2": uni(keys[11], (C, C)), "mlp_b2": uni(keys[12], (C, 3)),
        "ln2_g": jnp.ones((C,), jnp.float32), "ln2_b": jnp.zeros((C,), jnp.float32),
    }
    x = jax.random.normal(keys[13], (B, C, 3, N), dtype=jnp.float32)

    for leaky in (0.0, 0.2):
        out = transformer_block(x, params, num_heads=H, leaky=leaky)
        out = jax.block_until_ready(out)
        assert out.shape == (B, C, 3, N)
        ref = transformer_block_ref(x, params, num_heads=H, leaky=leaky)
        np.testing.assert_allclose(np.asarray(out), np.asarray(ref),
                                   rtol=1e-3, atol=1e-3)

    print("KERNEL_OK")
</pallas_src>

<mosaic_0001>
module attributes {stable_mosaic.version = 11 : i64} {
  func.func @_attn_ln1_kernel(%arg0: i32, %arg1: memref<1x8x3x16xf32, #tpu.memory_space<vmem>>, %arg2: memref<4x8x8xf32, #tpu.memory_space<vmem>>, %arg3: memref<4x8x3xf32, #tpu.memory_space<vmem>>, %arg4: memref<8x1xf32, #tpu.memory_space<vmem>>, %arg5: memref<8x1xf32, #tpu.memory_space<vmem>>, %arg6: memref<8x8xf32, #tpu.memory_space<vmem>>, %arg7: memref<8x3xf32, #tpu.memory_space<vmem>>, %arg8: memref<1x8x3x16xf32, #tpu.memory_space<vmem>>, %arg9: memref<1x8x2xf32, #tpu.memory_space<vmem>>) attributes {dimension_semantics = [#tpu.dimension_semantics<parallel>], iteration_bounds = array<i64: 2>, scalar_prefetch = 0 : i64, scratch_operands = 0 : i64, tpu.core_type = #tpu.core_type<tc>, window_params = [{transform_indices = @transform_0, window_bounds = array<i64: 1, 8, 3, 16>}, {pipeline_mode = #tpu.pipeline_mode<synchronous>, transform_indices = @transform_1, window_bounds = array<i64: 4, 8, 8>}, {pipeline_mode = #tpu.pipeline_mode<synchronous>, transform_indices = @transform_2, window_bounds = array<i64: 4, 8, 3>}, {pipeline_mode = #tpu.pipeline_mode<synchronous>, transform_indices = @transform_3, window_bounds = array<i64: 8, 1>}, {pipeline_mode = #tpu.pipeline_mode<synchronous>, transform_indices = @transform_4, window_bounds = array<i64: 8, 1>}, {pipeline_mode = #tpu.pipeline_mode<synchronous>, transform_indices = @transform_5, window_bounds = array<i64: 8, 8>}, {pipeline_mode = #tpu.pipeline_mode<synchronous>, transform_indices = @transform_6, window_bounds = array<i64: 8, 3>}, {transform_indices = @transform_7, window_bounds = array<i64: 1, 8, 3, 16>}, {transform_indices = @transform_8, window_bounds = array<i64: 1, 8, 2>}]} {
    %c0 = arith.constant 0 : index
    %c0_0 = arith.constant 0 : index
    %c0_1 = arith.constant 0 : index
    %c0_2 = arith.constant 0 : index
    %0 = vector.load %arg1[%c0, %c0_0, %c0_1, %c0_2] : memref<1x8x3x16xf32, #tpu.memory_space<vmem>>, vector<1x8x1x16xf32>
    %1 = vector.shape_cast %0 : vector<1x8x1x16xf32> to vector<8x16xf32>
    %c0_3 = arith.constant 0 : index
    %c0_4 = arith.constant 0 : index
    %c1 = arith.constant 1 : index
    %c0_5 = arith.constant 0 : index
    %2 = vector.load %arg1[%c0_3, %c0_4, %c1, %c0_5] : memref<1x8x3x16xf32, #tpu.memory_space<vmem>>, vector<1x8x1x16xf32>
    %3 = vector.shape_cast %2 : vector<1x8x1x16xf32> to vector<8x16xf32>
    %c0_6 = arith.constant 0 : index
    %c0_7 = arith.constant 0 : index
    %c2 = arith.constant 2 : index
    %c0_8 = arith.constant 0 : index
    %4 = vector.load %arg1[%c0_6, %c0_7, %c2, %c0_8] : memref<1x8x3x16xf32, #tpu.memory_space<vmem>>, vector<1x8x1x16xf32>
    %5 = vector.shape_cast %4 : vector<1x8x1x16xf32> to vector<8x16xf32>
    %c0_9 = arith.constant 0 : index
    %c0_10 = arith.constant 0 : index
    %c0_11 = arith.constant 0 : index
    %6 = vector.load %arg2[%c0_9, %c0_10, %c0_11] : memref<4x8x8xf32, #tpu.memory_space<vmem>>, vector<1x8x8xf32>
    %7 = vector.shape_cast %6 : vector<1x8x8xf32> to vector<8x8xf32>
    %cst = arith.constant dense<0.000000e+00> : vector<8x16xf32>
    %8 = tpu.matmul %7, %1, %cst {dimension_numbers = #tpu.dot_dimension_numbers<[1], [0], [0], [1], [0, 0, 1, 1], [], []>} : vector<8x8xf32>, vector<8x16xf32>, vector<8x16xf32> -> vector<8x16xf32>
    %c0_12 = arith.constant 0 : index
    %c0_13 = arith.constant 0 : index
    %c0_14 = arith.constant 0 : index
    %9 = vector.load %arg3[%c0_12, %c0_13, %c0_14] : memref<4x8x3xf32, #tpu.memory_space<vmem>>, vector<1x8x1xf32>
    %10 = vector.shape_cast %9 : vector<1x8x1xf32> to vector<8x1xf32>
    %11 = vector.broadcast %10 : vector<8x1xf32> to vector<8x16xf32>
    %12 = arith.addf %8, %11 : vector<8x16xf32>
    %cst_15 = arith.constant dense<0.000000e+00> : vector<8x16xf32>
    %13 = tpu.matmul %7, %3, %cst_15 {dimension_numbers = #tpu.dot_dimension_numbers<[1], [0], [0], [1], [0, 0, 1, 1], [], []>} : vector<8x8xf32>, vector<8x16xf32>, vector<8x16xf32> -> vector<8x16xf32>
    %c0_16 = arith.constant 0 : index
    %c0_17 = arith.constant 0 : index
    %c1_18 = arith.constant 1 : index
    %14 = vector.load %arg3[%c0_16, %c0_17, %c1_18] : memref<4x8x3xf32, #tpu.memory_space<vmem>>, vector<1x8x1xf32>
    %15 = vector.shape_cast %14 : vector<1x8x1xf32> to vector<8x1xf32>
    %16 = vector.broadcast %15 : vector<8x1xf32> to vector<8x16xf32>
    %17 = arith.addf %13, %16 : vector<8x16xf32>
    %cst_19 = arith.constant dense<0.000000e+00> : vector<8x16xf32>
    %18 = tpu.matmul %7, %5, %cst_19 {dimension_numbers = #tpu.dot_dimension_numbers<[1], [0], [0], [1], [0, 0, 1, 1], [], []>} : vector<8x8xf32>, vector<8x16xf32>, vector<8x16xf32> -> vector<8x16xf32>
    %c0_20 = arith.constant 0 : index
    %c0_21 = arith.constant 0 : index
    %c2_22 = arith.constant 2 : index
    %19 = vector.load %arg3[%c0_20, %c0_21, %c2_22] : memref<4x8x3xf32, #tpu.memory_space<vmem>>, vector<1x8x1xf32>
    %20 = vector.shape_cast %19 : vector<1x8x1xf32> to vector<8x1xf32>
    %21 = vector.broadcast %20 : vector<8x1xf32> to vector<8x16xf32>
    %22 = arith.addf %18, %21 : vector<8x16xf32>
    %c1_23 = arith.constant 1 : index
    %c0_24 = arith.constant 0 : index
    %c0_25 = arith.constant 0 : index
    %23 = vector.load %arg2[%c1_23, %c0_24, %c0_25] : memref<4x8x8xf32, #tpu.memory_space<vmem>>, vector<1x8x8xf32>
    %24 = vector.shape_cast %23 : vector<1x8x8xf32> to vector<8x8xf32>
    %cst_26 = arith.constant dense<0.000000e+00> : vector<8x16xf32>
    %25 = tpu.matmul %24, %1, %cst_26 {dimension_numbers = #tpu.dot_dimension_numbers<[1], [0], [0], [1], [0, 0, 1, 1], [], []>} : vector<8x8xf32>, vector<8x16xf32>, vector<8x16xf32> -> vector<8x16xf32>
    %c1_27 = arith.constant 1 : index
    %c0_28 = arith.constant 0 : index
    %c0_29 = arith.constant 0 : index
    %26 = vector.load %arg3[%c1_27, %c0_28, %c0_29] : memref<4x8x3xf32, #tpu.memory_space<vmem>>, vector<1x8x1xf32>
    %27 = vector.shape_cast %26 : vector<1x8x1xf32> to vector<8x1xf32>
    %28 = vector.broadcast %27 : vector<8x1xf32> to vector<8x16xf32>
    %29 = arith.addf %25, %28 : vector<8x16xf32>
    %cst_30 = arith.constant dense<0.000000e+00> : vector<8x16xf32>
    %30 = tpu.matmul %24, %3, %cst_30 {dimension_numbers = #tpu.dot_dimension_numbers<[1], [0], [0], [1], [0, 0, 1, 1], [], []>} : vector<8x8xf32>, vector<8x16xf32>, vector<8x16xf32> -> vector<8x16xf32>
    %c1_31 = arith.constant 1 : index
    %c0_32 = arith.constant 0 : index
    %c1_33 = arith.constant 1 : index
    %31 = vector.load %arg3[%c1_31, %c0_32, %c1_33] : memref<4x8x3xf32, #tpu.memory_space<vmem>>, vector<1x8x1xf32>
    %32 = vector.shape_cast %31 : vector<1x8x1xf32> to vector<8x1xf32>
    %33 = vector.broadcast %32 : vector<8x1xf32> to vector<8x16xf32>
    %34 = arith.addf %30, %33 : vector<8x16xf32>
    %cst_34 = arith.constant dense<0.000000e+00> : vector<8x16xf32>
    %35 = tpu.matmul %24, %5, %cst_34 {dimension_numbers = #tpu.dot_dimension_numbers<[1], [0], [0], [1], [0, 0, 1, 1], [], []>} : vector<8x8xf32>, vector<8x16xf32>, vector<8x16xf32> -> vector<8x16xf32>
    %c1_35 = arith.constant 1 : index
    %c0_36 = arith.constant 0 : index
    %c2_37 = arith.constant 2 : index
    %36 = vector.load %arg3[%c1_35, %c0_36, %c2_37] : memref<4x8x3xf32, #tpu.memory_space<vmem>>, vector<1x8x1xf32>
    %37 = vector.shape_cast %36 : vector<1x8x1xf32> to vector<8x1xf32>
    %38 = vector.broadcast %37 : vector<8x1xf32> to vector<8x16xf32>
    %39 = arith.addf %35, %38 : vector<8x16xf32>
    %c2_38 = arith.constant 2 : index
    %c0_39 = arith.constant 0 : index
    %c0_40 = arith.constant 0 : index
    %40 = vector.load %arg2[%c2_38, %c0_39, %c0_40] : memref<4x8x8xf32, #tpu.memory_space<vmem>>, vector<1x8x8xf32>
    %41 = vector.shape_cast %40 : vector<1x8x8xf32> to vector<8x8xf32>
    %cst_41 = arith.constant dense<0.000000e+00> : vector<8x16xf32>
    %42 = tpu.matmul %41, %1, %cst_41 {dimension_numbers = #tpu.dot_dimension_numbers<[1], [0], [0], [1], [0, 0, 1, 1], [], []>} : vector<8x8xf32>, vector<8x16xf32>, vector<8x16xf32> -> vector<8x16xf32>
    %c2_42 = arith.constant 2 : index
    %c0_43 = arith.constant 0 : index
    %c0_44 = arith.constant 0 : index
    %43 = vector.load %arg3[%c2_42, %c0_43, %c0_44] : memref<4x8x3xf32, #tpu.memory_space<vmem>>, vector<1x8x1xf32>
    %44 = vector.shape_cast %43 : vector<1x8x1xf32> to vector<8x1xf32>
    %45 = vector.broadcast %44 : vector<8x1xf32> to vector<8x16xf32>
    %46 = arith.addf %42, %45 : vector<8x16xf32>
    %cst_45 = arith.constant dense<0.000000e+00> : vector<8x16xf32>
    %47 = tpu.matmul %41, %3, %cst_45 {dimension_numbers = #tpu.dot_dimension_numbers<[1], [0], [0], [1], [0, 0, 1, 1], [], []>} : vector<8x8xf32>, vector<8x16xf32>, vector<8x16xf32> -> vector<8x16xf32>
    %c2_46 = arith.constant 2 : index
    %c0_47 = arith.constant 0 : index
    %c1_48 = arith.constant 1 : index
    %48 = vector.load %arg3[%c2_46, %c0_47, %c1_48] : memref<4x8x3xf32, #tpu.memory_space<vmem>>, vector<1x8x1xf32>
    %49 = vector.shape_cast %48 : vector<1x8x1xf32> to vector<8x1xf32>
    %50 = vector.broadcast %49 : vector<8x1xf32> to vector<8x16xf32>
    %51 = arith.addf %47, %50 : vector<8x16xf32>
    %cst_49 = arith.constant dense<0.000000e+00> : vector<8x16xf32>
    %52 = tpu.matmul %41, %5, %cst_49 {dimension_numbers = #tpu.dot_dimension_numbers<[1], [0], [0], [1], [0, 0, 1, 1], [], []>} : vector<8x8xf32>, vector<8x16xf32>, vector<8x16xf32> -> vector<8x16xf32>
    %c2_50 = arith.constant 2 : index
    %c0_51 = arith.constant 0 : index
    %c2_52 = arith.constant 2 : index
    %53 = vector.load %arg3[%c2_50, %c0_51, %c2_52] : memref<4x8x3xf32, #tpu.memory_space<vmem>>, vector<1x8x1xf32>
    %54 = vector.shape_cast %53 : vector<1x8x1xf32> to vector<8x1xf32>
    %55 = vector.broadcast %54 : vector<8x1xf32> to vector<8x16xf32>
    %56 = arith.addf %52, %55 : vector<8x16xf32>
    %57 = vector.extract_strided_slice %12 {offsets = [0, 0], sizes = [4, 16], strides = [1, 1]} : vector<8x16xf32> to vector<4x16xf32>
    %58 = vector.extract_strided_slice %29 {offsets = [0, 0], sizes = [4, 16], strides = [1, 1]} : vector<8x16xf32> to vector<4x16xf32>
    %cst_53 = arith.constant dense<0.000000e+00> : vector<16x16xf32>
    %59 = tpu.matmul %57, %58, %cst_53 {dimension_numbers = #tpu.dot_dimension_numbers<[0], [0], [1], [1], [0, 1, 1, 1], [], []>} : vector<4x16xf32>, vector<4x16xf32>, vector<16x16xf32> -> vector<16x16xf32>
    %60 = vector.extract_strided_slice %17 {offsets = [0, 0], sizes = [4, 16], strides = [1, 1]} : vector<8x16xf32> to vector<4x16xf32>
    %61 = vector.extract_strided_slice %34 {offsets = [0, 0], sizes = [4, 16], strides = [1, 1]} : vector<8x16xf32> to vector<4x16xf32>
    %cst_54 = arith.constant dense<0.000000e+00> : vector<16x16xf32>
    %62 = tpu.matmul %60, %61, %cst_54 {dimension_numbers = #tpu.dot_dimension_numbers<[0], [0], [1], [1], [0, 1, 1, 1], [], []>} : vector<4x16xf32>, vector<4x16xf32>, vector<16x16xf32> -> vector<16x16xf32>
    %63 = arith.addf %59, %62 : vector<16x16xf32>
    %64 = vector.extract_strided_slice %22 {offsets = [0, 0], sizes = [4, 16], strides = [1, 1]} : vector<8x16xf32> to vector<4x16xf32>
    %65 = vector.extract_strided_slice %39 {offsets = [0, 0], sizes = [4, 16], strides = [1, 1]} : vector<8x16xf32> to vector<4x16xf32>
    %cst_55 = arith.constant dense<0.000000e+00> : vector<16x16xf32>
    %66 = tpu.matmul %64, %65, %cst_55 {dimension_numbers = #tpu.dot_dimension_numbers<[0], [0], [1], [1], [0, 1, 1, 1], [], []>} : vector<4x16xf32>, vector<4x16xf32>, vector<16x16xf32> -> vector<16x16xf32>
    %67 = arith.addf %63, %66 : vector<16x16xf32>
    %cst_56 = arith.constant 0.288675129 : f32
    %68 = vector.broadcast %cst_56 : f32 to vector<16x16xf32>
    %69 = arith.mulf %67, %68 : vector<16x16xf32>
    %cst_57 = arith.constant dense<0xFF800000> : vector<16xf32>
    %70 = vector.multi_reduction <maximumf>, %69, %cst_57 [1] : vector<16x16xf32> to vector<16xf32>
    %71 = vector.shape_cast %70 : vector<16xf32> to vector<16x1xf32>
    %72 = vector.broadcast %71 : vector<16x1xf32> to vector<16x16xf32>
    %73 = arith.subf %69, %72 : vector<16x16xf32>
    %74 = math.exp %73 : vector<16x16xf32>
    %cst_58 = arith.constant dense<0.000000e+00> : vector<16xf32>
    %75 = vector.multi_reduction <add>, %74, %cst_58 [1] : vector<16x16xf32> to vector<16xf32>
    %76 = vector.shape_cast %75 : vector<16xf32> to vector<16x1xf32>
    %77 = vector.broadcast %76 : vector<16x1xf32> to vector<16x16xf32>
    %78 = arith.divf %74, %77 : vector<16x16xf32>
    %79 = vector.extract_strided_slice %46 {offsets = [0, 0], sizes = [4, 16], strides = [1, 1]} : vector<8x16xf32> to vector<4x16xf32>
    %cst_59 = arith.constant dense<0.000000e+00> : vector<4x16xf32>
    %80 = tpu.matmul %79, %78, %cst_59 {dimension_numbers = #tpu.dot_dimension_numbers<[1], [1], [0], [0], [0, 0, 1, 0], [], []>} : vector<4x16xf32>, vector<16x16xf32>, vector<4x16xf32> -> vector<4x16xf32>
    %81 = vector.extract_strided_slice %51 {offsets = [0, 0], sizes = [4, 16], strides = [1, 1]} : vector<8x16xf32> to vector<4x16xf32>
    %cst_60 = arith.constant dense<0.000000e+00> : vector<4x16xf32>
    %82 = tpu.matmul %81, %78, %cst_60 {dimension_numbers = #tpu.dot_dimension_numbers<[1], [1], [0], [0], [0, 0, 1, 0], [], []>} : vector<4x16xf32>, vector<16x16xf32>, vector<4x16xf32> -> vector<4x16xf32>
    %83 = vector.extract_strided_slice %56 {offsets = [0, 0], sizes = [4, 16], strides = [1, 1]} : vector<8x16xf32> to vector<4x16xf32>
    %cst_61 = arith.constant dense<0.000000e+00> : vector<4x16xf32>
    %84 = tpu.matmul %83, %78, %cst_61 {dimension_numbers = #tpu.dot_dimension_numbers<[1], [1], [0], [0], [0, 0, 1, 0], [], []>} : vector<4x16xf32>, vector<16x16xf32>, vector<4x16xf32> -> vector<4x16xf32>
    %85 = vector.extract_strided_slice %12 {offsets = [4, 0], sizes = [4, 16], strides = [1, 1]} : vector<8x16xf32> to vector<4x16xf32>
    %86 = vector.extract_strided_slice %29 {offsets = [4, 0], sizes = [4, 16], strides = [1, 1]} : vector<8x16xf32> to vector<4x16xf32>
    %cst_62 = arith.constant dense<0.000000e+00> : vector<16x16xf32>
    %87 = tpu.matmul %85, %86, %cst_62 {dimension_numbers = #tpu.dot_dimension_numbers<[0], [0], [1], [1], [0, 1, 1, 1], [], []>} : vector<4x16xf32>, vector<4x16xf32>, vector<16x16xf32> -> vector<16x16xf32>
    %88 = vector.extract_strided_slice %17 {offsets = [4, 0], sizes = [4, 16], strides = [1, 1]} : vector<8x16xf32> to vector<4x16xf32>
    %89 = vector.extract_strided_slice %34 {offsets = [4, 0], sizes = [4, 16], strides = [1, 1]} : vector<8x16xf32> to vector<4x16xf32>
    %cst_63 = arith.constant dense<0.000000e+00> : vector<16x16xf32>
    %90 = tpu.matmul %88, %89, %cst_63 {dimension_numbers = #tpu.dot_dimension_numbers<[0], [0], [1], [1], [0, 1, 1, 1], [], []>} : vector<4x16xf32>, vector<4x16xf32>, vector<16x16xf32> -> vector<16x16xf32>
    %91 = arith.addf %87, %90 : vector<16x16xf32>
    %92 = vector.extract_strided_slice %22 {offsets = [4, 0], sizes = [4, 16], strides = [1, 1]} : vector<8x16xf32> to vector<4x16xf32>
    %93 = vector.extract_strided_slice %39 {offsets = [4, 0], sizes = [4, 16], strides = [1, 1]} : vector<8x16xf32> to vector<4x16xf32>
    %cst_64 = arith.constant dense<0.000000e+00> : vector<16x16xf32>
    %94 = tpu.matmul %92, %93, %cst_64 {dimension_numbers = #tpu.dot_dimension_numbers<[0], [0], [1], [1], [0, 1, 1, 1], [], []>} : vector<4x16xf32>, vector<4x16xf32>, vector<16x16xf32> -> vector<16x16xf32>
    %95 = arith.addf %91, %94 : vector<16x16xf32>
    %cst_65 = arith.constant 0.288675129 : f32
    %96 = vector.broadcast %cst_65 : f32 to vector<16x16xf32>
    %97 = arith.mulf %95, %96 : vector<16x16xf32>
    %cst_66 = arith.constant dense<0xFF800000> : vector<16xf32>
    %98 = vector.multi_reduction <maximumf>, %97, %cst_66 [1] : vector<16x16xf32> to vector<16xf32>
    %99 = vector.shape_cast %98 : vector<16xf32> to vector<16x1xf32>
    %100 = vector.broadcast %99 : vector<16x1xf32> to vector<16x16xf32>
    %101 = arith.subf %97, %100 : vector<16x16xf32>
    %102 = math.exp %101 : vector<16x16xf32>
    %cst_67 = arith.constant dense<0.000000e+00> : vector<16xf32>
    %103 = vector.multi_reduction <add>, %102, %cst_67 [1] : vector<16x16xf32> to vector<16xf32>
    %104 = vector.shape_cast %103 : vector<16xf32> to vector<16x1xf32>
    %105 = vector.broadcast %104 : vector<16x1xf32> to vector<16x16xf32>
    %106 = arith.divf %102, %105 : vector<16x16xf32>
    %107 = vector.extract_strided_slice %46 {offsets = [4, 0], sizes = [4, 16], strides = [1, 1]} : vector<8x16xf32> to vector<4x16xf32>
    %cst_68 = arith.constant dense<0.000000e+00> : vector<4x16xf32>
    %108 = tpu.matmul %107, %106, %cst_68 {dimension_numbers = #tpu.dot_dimension_numbers<[1], [1], [0], [0], [0, 0, 1, 0], [], []>} : vector<4x16xf32>, vector<16x16xf32>, vector<4x16xf32> -> vector<4x16xf32>
    %109 = vector.extract_strided_slice %51 {offsets = [4, 0], sizes = [4, 16], strides = [1, 1]} : vector<8x16xf32> to vector<4x16xf32>
    %cst_69 = arith.constant dense<0.000000e+00> : vector<4x16xf32>
    %110 = tpu.matmul %109, %106, %cst_69 {dimension_numbers = #tpu.dot_dimension_numbers<[1], [1], [0], [0], [0, 0, 1, 0], [], []>} : vector<4x16xf32>, vector<16x16xf32>, vector<4x16xf32> -> vector<4x16xf32>
    %111 = vector.extract_strided_slice %56 {offsets = [4, 0], sizes = [4, 16], strides = [1, 1]} : vector<8x16xf32> to vector<4x16xf32>
    %cst_70 = arith.constant dense<0.000000e+00> : vector<4x16xf32>
    %112 = tpu.matmul %111, %106, %cst_70 {dimension_numbers = #tpu.dot_dimension_numbers<[1], [1], [0], [0], [0, 0, 1, 0], [], []>} : vector<4x16xf32>, vector<16x16xf32>, vector<4x16xf32> -> vector<4x16xf32>
    %113 = tpu.concatenate %80, %108 in 0 : vector<4x16xf32>, vector<4x16xf32> -> vector<8x16xf32>
    %114 = tpu.concatenate %82, %110 in 0 : vector<4x16xf32>, vector<4x16xf32> -> vector<8x16xf32>
    %115 = tpu.concatenate %84, %112 in 0 : vector<4x16xf32>, vector<4x16xf32> -> vector<8x16xf32>
    %c3 = arith.constant 3 : index
    %c0_71 = arith.constant 0 : index
    %c0_72 = arith.constant 0 : index
    %116 = vector.load %arg2[%c3, %c0_71, %c0_72] : memref<4x8x8xf32, #tpu.memory_space<vmem>>, vector<1x8x8xf32>
    %117 = vector.shape_cast %116 : vector<1x8x8xf32> to vector<8x8xf32>
    %cst_73 = arith.constant dense<0.000000e+00> : vector<8x16xf32>
    %118 = tpu.matmul %117, %113, %cst_73 {dimension_numbers = #tpu.dot_dimension_numbers<[1], [0], [0], [1], [0, 0, 1, 1], [], []>} : vector<8x8xf32>, vector<8x16xf32>, vector<8x16xf32> -> vector<8x16xf32>
    %c3_74 = arith.constant 3 : index
    %c0_75 = arith.constant 0 : index
    %c0_76 = arith.constant 0 : index
    %119 = vector.load %arg3[%c3_74, %c0_75, %c0_76] : memref<4x8x3xf32, #tpu.memory_space<vmem>>, vector<1x8x1xf32>
    %120 = vector.shape_cast %119 : vector<1x8x1xf32> to vector<8x1xf32>
    %121 = vector.broadcast %120 : vector<8x1xf32> to vector<8x16xf32>
    %122 = arith.addf %118, %121 : vector<8x16xf32>
    %cst_77 = arith.constant dense<0.000000e+00> : vector<8x16xf32>
    %123 = tpu.matmul %117, %114, %cst_77 {dimension_numbers = #tpu.dot_dimension_numbers<[1], [0], [0], [1], [0, 0, 1, 1], [], []>} : vector<8x8xf32>, vector<8x16xf32>, vector<8x16xf32> -> vector<8x16xf32>
    %c3_78 = arith.constant 3 : index
    %c0_79 = arith.constant 0 : index
    %c1_80 = arith.constant 1 : index
    %124 = vector.load %arg3[%c3_78, %c0_79, %c1_80] : memref<4x8x3xf32, #tpu.memory_space<vmem>>, vector<1x8x1xf32>
    %125 = vector.shape_cast %124 : vector<1x8x1xf32> to vector<8x1xf32>
    %126 = vector.broadcast %125 : vector<8x1xf32> to vector<8x16xf32>
    %127 = arith.addf %123, %126 : vector<8x16xf32>
    %cst_81 = arith.constant dense<0.000000e+00> : vector<8x16xf32>
    %128 = tpu.matmul %117, %115, %cst_81 {dimension_numbers = #tpu.dot_dimension_numbers<[1], [0], [0], [1], [0, 0, 1, 1], [], []>} : vector<8x8xf32>, vector<8x16xf32>, vector<8x16xf32> -> vector<8x16xf32>
    %c3_82 = arith.constant 3 : index
    %c0_83 = arith.constant 0 : index
    %c2_84 = arith.constant 2 : index
    %129 = vector.load %arg3[%c3_82, %c0_83, %c2_84] : memref<4x8x3xf32, #tpu.memory_space<vmem>>, vector<1x8x1xf32>
    %130 = vector.shape_cast %129 : vector<1x8x1xf32> to vector<8x1xf32>
    %131 = vector.broadcast %130 : vector<8x1xf32> to vector<8x16xf32>
    %132 = arith.addf %128, %131 : vector<8x16xf32>
    %133 = arith.mulf %122, %122 : vector<8x16xf32>
    %134 = arith.mulf %127, %127 : vector<8x16xf32>
    %135 = arith.addf %133, %134 : vector<8x16xf32>
    %136 = arith.mulf %132, %132 : vector<8x16xf32>
    %137 = arith.addf %135, %136 : vector<8x16xf32>
    %138 = math.sqrt %137 : vector<8x16xf32>
    %cst_85 = arith.constant 9.99999997E-7 : f32
    %139 = vector.broadcast %cst_85 : f32 to vector<8x16xf32>
    %140 = arith.addf %138, %139 : vector<8x16xf32>
    %cst_86 = arith.constant dense<0.000000e+00> : vector<16xf32>
    %141 = vector.multi_reduction <add>, %140, %cst_86 [0] : vector<8x16xf32> to vector<16xf32>
    %142 = vector.shape_cast %141 : vector<16xf32> to vector<1x16xf32>
    %cst_87 = arith.constant 8.000000e+00 : f32
    %143 = vector.broadcast %cst_87 : f32 to vector<1x16xf32>
    %144 = arith.divf %142, %143 : vector<1x16xf32>
    %145 = vector.broadcast %144 : vector<1x16xf32> to vector<8x16xf32>
    %146 = arith.subf %140, %145 : vector<8x16xf32>
    %147 = arith.mulf %146, %146 : vector<8x16xf32>
    %cst_88 = arith.constant dense<0.000000e+00> : vector<16xf32>
    %148 = vector.multi_reduction <add>, %147, %cst_88 [0] : vector<8x16xf32> to vector<16xf32>
    %149 = vector.shape_cast %148 : vector<16xf32> to vector<1x16xf32>
    %cst_89 = arith.constant 8.000000e+00 : f32
    %150 = vector.broadcast %cst_89 : f32 to vector<1x16xf32>
    %151 = arith.divf %149, %150 : vector<1x16xf32>
    %152 = vector.broadcast %144 : vector<1x16xf32> to vector<8x16xf32>
    %153 = arith.subf %140, %152 : vector<8x16xf32>
    %cst_90 = arith.constant 9.99999974E-6 : f32
    %154 = vector.broadcast %cst_90 : f32 to vector<1x16xf32>
    %155 = arith.addf %151, %154 : vector<1x16xf32>
    %156 = math.rsqrt %155 : vector<1x16xf32>
    %157 = vector.broadcast %156 : vector<1x16xf32> to vector<8x16xf32>
    %158 = arith.mulf %153, %157 : vector<8x16xf32>
    %c0_91 = arith.constant 0 : index
    %c0_92 = arith.constant 0 : index
    %159 = vector.load %arg4[%c0_91, %c0_92] : memref<8x1xf32, #tpu.memory_space<vmem>>, vector<8x1xf32>
    %160 = vector.broadcast %159 : vector<8x1xf32> to vector<8x16xf32>
    %161 = arith.mulf %158, %160 : vector<8x16xf32>
    %c0_93 = arith.constant 0 : index
    %c0_94 = arith.constant 0 : index
    %162 = vector.load %arg5[%c0_93, %c0_94] : memref<8x1xf32, #tpu.memory_space<vmem>>, vector<8x1xf32>
    %163 = vector.broadcast %162 : vector<8x1xf32> to vector<8x16xf32>
    %164 = arith.addf %161, %163 : vector<8x16xf32>
    %165 = arith.divf %164, %140 : vector<8x16xf32>
    %166 = arith.mulf %122, %165 : vector<8x16xf32>
    %167 = arith.addf %166, %1 : vector<8x16xf32>
    %168 = arith.mulf %127, %165 : vector<8x16xf32>
    %169 = arith.addf %168, %3 : vector<8x16xf32>
    %170 = arith.mulf %132, %165 : vector<8x16xf32>
    %171 = arith.addf %170, %5 : vector<8x16xf32>
    %c0_95 = arith.constant 0 : index
    %c0_96 = arith.constant 0 : index
    %c0_97 = arith.constant 0 : index
    %c0_98 = arith.constant 0 : index
    %172 = vector.load %arg8[%c0_95, %c0_96, %c0_97, %c0_98] : memref<1x8x3x16xf32, #tpu.memory_space<vmem>>, vector<1x8x1x16xf32>
    %173 = vector.shape_cast %172 : vector<1x8x1x16xf32> to vector<8x16xf32>
    %174 = vector.shape_cast %167 : vector<8x16xf32> to vector<1x8x1x16xf32>
    tpu.vector_store %arg8[%c0_95, %c0_96, %c0_97, %c0_98], %174 {strides = array<i32>} : memref<1x8x3x16xf32, #tpu.memory_space<vmem>>, vector<1x8x1x16xf32>,
    %c0_99 = arith.constant 0 : index
    %c0_100 = arith.constant 0 : index
    %c1_101 = arith.constant 1 : index
    %c0_102 = arith.constant 0 : index
    %175 = vector.load %arg8[%c0_99, %c0_100, %c1_101, %c0_102] : memref<1x8x3x16xf32, #tpu.memory_space<vmem>>, vector<1x8x1x16xf32>
    %176 = vector.shape_cast %175 : vector<1x8x1x16xf32> to vector<8x16xf32>
    %177 = vector.shape_cast %169 : vector<8x16xf32> to vector<1x8x1x16xf32>
    tpu.vector_store %arg8[%c0_99, %c0_100, %c1_101, %c0_102], %177 {strides = array<i32>} : memref<1x8x3x16xf32, #tpu.memory_space<vmem>>, vector<1x8x1x16xf32>,
    %c0_103 = arith.constant 0 : index
    %c0_104 = arith.constant 0 : index
    %c2_105 = arith.constant 2 : index
    %c0_106 = arith.constant 0 : index
    %178 = vector.load %arg8[%c0_103, %c0_104, %c2_105, %c0_106] : memref<1x8x3x16xf32, #tpu.memory_space<vmem>>, vector<1x8x1x16xf32>
    %179 = vector.shape_cast %178 : vector<1x8x1x16xf32> to vector<8x16xf32>
    %180 = vector.shape_cast %171 : vector<8x16xf32> to vector<1x8x1x16xf32>
    tpu.vector_store %arg8[%c0_103, %c0_104, %c2_105, %c0_106], %180 {strides = array<i32>} : memref<1x8x3x16xf32, #tpu.memory_space<vmem>>, vector<1x8x1x16xf32>,
    %c0_107 = arith.constant 0 : index
    %c0_108 = arith.constant 0 : index
    %181 = vector.load %arg6[%c0_107, %c0_108] : memref<8x8xf32, #tpu.memory_space<vmem>>, vector<8x8xf32>
    %cst_109 = arith.constant dense<0.000000e+00> : vector<8x16xf32>
    %182 = tpu.matmul %181, %167, %cst_109 {dimension_numbers = #tpu.dot_dimension_numbers<[1], [0], [0], [1], [0, 0, 1, 1], [], []>} : vector<8x8xf32>, vector<8x16xf32>, vector<8x16xf32> -> vector<8x16xf32>
    %c0_110 = arith.constant 0 : index
    %c0_111 = arith.constant 0 : index
    %183 = vector.load %arg7[%c0_110, %c0_111] : memref<8x3xf32, #tpu.memory_space<vmem>>, vector<8x1xf32>
    %184 = vector.broadcast %183 : vector<8x1xf32> to vector<8x16xf32>
    %185 = arith.addf %182, %184 : vector<8x16xf32>
    %cst_112 = arith.constant dense<0.000000e+00> : vector<8x16xf32>
    %186 = tpu.matmul %181, %169, %cst_112 {dimension_numbers = #tpu.dot_dimension_numbers<[1], [0], [0], [1], [0, 0, 1, 1], [], []>} : vector<8x8xf32>, vector<8x16xf32>, vector<8x16xf32> -> vector<8x16xf32>
    %c0_113 = arith.constant 0 : index
    %c1_114 = arith.constant 1 : index
    %187 = vector.load %arg7[%c0_113, %c1_114] : memref<8x3xf32, #tpu.memory_space<vmem>>, vector<8x1xf32>
    %188 = vector.broadcast %187 : vector<8x1xf32> to vector<8x16xf32>
    %189 = arith.addf %186, %188 : vector<8x16xf32>
    %cst_115 = arith.constant dense<0.000000e+00> : vector<8x16xf32>
    %190 = tpu.matmul %181, %171, %cst_115 {dimension_numbers = #tpu.dot_dimension_numbers<[1], [0], [0], [1], [0, 0, 1, 1], [], []>} : vector<8x8xf32>, vector<8x16xf32>, vector<8x16xf32> -> vector<8x16xf32>
    %c0_116 = arith.constant 0 : index
    %c2_117 = arith.constant 2 : index
    %191 = vector.load %arg7[%c0_116, %c2_117] : memref<8x3xf32, #tpu.memory_space<vmem>>, vector<8x1xf32>
    %192 = vector.broadcast %191 : vector<8x1xf32> to vector<8x16xf32>
    %193 = arith.addf %190, %192 : vector<8x16xf32>
    %194 = arith.mulf %185, %185 : vector<8x16xf32>
    %195 = arith.mulf %189, %189 : vector<8x16xf32>
    %196 = arith.addf %194, %195 : vector<8x16xf32>
    %197 = arith.mulf %193, %193 : vector<8x16xf32>
    %198 = arith.addf %196, %197 : vector<8x16xf32>
    %199 = math.sqrt %198 : vector<8x16xf32>
    %cst_118 = arith.constant 9.99999997E-7 : f32
    %200 = vector.broadcast %cst_118 : f32 to vector<8x16xf32>
    %201 = arith.addf %199, %200 : vector<8x16xf32>
    %cst_119 = arith.constant dense<0.000000e+00> : vector<8xf32>
    %202 = vector.multi_reduction <add>, %201, %cst_119 [1] : vector<8x16xf32> to vector<8xf32>
    %203 = vector.shape_cast %202 : vector<8xf32> to vector<8x1xf32>
    %c0_120 = arith.constant 0 : index
    %c0_121 = arith.constant 0 : index
    %c0_122 = arith.constant 0 : index
    %204 = vector.load %arg9[%c0_120, %c0_121, %c0_122] : memref<1x8x2xf32, #tpu.memory_space<vmem>>, vector<1x8x1xf32>
    %205 = vector.shape_cast %204 : vector<1x8x1xf32> to vector<8x1xf32>
    %206 = vector.shape_cast %203 : vector<8x1xf32> to vector<1x8x1xf32>
    tpu.vector_store %arg9[%c0_120, %c0_121, %c0_122], %206 {strides = array<i32>} : memref<1x8x2xf32, #tpu.memory_space<vmem>>, vector<1x8x1xf32>,
    %207 = arith.mulf %201, %201 : vector<8x16xf32>
    %cst_123 = arith.constant dense<0.000000e+00> : vector<8xf32>
    %208 = vector.multi_reduction <add>, %207, %cst_123 [1] : vector<8x16xf32> to vector<8xf32>
    %209 = vector.shape_cast %208 : vector<8xf32> to vector<8x1xf32>
    %c0_124 = arith.constant 0 : index
    %c0_125 = arith.constant 0 : index
    %c1_126 = arith.constant 1 : index
    %210 = vector.load %arg9[%c0_124, %c0_125, %c1_126] : memref<1x8x2xf32, #tpu.memory_space<vmem>>, vector<1x8x1xf32>
    %211 = vector.shape_cast %210 : vector<1x8x1xf32> to vector<8x1xf32>
    %212 = vector.shape_cast %209 : vector<8x1xf32> to vector<1x8x1xf32>
    tpu.vector_store %arg9[%c0_124, %c0_125, %c1_126], %212 {strides = array<i32>} : memref<1x8x2xf32, #tpu.memory_space<vmem>>, vector<1x8x1xf32>,
    return
  }
  func.func @transform_0(%arg0: i32) -> (i32, i32, i32, i32) {
    %c0_i32 = arith.constant 0 : i32
    %c0_i32_0 = arith.constant 0 : i32
    %c0_i32_1 = arith.constant 0 : i32
    %c0_i32_2 = arith.constant 0 : i32
    return %arg0, %c0_i32, %c0_i32_0, %c0_i32_1 : i32, i32, i32, i32
  }
  func.func @transform_1(%arg0: i32) -> (i32, i32, i32) {
    %c0_i32 = arith.constant 0 : i32
    %c0_i32_0 = arith.constant 0 : i32
    %c0_i32_1 = arith.constant 0 : i32
    %c0_i32_2 = arith.constant 0 : i32
    return %c0_i32, %c0_i32_0, %c0_i32_1 : i32, i32, i32
  }
  func.func @transform_2(%arg0: i32) -> (i32, i32, i32) {
    %c0_i32 = arith.constant 0 : i32
    %c0_i32_0 = arith.constant 0 : i32
    %c0_i32_1 = arith.constant 0 : i32
    %c0_i32_2 = arith.constant 0 : i32
    return %c0_i32, %c0_i32_0, %c0_i32_1 : i32, i32, i32
  }
  func.func @transform_3(%arg0: i32) -> (i32, i32) {
    %c0_i32 = arith.constant 0 : i32
    %c0_i32_0 = arith.constant 0 : i32
    %c0_i32_1 = arith.constant 0 : i32
    return %c0_i32, %c0_i32_0 : i32, i32
  }
  func.func @transform_4(%arg0: i32) -> (i32, i32) {
    %c0_i32 = arith.constant 0 : i32
    %c0_i32_0 = arith.constant 0 : i32
    %c0_i32_1 = arith.constant 0 : i32
    return %c0_i32, %c0_i32_0 : i32, i32
  }
  func.func @transform_5(%arg0: i32) -> (i32, i32) {
    %c0_i32 = arith.constant 0 : i32
    %c0_i32_0 = arith.constant 0 : i32
    %c0_i32_1 = arith.constant 0 : i32
    return %c0_i32, %c0_i32_0 : i32, i32
  }
  func.func @transform_6(%arg0: i32) -> (i32, i32) {
    %c0_i32 = arith.constant 0 : i32
    %c0_i32_0 = arith.constant 0 : i32
    %c0_i32_1 = arith.constant 0 : i32
    return %c0_i32, %c0_i32_0 : i32, i32
  }
  func.func @transform_7(%arg0: i32) -> (i32, i32, i32, i32) {
    %c0_i32 = arith.constant 0 : i32
    %c0_i32_0 = arith.constant 0 : i32
    %c0_i32_1 = arith.constant 0 : i32
    %c0_i32_2 = arith.constant 0 : i32
    return %arg0, %c0_i32, %c0_i32_0, %c0_i32_1 : i32, i32, i32, i32
  }
  func.func @transform_8(%arg0: i32) -> (i32, i32, i32) {
    %c0_i32 = arith.constant 0 : i32
    %c0_i32_0 = arith.constant 0 : i32
    %c0_i32_1 = arith.constant 0 : i32
    return %arg0, %c0_i32, %c0_i32_0 : i32, i32, i32
  }
}

module attributes {stable_mosaic.version = 11 : i64} {
  func.func @_mlp_ln2_kernel(%arg0: i32, %arg1: i32, %arg2: memref<1x8x3x16xf32, #tpu.memory_space<vmem>>, %arg3: memref<8x8xf32, #tpu.memory_space<vmem>>, %arg4: memref<8x8xf32, #tpu.memory_space<vmem>>, %arg5: memref<8x8xf32, #tpu.memory_space<vmem>>, %arg6: memref<8x3xf32, #tpu.memory_space<vmem>>, %arg7: memref<8x3xf32, #tpu.memory_space<vmem>>, %arg8: memref<8x1xf32, #tpu.memory_space<vmem>>, %arg9: memref<8x1xf32, #tpu.memory_space<vmem>>, %arg10: memref<8x1xf32, #tpu.memory_space<vmem>>, %arg11: memref<8x1xf32, #tpu.memory_space<vmem>>, %arg12: memref<1x8x3x16xf32, #tpu.memory_space<vmem>>) attributes {dimension_semantics = [#tpu.dimension_semantics<parallel>, #tpu.dimension_semantics<parallel>], iteration_bounds = array<i64: 2, 1>, scalar_prefetch = 0 : i64, scratch_operands = 0 : i64, tpu.core_type = #tpu.core_type<tc>, window_params = [{transform_indices = @transform_0, window_bounds = array<i64: 1, 8, 3, 16>}, {pipeline_mode = #tpu.pipeline_mode<synchronous>, transform_indices = @transform_1, window_bounds = array<i64: 8, 8>}, {pipeline_mode = #tpu.pipeline_mode<synchronous>, transform_indices = @transform_2, window_bounds = array<i64: 8, 8>}, {pipeline_mode = #tpu.pipeline_mode<synchronous>, transform_indices = @transform_3, window_bounds = array<i64: 8, 8>}, {pipeline_mode = #tpu.pipeline_mode<synchronous>, transform_indices = @transform_4, window_bounds = array<i64: 8, 3>}, {pipeline_mode = #tpu.pipeline_mode<synchronous>, transform_indices = @transform_5, window_bounds = array<i64: 8, 3>}, {pipeline_mode = #tpu.pipeline_mode<synchronous>, transform_indices = @transform_6, window_bounds = array<i64: 8, 1>}, {pipeline_mode = #tpu.pipeline_mode<synchronous>, transform_indices = @transform_7, window_bounds = array<i64: 8, 1>}, {pipeline_mode = #tpu.pipeline_mode<synchronous>, transform_indices = @transform_8, window_bounds = array<i64: 8, 1>}, {pipeline_mode = #tpu.pipeline_mode<synchronous>, transform_indices = @transform_9, window_bounds = array<i64: 8, 1>}, {transform_indices = @transform_10, window_bounds = array<i64: 1, 8, 3, 16>}]} {
    %c0 = arith.constant 0 : index
    %c0_0 = arith.constant 0 : index
    %c0_1 = arith.constant 0 : index
    %c0_2 = arith.constant 0 : index
    %0 = vector.load %arg2[%c0, %c0_0, %c0_1, %c0_2] : memref<1x8x3x16xf32, #tpu.memory_space<vmem>>, vector<1x8x1x16xf32>
    %1 = vector.shape_cast %0 : vector<1x8x1x16xf32> to vector<8x16xf32>
    %c0_3 = arith.constant 0 : index
    %c0_4 = arith.constant 0 : index
    %c1 = arith.constant 1 : index
    %c0_5 = arith.constant 0 : index
    %2 = vector.load %arg2[%c0_3, %c0_4, %c1, %c0_5] : memref<1x8x3x16xf32, #tpu.memory_space<vmem>>, vector<1x8x1x16xf32>
    %3 = vector.shape_cast %2 : vector<1x8x1x16xf32> to vector<8x16xf32>
    %c0_6 = arith.constant 0 : index
    %c0_7 = arith.constant 0 : index
    %c2 = arith.constant 2 : index
    %c0_8 = arith.constant 0 : index
    %4 = vector.load %arg2[%c0_6, %c0_7, %c2, %c0_8] : memref<1x8x3x16xf32, #tpu.memory_space<vmem>>, vector<1x8x1x16xf32>
    %5 = vector.shape_cast %4 : vector<1x8x1x16xf32> to vector<8x16xf32>
    %c0_9 = arith.constant 0 : index
    %c0_10 = arith.constant 0 : index
    %6 = vector.load %arg3[%c0_9, %c0_10] : memref<8x8xf32, #tpu.memory_space<vmem>>, vector<8x8xf32>
    %cst = arith.constant dense<0.000000e+00> : vector<8x16xf32>
    %7 = tpu.matmul %6, %1, %cst {dimension_numbers = #tpu.dot_dimension_numbers<[1], [0], [0], [1], [0, 0, 1, 1], [], []>} : vector<8x8xf32>, vector<8x16xf32>, vector<8x16xf32> -> vector<8x16xf32>
    %c0_11 = arith.constant 0 : index
    %c0_12 = arith.constant 0 : index
    %8 = vector.load %arg6[%c0_11, %c0_12] : memref<8x3xf32, #tpu.memory_space<vmem>>, vector<8x1xf32>
    %9 = vector.broadcast %8 : vector<8x1xf32> to vector<8x16xf32>
    %10 = arith.addf %7, %9 : vector<8x16xf32>
    %cst_13 = arith.constant dense<0.000000e+00> : vector<8x16xf32>
    %11 = tpu.matmul %6, %3, %cst_13 {dimension_numbers = #tpu.dot_dimension_numbers<[1], [0], [0], [1], [0, 0, 1, 1], [], []>} : vector<8x8xf32>, vector<8x16xf32>, vector<8x16xf32> -> vector<8x16xf32>
    %c0_14 = arith.constant 0 : index
    %c1_15 = arith.constant 1 : index
    %12 = vector.load %arg6[%c0_14, %c1_15] : memref<8x3xf32, #tpu.memory_space<vmem>>, vector<8x1xf32>
    %13 = vector.broadcast %12 : vector<8x1xf32> to vector<8x16xf32>
    %14 = arith.addf %11, %13 : vector<8x16xf32>
    %cst_16 = arith.constant dense<0.000000e+00> : vector<8x16xf32>
    %15 = tpu.matmul %6, %5, %cst_16 {dimension_numbers = #tpu.dot_dimension_numbers<[1], [0], [0], [1], [0, 0, 1, 1], [], []>} : vector<8x8xf32>, vector<8x16xf32>, vector<8x16xf32> -> vector<8x16xf32>
    %c0_17 = arith.constant 0 : index
    %c2_18 = arith.constant 2 : index
    %16 = vector.load %arg6[%c0_17, %c2_18] : memref<8x3xf32, #tpu.memory_space<vmem>>, vector<8x1xf32>
    %17 = vector.broadcast %16 : vector<8x1xf32> to vector<8x16xf32>
    %18 = arith.addf %15, %17 : vector<8x16xf32>
    %19 = arith.mulf %10, %10 : vector<8x16xf32>
    %20 = arith.mulf %14, %14 : vector<8x16xf32>
    %21 = arith.addf %19, %20 : vector<8x16xf32>
    %22 = arith.mulf %18, %18 : vector<8x16xf32>
    %23 = arith.addf %21, %22 : vector<8x16xf32>
    %24 = math.sqrt %23 : vector<8x16xf32>
    %cst_19 = arith.constant 9.99999997E-7 : f32
    %25 = vector.broadcast %cst_19 : f32 to vector<8x16xf32>
    %26 = arith.addf %24, %25 : vector<8x16xf32>
    %c0_20 = arith.constant 0 : index
    %c0_21 = arith.constant 0 : index
    %27 = vector.load %arg8[%c0_20, %c0_21] : memref<8x1xf32, #tpu.memory_space<vmem>>, vector<8x1xf32>
    %28 = vector.broadcast %27 : vector<8x1xf32> to vector<8x16xf32>
    %29 = arith.mulf %28, %26 : vector<8x16xf32>
    %c0_22 = arith.constant 0 : index
    %c0_23 = arith.constant 0 : index
    %30 = vector.load %arg9[%c0_22, %c0_23] : memref<8x1xf32, #tpu.memory_space<vmem>>, vector<8x1xf32>
    %31 = vector.broadcast %30 : vector<8x1xf32> to vector<8x16xf32>
    %32 = arith.addf %29, %31 : vector<8x16xf32>
    %33 = arith.divf %32, %26 : vector<8x16xf32>
    %34 = arith.mulf %10, %33 : vector<8x16xf32>
    %35 = arith.mulf %14, %33 : vector<8x16xf32>
    %36 = arith.mulf %18, %33 : vector<8x16xf32>
    %c0_24 = arith.constant 0 : index
    %c0_25 = arith.constant 0 : index
    %37 = vector.load %arg4[%c0_24, %c0_25] : memref<8x8xf32, #tpu.memory_space<vmem>>, vector<8x8xf32>
    %cst_26 = arith.constant dense<0.000000e+00> : vector<8x16xf32>
    %38 = tpu.matmul %37, %34, %cst_26 {dimension_numbers = #tpu.dot_dimension_numbers<[1], [0], [0], [1], [0, 0, 1, 1], [], []>} : vector<8x8xf32>, vector<8x16xf32>, vector<8x16xf32> -> vector<8x16xf32>
    %cst_27 = arith.constant dense<0.000000e+00> : vector<8x16xf32>
    %39 = tpu.matmul %37, %35, %cst_27 {dimension_numbers = #tpu.dot_dimension_numbers<[1], [0], [0], [1], [0, 0, 1, 1], [], []>} : vector<8x8xf32>, vector<8x16xf32>, vector<8x16xf32> -> vector<8x16xf32>
    %cst_28 = arith.constant dense<0.000000e+00> : vector<8x16xf32>
    %40 = tpu.matmul %37, %36, %cst_28 {dimension_numbers = #tpu.dot_dimension_numbers<[1], [0], [0], [1], [0, 0, 1, 1], [], []>} : vector<8x8xf32>, vector<8x16xf32>, vector<8x16xf32> -> vector<8x16xf32>
    %41 = arith.mulf %34, %38 : vector<8x16xf32>
    %42 = arith.mulf %35, %39 : vector<8x16xf32>
    %43 = arith.addf %41, %42 : vector<8x16xf32>
    %44 = arith.mulf %36, %40 : vector<8x16xf32>
    %45 = arith.addf %43, %44 : vector<8x16xf32>
    %46 = arith.mulf %38, %38 : vector<8x16xf32>
    %47 = arith.mulf %39, %39 : vector<8x16xf32>
    %48 = arith.addf %46, %47 : vector<8x16xf32>
    %49 = arith.mulf %40, %40 : vector<8x16xf32>
    %50 = arith.addf %48, %49 : vector<8x16xf32>
    %cst_29 = arith.constant 0.000000e+00 : f32
    %51 = vector.broadcast %cst_29 : f32 to vector<8x16xf32>
    %52 = arith.cmpf oge, %45, %51 : vector<8x16xf32>
    %cst_30 = arith.constant 9.99999997E-7 : f32
    %53 = vector.broadcast %cst_30 : f32 to vector<8x16xf32>
    %54 = arith.addf %50, %53 : vector<8x16xf32>
    %55 = arith.divf %45, %54 : vector<8x16xf32>
    %cst_31 = arith.constant 0.000000e+00 : f32
    %56 = vector.broadcast %cst_31 : f32 to vector<8x16xf32>
    %57 = arith.mulf %56, %34 : vector<8x16xf32>
    %58 = arith.mulf %55, %38 : vector<8x16xf32>
    %59 = arith.subf %34, %58 : vector<8x16xf32>
    %60 = arith.select %52, %34, %59 : vector<8x16xi1>, vector<8x16xf32>
    %cst_32 = arith.constant 1.000000e+00 : f32
    %61 = vector.broadcast %cst_32 : f32 to vector<8x16xf32>
    %62 = arith.mulf %61, %60 : vector<8x16xf32>
    %63 = arith.addf %57, %62 : vector<8x16xf32>
    %cst_33 = arith.constant 0.000000e+00 : f32
    %64 = vector.broadcast %cst_33 : f32 to vector<8x16xf32>
    %65 = arith.mulf %64, %35 : vector<8x16xf32>
    %66 = arith.mulf %55, %39 : vector<8x16xf32>
    %67 = arith.subf %35, %66 : vector<8x16xf32>
    %68 = arith.select %52, %35, %67 : vector<8x16xi1>, vector<8x16xf32>
    %cst_34 = arith.constant 1.000000e+00 : f32
    %69 = vector.broadcast %cst_34 : f32 to vector<8x16xf32>
    %70 = arith.mulf %69, %68 : vector<8x16xf32>
    %71 = arith.addf %65, %70 : vector<8x16xf32>
    %cst_35 = arith.constant 0.000000e+00 : f32
    %72 = vector.broadcast %cst_35 : f32 to vector<8x16xf32>
    %73 = arith.mulf %72, %36 : vector<8x16xf32>
    %74 = arith.mulf %55, %40 : vector<8x16xf32>
    %75 = arith.subf %36, %74 : vector<8x16xf32>
    %76 = arith.select %52, %36, %75 : vector<8x16xi1>, vector<8x16xf32>
    %cst_36 = arith.constant 1.000000e+00 : f32
    %77 = vector.broadcast %cst_36 : f32 to vector<8x16xf32>
    %78 = arith.mulf %77, %76 : vector<8x16xf32>
    %79 = arith.addf %73, %78 : vector<8x16xf32>
    %c0_37 = arith.constant 0 : index
    %c0_38 = arith.constant 0 : index
    %80 = vector.load %arg5[%c0_37, %c0_38] : memref<8x8xf32, #tpu.memory_space<vmem>>, vector<8x8xf32>
    %cst_39 = arith.constant dense<0.000000e+00> : vector<8x16xf32>
    %81 = tpu.matmul %80, %63, %cst_39 {dimension_numbers = #tpu.dot_dimension_numbers<[1], [0], [0], [1], [0, 0, 1, 1], [], []>} : vector<8x8xf32>, vector<8x16xf32>, vector<8x16xf32> -> vector<8x16xf32>
    %c0_40 = arith.constant 0 : index
    %c0_41 = arith.constant 0 : index
    %82 = vector.load %arg7[%c0_40, %c0_41] : memref<8x3xf32, #tpu.memory_space<vmem>>, vector<8x1xf32>
    %83 = vector.broadcast %82 : vector<8x1xf32> to vector<8x16xf32>
    %84 = arith.addf %81, %83 : vector<8x16xf32>
    %cst_42 = arith.constant dense<0.000000e+00> : vector<8x16xf32>
    %85 = tpu.matmul %80, %71, %cst_42 {dimension_numbers = #tpu.dot_dimension_numbers<[1], [0], [0], [1], [0, 0, 1, 1], [], []>} : vector<8x8xf32>, vector<8x16xf32>, vector<8x16xf32> -> vector<8x16xf32>
    %c0_43 = arith.constant 0 : index
    %c1_44 = arith.constant 1 : index
    %86 = vector.load %arg7[%c0_43, %c1_44] : memref<8x3xf32, #tpu.memory_space<vmem>>, vector<8x1xf32>
    %87 = vector.broadcast %86 : vector<8x1xf32> to vector<8x16xf32>
    %88 = arith.addf %85, %87 : vector<8x16xf32>
    %cst_45 = arith.constant dense<0.000000e+00> : vector<8x16xf32>
    %89 = tpu.matmul %80, %79, %cst_45 {dimension_numbers = #tpu.dot_dimension_numbers<[1], [0], [0], [1], [0, 0, 1, 1], [], []>} : vector<8x8xf32>, vector<8x16xf32>, vector<8x16xf32> -> vector<8x16xf32>
    %c0_46 = arith.constant 0 : index
    %c2_47 = arith.constant 2 : index
    %90 = vector.load %arg7[%c0_46, %c2_47] : memref<8x3xf32, #tpu.memory_space<vmem>>, vector<8x1xf32>
    %91 = vector.broadcast %90 : vector<8x1xf32> to vector<8x16xf32>
    %92 = arith.addf %89, %91 : vector<8x16xf32>
    %93 = arith.mulf %84, %84 : vector<8x16xf32>
    %94 = arith.mulf %88, %88 : vector<8x16xf32>
    %95 = arith.addf %93, %94 : vector<8x16xf32>
    %96 = arith.mulf %92, %92 : vector<8x16xf32>
    %97 = arith.addf %95, %96 : vector<8x16xf32>
    %98 = math.sqrt %97 : vector<8x16xf32>
    %cst_48 = arith.constant 9.99999997E-7 : f32
    %99 = vector.broadcast %cst_48 : f32 to vector<8x16xf32>
    %100 = arith.addf %98, %99 : vector<8x16xf32>
    %cst_49 = arith.constant dense<0.000000e+00> : vector<16xf32>
    %101 = vector.multi_reduction <add>, %100, %cst_49 [0] : vector<8x16xf32> to vector<16xf32>
    %102 = vector.shape_cast %101 : vector<16xf32> to vector<1x16xf32>
    %cst_50 = arith.constant 8.000000e+00 : f32
    %103 = vector.broadcast %cst_50 : f32 to vector<1x16xf32>
    %104 = arith.divf %102, %103 : vector<1x16xf32>
    %105 = vector.broadcast %104 : vector<1x16xf32> to vector<8x16xf32>
    %106 = arith.subf %100, %105 : vector<8x16xf32>
    %107 = arith.mulf %106, %106 : vector<8x16xf32>
    %cst_51 = arith.constant dense<0.000000e+00> : vector<16xf32>
    %108 = vector.multi_reduction <add>, %107, %cst_51 [0] : vector<8x16xf32> to vector<16xf32>
    %109 = vector.shape_cast %108 : vector<16xf32> to vector<1x16xf32>
    %cst_52 = arith.constant 8.000000e+00 : f32
    %110 = vector.broadcast %cst_52 : f32 to vector<1x16xf32>
    %111 = arith.divf %109, %110 : vector<1x16xf32>
    %112 = vector.broadcast %104 : vector<1x16xf32> to vector<8x16xf32>
    %113 = arith.subf %100, %112 : vector<8x16xf32>
    %cst_53 = arith.constant 9.99999974E-6 : f32
    %114 = vector.broadcast %cst_53 : f32 to vector<1x16xf32>
    %115 = arith.addf %111, %114 : vector<1x16xf32>
    %116 = math.rsqrt %115 : vector<1x16xf32>
    %117 = vector.broadcast %116 : vector<1x16xf32> to vector<8x16xf32>
    %118 = arith.mulf %113, %117 : vector<8x16xf32>
    %c0_54 = arith.constant 0 : index
    %c0_55 = arith.constant 0 : index
    %119 = vector.load %arg10[%c0_54, %c0_55] : memref<8x1xf32, #tpu.memory_space<vmem>>, vector<8x1xf32>
    %120 = vector.broadcast %119 : vector<8x1xf32> to vector<8x16xf32>
    %121 = arith.mulf %118, %120 : vector<8x16xf32>
    %c0_56 = arith.constant 0 : index
    %c0_57 = arith.constant 0 : index
    %122 = vector.load %arg11[%c0_56, %c0_57] : memref<8x1xf32, #tpu.memory_space<vmem>>, vector<8x1xf32>
    %123 = vector.broadcast %122 : vector<8x1xf32> to vector<8x16xf32>
    %124 = arith.addf %121, %123 : vector<8x16xf32>
    %125 = arith.divf %124, %100 : vector<8x16xf32>
    %126 = arith.mulf %84, %125 : vector<8x16xf32>
    %127 = arith.addf %126, %1 : vector<8x16xf32>
    %c0_58 = arith.constant 0 : index
    %c0_59 = arith.constant 0 : index
    %c0_60 = arith.constant 0 : index
    %c0_61 = arith.constant 0 : index
    %128 = vector.load %arg12[%c0_58, %c0_59, %c0_60, %c0_61] : memref<1x8x3x16xf32, #tpu.memory_space<vmem>>, vector<1x8x1x16xf32>
    %129 = vector.shape_cast %128 : vector<1x8x1x16xf32> to vector<8x16xf32>
    %130 = vector.shape_cast %127 : vector<8x16xf32> to vector<1x8x1x16xf32>
    tpu.vector_store %arg12[%c0_58, %c0_59, %c0_60, %c0_61], %130 {strides = array<i32>} : memref<1x8x3x16xf32, #tpu.memory_space<vmem>>, vector<1x8x1x16xf32>,
    %131 = arith.mulf %88, %125 : vector<8x16xf32>
    %132 = arith.addf %131, %3 : vector<8x16xf32>
    %c0_62 = arith.constant 0 : index
    %c0_63 = arith.constant 0 : index
    %c1_64 = arith.constant 1 : index
    %c0_65 = arith.constant 0 : index
    %133 = vector.load %arg12[%c0_62, %c0_63, %c1_64, %c0_65] : memref<1x8x3x16xf32, #tpu.memory_space<vmem>>, vector<1x8x1x16xf32>
    %134 = vector.shape_cast %133 : vector<1x8x1x16xf32> to vector<8x16xf32>
    %135 = vector.shape_cast %132 : vector<8x16xf32> to vector<1x8x1x16xf32>
    tpu.vector_store %arg12[%c0_62, %c0_63, %c1_64, %c0_65], %135 {strides = array<i32>} : memref<1x8x3x16xf32, #tpu.memory_space<vmem>>, vector<1x8x1x16xf32>,
    %136 = arith.mulf %92, %125 : vector<8x16xf32>
    %137 = arith.addf %136, %5 : vector<8x16xf32>
    %c0_66 = arith.constant 0 : index
    %c0_67 = arith.constant 0 : index
    %c2_68 = arith.constant 2 : index
    %c0_69 = arith.constant 0 : index
    %138 = vector.load %arg12[%c0_66, %c0_67, %c2_68, %c0_69] : memref<1x8x3x16xf32, #tpu.memory_space<vmem>>, vector<1x8x1x16xf32>
    %139 = vector.shape_cast %138 : vector<1x8x1x16xf32> to vector<8x16xf32>
    %140 = vector.shape_cast %137 : vector<8x16xf32> to vector<1x8x1x16xf32>
    tpu.vector_store %arg12[%c0_66, %c0_67, %c2_68, %c0_69], %140 {strides = array<i32>} : memref<1x8x3x16xf32, #tpu.memory_space<vmem>>, vector<1x8x1x16xf32>,
    return
  }
  func.func @transform_0(%arg0: i32, %arg1: i32) -> (i32, i32, i32, i32) {
    %c0_i32 = arith.constant 0 : i32
    %c0_i32_0 = arith.constant 0 : i32
    %c0_i32_1 = arith.constant 0 : i32
    return %arg0, %c0_i32, %c0_i32_0, %arg1 : i32, i32, i32, i32
  }
  func.func @transform_1(%arg0: i32, %arg1: i32) -> (i32, i32) {
    %c0_i32 = arith.constant 0 : i32
    %c0_i32_0 = arith.constant 0 : i32
    %c0_i32_1 = arith.constant 0 : i32
    return %c0_i32, %c0_i32_0 : i32, i32
  }
  func.func @transform_2(%arg0: i32, %arg1: i32) -> (i32, i32) {
    %c0_i32 = arith.constant 0 : i32
    %c0_i32_0 = arith.constant 0 : i32
    %c0_i32_1 = arith.constant 0 : i32
    return %c0_i32, %c0_i32_0 : i32, i32
  }
  func.func @transform_3(%arg0: i32, %arg1: i32) -> (i32, i32) {
    %c0_i32 = arith.constant 0 : i32
    %c0_i32_0 = arith.constant 0 : i32
    %c0_i32_1 = arith.constant 0 : i32
    return %c0_i32, %c0_i32_0 : i32, i32
  }
  func.func @transform_4(%arg0: i32, %arg1: i32) -> (i32, i32) {
    %c0_i32 = arith.constant 0 : i32
    %c0_i32_0 = arith.constant 0 : i32
    %c0_i32_1 = arith.constant 0 : i32
    return %c0_i32, %c0_i32_0 : i32, i32
  }
  func.func @transform_5(%arg0: i32, %arg1: i32) -> (i32, i32) {
    %c0_i32 = arith.constant 0 : i32
    %c0_i32_0 = arith.constant 0 : i32
    %c0_i32_1 = arith.constant 0 : i32
    return %c0_i32, %c0_i32_0 : i32, i32
  }
  func.func @transform_6(%arg0: i32, %arg1: i32) -> (i32, i32) {
    %c0_i32 = arith.constant 0 : i32
    %c0_i32_0 = arith.constant 0 : i32
    %c0_i32_1 = arith.constant 0 : i32
    return %c0_i32, %c0_i32_0 : i32, i32
  }
  func.func @transform_7(%arg0: i32, %arg1: i32) -> (i32, i32) {
    %c0_i32 = arith.constant 0 : i32
    %c0_i32_0 = arith.constant 0 : i32
    %c0_i32_1 = arith.constant 0 : i32
    return %c0_i32, %c0_i32_0 : i32, i32
  }
  func.func @transform_8(%arg0: i32, %arg1: i32) -> (i32, i32) {
    %c0_i32 = arith.constant 0 : i32
    %c0_i32_0 = arith.constant 0 : i32
    %c0_i32_1 = arith.constant 0 : i32
    return %c0_i32, %c0_i32_0 : i32, i32
  }
  func.func @transform_9(%arg0: i32, %arg1: i32) -> (i32, i32) {
    %c0_i32 = arith.constant 0 : i32
    %c0_i32_0 = arith.constant 0 : i32
    %c0_i32_1 = arith.constant 0 : i32
    return %c0_i32, %c0_i32_0 : i32, i32
  }
  func.func @transform_10(%arg0: i32, %arg1: i32) -> (i32, i32, i32, i32) {
    %c0_i32 = arith.constant 0 : i32
    %c0_i32_0 = arith.constant 0 : i32
    %c0_i32_1 = arith.constant 0 : i32
    return %arg0, %c0_i32, %c0_i32_0, %arg1 : i32, i32, i32, i32
  }
}

</mosaic_0001>

<llo_original>
// kernel: transformer_block.3
$region0: #{transformer_block.3}
  #allocation0 [shape = 'u32[]', space=smem, size = 0x4, offset = 0x4, fixed_abs, tag = 'smem constant byte address 0x4 - core index']
  #allocation1 [shape = 'u32[144,128]{1,0:T(1,128)}', space=vmem, size = 0x12000, scoped, tag = 'internal scratch']
  %s0 = inlined_call_operand.vmem [shape: f32[2,8,3,16], index: 0, kind: input, shape index: {}]
  %s1 = inlined_call_operand.vmem [shape: f32[8,8], index: 1, kind: input, shape index: {}]
  %s2 = inlined_call_operand.vmem [shape: f32[8,8], index: 2, kind: input, shape index: {}]
  %s3 = inlined_call_operand.vmem [shape: f32[8,8], index: 3, kind: input, shape index: {}]
  %s4 = inlined_call_operand.vmem [shape: f32[8,3], index: 4, kind: input, shape index: {}]
  %s5 = inlined_call_operand.vmem [shape: f32[8,3], index: 5, kind: input, shape index: {}]
  %s6 = inlined_call_operand.vmem [shape: f32[8,1], index: 6, kind: input, shape index: {}]
  %s7 = inlined_call_operand.vmem [shape: f32[8,1], index: 7, kind: input, shape index: {}]
  %s8 = inlined_call_operand.vmem [shape: f32[8,1], index: 8, kind: input, shape index: {}]
  %s9 = inlined_call_operand.vmem [shape: f32[8,1], index: 9, kind: input, shape index: {}]
  %s10 = inlined_call_operand.vmem [shape: f32[2,8,3,16], index: 10, kind: output, shape index: {}]
  %s11 = sld [smem:[#allocation0]]
  $region73: #{transformer_block.3} parent=0
    _
  %s13 = ssub.s32 1, %s11
  %s14 = scalar_select 0, %s13, %s11
  loop: start=0, step=1, limit=4
  $region2: #{transformer_block.3} parent=0 // loop_pre_header
    _
  $region3: #{transformer_block.3} parent=0 // loop_header
    %s16 = sphi 0, %s20
    %p17 = scmp.ge.s32.totalorder %s16, 4
    %s23 = sphi 0, %s35
    %s24 = sphi 0, %s31
    %s25 = sphi 0, %s23
    %s26 = sphi 0, %s24
    %s27 = sphi 0, %s25
    %s28 = sphi 0, %s26
    %s40 = sphi 0, %s42
    %s43 = sphi 0, %s40
    %s44 = sphi 0, %s43
    %s60 = sphi 0, %s44
    %s64 = sphi 0, %s64
    %s66 = sphi 0, %s64
    %s67 = sphi 0, %s66
    %s81 = sphi 0, %s67
    %s85 = sphi 0, %s85
    %s87 = sphi 0, %s85
    %s88 = sphi 0, %s87
    %s102 = sphi 0, %s88
    %s106 = sphi 0, %s106
    %s108 = sphi 0, %s106
    %s109 = sphi 0, %s108
    %s123 = sphi 0, %s109
    %s127 = sphi 0, %s127
    %s129 = sphi 0, %s127
    %s130 = sphi 0, %s129
    %s144 = sphi 0, %s130
    %s148 = sphi 0, %s148
    %s150 = sphi 0, %s148
    %s151 = sphi 0, %s150
    %s165 = sphi 0, %s151
    %s169 = sphi 0, %s169
    %s171 = sphi 0, %s169
    %s172 = sphi 0, %s171
    %s186 = sphi 0, %s172
    %s190 = sphi 0, %s190
    %s192 = sphi 0, %s190
    %s193 = sphi 0, %s192
    %s207 = sphi 0, %s193
    %s211 = sphi 0, %s211
    %s213 = sphi 0, %s211
    %s214 = sphi 0, %s213
    %s228 = sphi 0, %s214
    %s232 = sphi 0, %s232
    %s234 = sphi 0, %s232
    %s235 = sphi 0, %s234
    %s249 = sphi 0, %s235
    %s257 = sphi 0, %s259
    %s260 = sphi 0, %s257
    %s261 = sphi 0, %s260
    %s277 = sphi 0, %s261
  $region4: #{transformer_block.3} parent=0 // loop_header_branch
    %19 = sbr.rel (%p17) target = $region8
  $region5: #{transformer_block.3} parent=0 // loop_body
    %s21 = ssub.s32 %s16, 1
    %s22 = ssub.s32 %s16, 2
    %s29 = sadd.s32 1, %s24
    %p30 = scmp.ge.s32.totalorder %s29, 1
    %s31 = scalar_select %p30, 0, %s29
    %s32 = sadd.s32 1, %s23
    %s33 = scalar_select %p30, %s32, %s23
    %p34 = scmp.ge.s32.totalorder %s33, 2
    %s35 = scalar_select %p34, 0, %s33
    %s36 = ssub.s32 %s23, %s35
    %s37 = ssub.s32 %s24, %s31
    %s38 = sor.u32 %s36, %s37
    %p39 = scmp.eq.s32.totalorder %s38, 0
    %s41 = sadd.s32 %s40, 1
    %s42 = scalar_select %p39, %s40, %s41
    %p45 = pneg %p39
    %p46 = scmp.eq.s32.totalorder %s16, 1
    %p47 = por %p45, %p46
    %p48 = scmp.ne.s32.totalorder %s40, %s43
    %p49 = scmp.eq.s32.totalorder %s16, 0
    %p50 = por %p48, %p49
    %p51 = scmp.ne.s32.totalorder %s40, %s43
    %p52 = scmp.eq.s32.totalorder %s21, 1
    %p53 = por %p51, %p52
    %p54 = scmp.ne.s32.totalorder %s43, %s44
    %p55 = scmp.eq.s32.totalorder %s21, 0
    %p56 = por %p54, %p55
    %p57 = scmp.ne.s32.totalorder %s43, %s44
    %p58 = scmp.eq.s32.totalorder %s22, 1
    %p59 = por %p57, %p58
    %p61 = scmp.ne.s32.totalorder %s44, %s60
    %p62 = scmp.eq.s32.totalorder %s22, 0
    %p63 = por %p61, %p62
    %s65 = sadd.s32 %s64, 1
    %p68 = scmp.eq.s32.totalorder %s16, 1
    %p69 = scmp.ne.s32.totalorder %s64, %s66
    %p70 = scmp.eq.s32.totalorder %s16, 0
    %p71 = por %p69, %p70
    %p72 = scmp.ne.s32.totalorder %s64, %s66
    %p73 = scmp.eq.s32.totalorder %s21, 1
    %p74 = por %p72, %p73
    %p75 = scmp.ne.s32.totalorder %s66, %s67
    %p76 = scmp.eq.s32.totalorder %s21, 0
    %p77 = por %p75, %p76
    %p78 = scmp.ne.s32.totalorder %s66, %s67
    %p79 = scmp.eq.s32.totalorder %s22, 1
    %p80 = por %p78, %p79
    %p82 = scmp.ne.s32.totalorder %s67, %s81
    %p83 = scmp.eq.s32.totalorder %s22, 0
    %p84 = por %p82, %p83
    %s86 = sadd.s32 %s85, 1
    %p89 = scmp.eq.s32.totalorder %s16, 1
    %p90 = scmp.ne.s32.totalorder %s85, %s87
    %p91 = scmp.eq.s32.totalorder %s16, 0
    %p92 = por %p90, %p91
    %p93 = scmp.ne.s32.totalorder %s85, %s87
    %p94 = scmp.eq.s32.totalorder %s21, 1
    %p95 = por %p93, %p94
    %p96 = scmp.ne.s32.totalorder %s87, %s88
    %p97 = scmp.eq.s32.totalorder %s21, 0
    %p98 = por %p96, %p97
    %p99 = scmp.ne.s32.totalorder %s87, %s88
    %p100 = scmp.eq.s32.totalorder %s22, 1
    %p101 = por %p99, %p100
    %p103 = scmp.ne.s32.totalorder %s88, %s102
    %p104 = scmp.eq.s32.totalorder %s22, 0
    %p105 = por %p103, %p104
    %s107 = sadd.s32 %s106, 1
    %p110 = scmp.eq.s32.totalorder %s16, 1
    %p111 = scmp.ne.s32.totalorder %s106, %s108
    %p112 = scmp.eq.s32.totalorder %s16, 0
    %p113 = por %p111, %p112
    %p114 = scmp.ne.s32.totalorder %s106, %s108
    %p115 = scmp.eq.s32.totalorder %s21, 1
    %p116 = por %p114, %p115
    %p117 = scmp.ne.s32.totalorder %s108, %s109
    %p118 = scmp.eq.s32.totalorder %s21, 0
    %p119 = por %p117, %p118
    %p120 = scmp.ne.s32.totalorder %s108, %s109
    %p121 = scmp.eq.s32.totalorder %s22, 1
    %p122 = por %p120, %p121
    %p124 = scmp.ne.s32.totalorder %s109, %s123
    %p125 = scmp.eq.s32.totalorder %s22, 0
    %p126 = por %p124, %p125
    %s128 = sadd.s32 %s127, 1
    %p131 = scmp.eq.s32.totalorder %s16, 1
    %p132 = scmp.ne.s32.totalorder %s127, %s129
    %p133 = scmp.eq.s32.totalorder %s16, 0
    %p134 = por %p132, %p133
    %p135 = scmp.ne.s32.totalorder %s127, %s129
    %p136 = scmp.eq.s32.totalorder %s21, 1
    %p137 = por %p135, %p136
    %p138 = scmp.ne.s32.totalorder %s129, %s130
    %p139 = scmp.eq.s32.totalorder %s21, 0
    %p140 = por %p138, %p139
    %p141 = scmp.ne.s32.totalorder %s129, %s130
    %p142 = scmp.eq.s32.totalorder %s22, 1
    %p143 = por %p141, %p142
    %p145 = scmp.ne.s32.totalorder %s130, %s144
    %p146 = scmp.eq.s32.totalorder %s22, 0
    %p147 = por %p145, %p146
    %s149 = sadd.s32 %s148, 1
    %p152 = scmp.eq.s32.totalorder %s16, 1
    %p153 = scmp.ne.s32.totalorder %s148, %s150
    %p154 = scmp.eq.s32.totalorder %s16, 0
    %p155 = por %p153, %p154
    %p156 = scmp.ne.s32.totalorder %s148, %s150
    %p157 = scmp.eq.s32.totalorder %s21, 1
    %p158 = por %p156, %p157
    %p159 = scmp.ne.s32.totalorder %s150, %s151
    %p160 = scmp.eq.s32.totalorder %s21, 0
    %p161 = por %p159, %p160
    %p162 = scmp.ne.s32.totalorder %s150, %s151
    %p163 = scmp.eq.s32.totalorder %s22, 1
    %p164 = por %p162, %p163
    %p166 = scmp.ne.s32.totalorder %s151, %s165
    %p167 = scmp.eq.s32.totalorder %s22, 0
    %p168 = por %p166, %p167
    %s170 = sadd.s32 %s169, 1
    %p173 = scmp.eq.s32.totalorder %s16, 1
    %p174 = scmp.ne.s32.totalorder %s169, %s171
    %p175 = scmp.eq.s32.totalorder %s16, 0
    %p176 = por %p174, %p175
    %p177 = scmp.ne.s32.totalorder %s169, %s171
    %p178 = scmp.eq.s32.totalorder %s21, 1
    %p179 = por %p177, %p178
    %p180 = scmp.ne.s32.totalorder %s171, %s172
    %p181 = scmp.eq.s32.totalorder %s21, 0
    %p182 = por %p180, %p181
    %p183 = scmp.ne.s32.totalorder %s171, %s172
    %p184 = scmp.eq.s32.totalorder %s22, 1
    %p185 = por %p183, %p184
    %p187 = scmp.ne.s32.totalorder %s172, %s186
    %p188 = scmp.eq.s32.totalorder %s22, 0
    %p189 = por %p187, %p188
    %s191 = sadd.s32 %s190, 1
    %p194 = scmp.eq.s32.totalorder %s16, 1
    %p195 = scmp.ne.s32.totalorder %s190, %s192
    %p196 = scmp.eq.s32.totalorder %s16, 0
    %p197 = por %p195, %p196
    %p198 = scmp.ne.s32.totalorder %s190, %s192
    %p199 = scmp.eq.s32.totalorder %s21, 1
    %p200 = por %p198, %p199
    %p201 = scmp.ne.s32.totalorder %s192, %s193
    %p202 = scmp.eq.s32.totalorder %s21, 0
    %p203 = por %p201, %p202
    %p204 = scmp.ne.s32.totalorder %s192, %s193
    %p205 = scmp.eq.s32.totalorder %s22, 1
    %p206 = por %p204, %p205
    %p208 = scmp.ne.s32.totalorder %s193, %s207
    %p209 = scmp.eq.s32.totalorder %s22, 0
    %p210 = por %p208, %p209
    %s212 = sadd.s32 %s211, 1
    %p215 = scmp.eq.s32.totalorder %s16, 1
    %p216 = scmp.ne.s32.totalorder %s211, %s213
    %p217 = scmp.eq.s32.totalorder %s16, 0
    %p218 = por %p216, %p217
    %p219 = scmp.ne.s32.totalorder %s211, %s213
    %p220 = scmp.eq.s32.totalorder %s21, 1
    %p221 = por %p219, %p220
    %p222 = scmp.ne.s32.totalorder %s213, %s214
    %p223 = scmp.eq.s32.totalorder %s21, 0
    %p224 = por %p222, %p223
    %p225 = scmp.ne.s32.totalorder %s213, %s214
    %p226 = scmp.eq.s32.totalorder %s22, 1
    %p227 = por %p225, %p226
    %p229 = scmp.ne.s32.totalorder %s214, %s228
    %p230 = scmp.eq.s32.totalorder %s22, 0
    %p231 = por %p229, %p230
    %s233 = sadd.s32 %s232, 1
    %p236 = scmp.eq.s32.totalorder %s16, 1
    %p237 = scmp.ne.s32.totalorder %s232, %s234
    %p238 = scmp.eq.s32.totalorder %s16, 0
    %p239 = por %p237, %p238
    %p240 = scmp.ne.s32.totalorder %s232, %s234
    %p241 = scmp.eq.s32.totalorder %s21, 1
    %p242 = por %p240, %p241
    %p243 = scmp.ne.s32.totalorder %s234, %s235
    %p244 = scmp.eq.s32.totalorder %s21, 0
    %p245 = por %p243, %p244
    %p246 = scmp.ne.s32.totalorder %s234, %s235
    %p247 = scmp.eq.s32.totalorder %s22, 1
    %p248 = por %p246, %p247
    %p250 = scmp.ne.s32.totalorder %s235, %s249
    %p251 = scmp.eq.s32.totalorder %s22, 0
    %p252 = por %p250, %p251
    %s253 = ssub.s32 %s23, %s35
    %s254 = ssub.s32 %s24, %s31
    %s255 = sor.u32 %s253, %s254
    %p256 = scmp.eq.s32.totalorder %s255, 0
    %s258 = sadd.s32 %s257, 1
    %s259 = scalar_select %p256, %s257, %s258
    %p262 = pneg %p256
    %p263 = scmp.eq.s32.totalorder %s16, 1
    %p264 = por %p262, %p263
    %p265 = scmp.ne.s32.totalorder %s257, %s260
    %p266 = scmp.eq.s32.totalorder %s16, 0
    %p267 = por %p265, %p266
    %p268 = scmp.ne.s32.totalorder %s257, %s260
    %p269 = scmp.eq.s32.totalorder %s21, 1
    %p270 = por %p268, %p269
    %p271 = scmp.ne.s32.totalorder %s260, %s261
    %p272 = scmp.eq.s32.totalorder %s21, 0
    %p273 = por %p271, %p272
    %p274 = scmp.ne.s32.totalorder %s260, %s261
    %p275 = scmp.eq.s32.totalorder %s22, 1
    %p276 = por %p274, %p275
    %p278 = scmp.ne.s32.totalorder %s261, %s277
    %p279 = scmp.eq.s32.totalorder %s22, 0
    %p280 = por %p278, %p279
    %p281 = scmp.le.s32.totalorder 1, %s16
    %p282 = scmp.lt.s32.totalorder %s16, 3
    %p283 = pnand %p281, %p282
    %p284 = pneg %p283
    // Predicated region
    $region9: #{transformer_block.3} parent=5 // pred_check
      _
    $region10: #{transformer_block.3} parent=5 // pred_check_branch
      %286 = sbr.rel (%p283) target = $region12
    $region11: #{transformer_block.3} parent=5 // pred_region
      %s287 = ssub.s32 %s16, 1
      // Predicated region
      $region13: #{transformer_block.3} parent=11 // pred_check
        %p288 = pneg %p77
      $region14: #{transformer_block.3} parent=11 // pred_check_branch
        %290 = sbr.rel (%p288) target = $region16
      $region15: #{transformer_block.3} parent=11 // pred_region
        _
      $region16: #{transformer_block.3} parent=11 // pred_fallthru
        _
      // Predicated region
      $region17: #{transformer_block.3} parent=11 // pred_check
        %p291 = pneg %p98
      $region18: #{transformer_block.3} parent=11 // pred_check_branch
        %293 = sbr.rel (%p291) target = $region20
      $region19: #{transformer_block.3} parent=11 // pred_region
        _
      $region20: #{transformer_block.3} parent=11 // pred_fallthru
        _
      // Predicated region
      $region21: #{transformer_block.3} parent=11 // pred_check
        %p294 = pneg %p119
      $region22: #{transformer_block.3} parent=11 // pred_check_branch
        %296 = sbr.rel (%p294) target = $region24
      $region23: #{transformer_block.3} parent=11 // pred_region
        _
      $region24: #{transformer_block.3} parent=11 // pred_fallthru
        _
      // Predicated region
      $region25: #{transformer_block.3} parent=11 // pred_check
        %p297 = pneg %p140
      $region26: #{transformer_block.3} parent=11 // pred_check_branch
        %299 = sbr.rel (%p297) target = $region28
      $region27: #{transformer_block.3} parent=11 // pred_region
        _
      $region28: #{transformer_block.3} parent=11 // pred_fallthru
        _
      // Predicated region
      $region29: #{transformer_block.3} parent=11 // pred_check
        %p300 = pneg %p161
      $region30: #{transformer_block.3} parent=11 // pred_check_branch
        %302 = sbr.rel (%p300) target = $region32
      $region31: #{transformer_block.3} parent=11 // pred_region
        _
      $region32: #{transformer_block.3} parent=11 // pred_fallthru
        _
      // Predicated region
      $region33: #{transformer_block.3} parent=11 // pred_check
        %p303 = pneg %p182
      $region34: #{transformer_block.3} parent=11 // pred_check_branch
        %305 = sbr.rel (%p303) target = $region36
      $region35: #{transformer_block.3} parent=11 // pred_region
        _
      $region36: #{transformer_block.3} parent=11 // pred_fallthru
        _
      // Predicated region
      $region37: #{transformer_block.3} parent=11 // pred_check
        %p306 = pneg %p203
      $region38: #{transformer_block.3} parent=11 // pred_check_branch
        %308 = sbr.rel (%p306) target = $region40
      $region39: #{transformer_block.3} parent=11 // pred_region
        _
      $region40: #{transformer_block.3} parent=11 // pred_fallthru
        _
      // Predicated region
      $region41: #{transformer_block.3} parent=11 // pred_check
        %p309 = pneg %p224
      $region42: #{transformer_block.3} parent=11 // pred_check_branch
        %311 = sbr.rel (%p309) target = $region44
      $region43: #{transformer_block.3} parent=11 // pred_region
        _
      $region44: #{transformer_block.3} parent=11 // pred_fallthru
        _
      // Predicated region
      $region45: #{transformer_block.3} parent=11 // pred_check
        %p312 = pneg %p245
      $region46: #{transformer_block.3} parent=11 // pred_check_branch
        %314 = sbr.rel (%p312) target = $region48
      $region47: #{transformer_block.3} parent=11 // pred_region
        _
      $region48: #{transformer_block.3} parent=11 // pred_fallthru
        _
    $region12: #{transformer_block.3} parent=5 // pred_fallthru
      _
    %p315 = scmp.lt.s32.totalorder %s16, 2
    // Predicated region
    $region49: #{transformer_block.3} parent=5 // pred_check
      %p316 = pneg %p315
    $region50: #{transformer_block.3} parent=5 // pred_check_branch
      %318 = sbr.rel (%p316) target = $region52
    $region51: #{transformer_block.3} parent=5 // pred_region
      // Predicated region
      $region53: #{transformer_block.3} parent=51 // pred_check
        %p319 = pneg %p50
      $region54: #{transformer_block.3} parent=51 // pred_check_branch
        %321 = sbr.rel (%p319) target = $region56
      $region55: #{transformer_block.3} parent=51 // pred_region
        %p322 = scmp.lt.s32.totalorder %s23, 1
        %s323 = scalar_select %p322, %s23, 1
        %p324 = scmp.lt.s32.totalorder %s24, 0
        %s325 = scalar_select %p324, %s24, 0
        %s326 = smul.addr %s323, 8
        %s327 = sadd.s32 %s325, %s326
        %s328 = smul.addr %s327, 4
        %s329 = scalar_lea.vmem %s0, %s328
      $region56: #{transformer_block.3} parent=51 // pred_fallthru
        _
    $region52: #{transformer_block.3} parent=5 // pred_fallthru
      _
    %p330 = scmp.le.s32.totalorder 1, %s16
    %p331 = scmp.lt.s32.totalorder %s16, 3
    %p332 = pnand %p330, %p331
    %p333 = pneg %p332
    // Predicated region
    $region57: #{transformer_block.3} parent=5 // pred_check
      _
    $region58: #{transformer_block.3} parent=5 // pred_check_branch
      %335 = sbr.rel (%p332) target = $region60
    $region59: #{transformer_block.3} parent=5 // pred_region
      %s336 = ssub.s32 %s16, 1
      %p337 = scmp.lt.s32.totalorder %s25, 1
      %s338 = scalar_select %p337, %s25, 1
      %p339 = scmp.lt.s32.totalorder %s26, 0
      %s340 = scalar_select %p339, %s26, 0
      %s341 = smul.addr %s338, 8
      %s342 = sadd.s32 %s340, %s341
      %s343 = smul.addr %s342, 4
      %s344 = scalar_lea.vmem %s0, %s343
      %p345 = pneg %p56
      %p346 = pneg %p53
      %p347 = pneg %p77
      %p348 = pneg %p74
      %p349 = pneg %p98
      %p350 = pneg %p95
      %p351 = pneg %p119
      %p352 = pneg %p116
      %p353 = pneg %p140
      %p354 = pneg %p137
      %p355 = pneg %p161
      %p356 = pneg %p158
      %p357 = pneg %p182
      %p358 = pneg %p179
      %p359 = pneg %p203
      %p360 = pneg %p200
      %p361 = pneg %p224
      %p362 = pneg %p221
      %p363 = pneg %p245
      %p364 = pneg %p242
      %p365 = pneg %p273
      %p366 = pneg %p270
      %p367 = scmp.lt.s32.totalorder %s25, 1
      %s368 = scalar_select %p367, %s25, 1
      %p369 = scmp.lt.s32.totalorder %s26, 0
      %s370 = scalar_select %p369, %s26, 0
      %s371 = smul.addr %s368, 8
      %s372 = sadd.s32 %s370, %s371
      %s373 = smul.addr %s372, 4
      %s374 = scalar_lea.vmem %s10, %s373
      %p375 = scmp.lt.s32.totalorder %s25, 1
      %s376 = scalar_select %p375, %s25, 1
      %p377 = scmp.lt.s32.totalorder %s26, 0
      %s378 = scalar_select %p377, %s26, 0
      %s379 = smul.addr %s376, 8
      %s380 = sadd.s32 %s378, %s379
      %s381 = smul.addr %s380, 4
      %s382 = scalar_lea.vmem %s0, %s381
      %p383 = scmp.lt.s32.totalorder %s25, 1
      %s384 = scalar_select %p383, %s25, 1
      %p385 = scmp.lt.s32.totalorder %s26, 0
      %s386 = scalar_select %p385, %s26, 0
      %s387 = smul.addr %s384, 8
      %s388 = sadd.s32 %s386, %s387
      %s389 = smul.addr %s388, 4
      %s390 = scalar_lea.vmem %s10, %s389
      %v391 = vld [vmem:[%s382] sm:$0x1]
      %v392 = vld [vmem:[%s382 + $0x4] sm:$0x1]
      %v393 = vld [vmem:[%s382 + $0x8] sm:$0x1]
      %v394 = vld [vmem:[%s382 + $0xc] sm:$0x1]
      %v395 = vld [vmem:[%s382 + $0x10] sm:$0x1]
      %v396 = vld [vmem:[%s382 + $0x14] sm:$0x1]
      %v397 = vld [vmem:[%s382 + $0x18] sm:$0x1]
      %v398 = vld [vmem:[%s382 + $0x1c] sm:$0x1]
      %v399 = vld [vmem:[%s382 + $0x1] sm:$0x1]
      %v400 = vld [vmem:[%s382 + $0x5] sm:$0x1]
      %v401 = vld [vmem:[%s382 + $0x9] sm:$0x1]
      %v402 = vld [vmem:[%s382 + $0xd] sm:$0x1]
      %v403 = vld [vmem:[%s382 + $0x11] sm:$0x1]
      %v404 = vld [vmem:[%s382 + $0x15] sm:$0x1]
      %v405 = vld [vmem:[%s382 + $0x19] sm:$0x1]
      %v406 = vld [vmem:[%s382 + $0x1d] sm:$0x1]
      %v407 = vld [vmem:[%s382 + $0x2] sm:$0x1]
      %v408 = vld [vmem:[%s382 + $0x6] sm:$0x1]
      %v409 = vld [vmem:[%s382 + $0xa] sm:$0x1]
      %v410 = vld [vmem:[%s382 + $0xe] sm:$0x1]
      %v411 = vld [vmem:[%s382 + $0x12] sm:$0x1]
      %v412 = vld [vmem:[%s382 + $0x16] sm:$0x1]
      %v413 = vld [vmem:[%s382 + $0x1a] sm:$0x1]
      %v414 = vld [vmem:[%s382 + $0x1e] sm:$0x1]
      %v415 = vld [vmem:[%s1] sm:$0xff]
      %v416 = vld [vmem:[%s4] sm:$0xff]
      %418 = vset.pattern.permute.xlu0 0
      %419 = vperm.xlu0 %418, %v416
      %v420 = vpop.permute.xlu0 %419
      %v430 = vrot.slane %v392, 7
      %vm431 = vcmask 1041409
      %v432 = vsel %vm431, %v430, %v391
      %v433 = vrot.slane %v393, 6
      %vm434 = vcmask 1042434
      %v435 = vsel %vm434, %v433, %v432
      %v436 = vrot.slane %v394, 5
      %vm437 = vcmask 1043459
      %v438 = vsel %vm437, %v436, %v435
      %v439 = vrot.slane %v395, 4
      %vm440 = vcmask 1044484
      %v441 = vsel %vm440, %v439, %v438
      %v442 = vrot.slane %v396, 3
      %vm443 = vcmask 1045509
      %v444 = vsel %vm443, %v442, %v441
      %v445 = vrot.slane %v397, 2
      %vm446 = vcmask 1046534
      %v447 = vsel %vm446, %v445, %v444
      %v448 = vrot.slane %v398, 1
      %vm449 = vcmask 1047559
      %v450 = vsel %vm449, %v448, %v447
      %vm452 = vcmask 64512
      %v454 = vsel %vm452, %v415, 0
      %456 = vmatprep.subr.mxu0 0.0
      %457 = vmatpush1.msra.mxu0 %v450
      %458 = vmatprep.subr.mxu0 0.0
      %459 = vmatpush1.msra.mxu0 0.0
      %460 = vmatprep.subr.mxu0 0.0
      %461 = vmatpush1.msra.mxu0 0.0
      %462 = vmatprep.subr.mxu0 0.0
      %463 = vmatpush1.msra.mxu0 0.0
      %464 = vmatprep.subr.mxu0 0.0
      %465 = vmatpush1.msra.mxu0 0.0
      %466 = vmatprep.subr.mxu0 0.0
      %467 = vmatpush1.msra.mxu0 0.0
      %468 = vmatprep.subr.mxu0 0.0
      %469 = vmatpush1.msra.mxu0 0.0
      %470 = vmatprep.subr.mxu0 0.0
      %471 = vmatpush1.msra.mxu0 0.0
      %472 = vmatprep.subr.mxu0 0.0
      %473 = vmatpush1.msra.mxu0 0.0
      %474 = vmatprep.subr.mxu0 0.0
      %475 = vmatpush1.msra.mxu0 0.0
      %476 = vmatprep.subr.mxu0 0.0
      %477 = vmatpush1.msra.mxu0 0.0
      %478 = vmatprep.subr.mxu0 0.0
      %479 = vmatpush1.msra.mxu0 0.0
      %480 = vmatprep.subr.mxu0 0.0
      %481 = vmatpush1.msra.mxu0 0.0
      %482 = vmatprep.subr.mxu0 0.0
      %483 = vmatpush1.msra.mxu0 0.0
      %484 = vmatprep.subr.mxu0 0.0
      %485 = vmatpush1.msra.mxu0 0.0
      %486 = vmatprep.subr.mxu0 0.0
      %487 = vmatpush1.msra.mxu0 0.0
      %488 = vmatprep.subr.mxu0 0.0
      %489 = vmatpush1.msra.mxu0 0.0
      %490 = vmatprep.subr.mxu0 0.0
      %491 = vmatpush1.msra.mxu0 0.0
      %492 = vmatprep.subr.mxu0 0.0
      %493 = vmatpush1.msra.mxu0 0.0
      %494 = vmatprep.subr.mxu0 0.0
      %495 = vmatpush1.msra.mxu0 0.0
      %496 = vmatprep.subr.mxu0 0.0
      %497 = vmatpush1.msra.mxu0 0.0
      %498 = vmatprep.subr.mxu0 0.0
      %499 = vmatpush1.msra.mxu0 0.0
      %500 = vmatprep.subr.mxu0 0.0
      %501 = vmatpush1.msra.mxu0 0.0
      %502 = vmatprep.subr.mxu0 0.0
      %503 = vmatpush1.msra.mxu0 0.0
      %504 = vmatprep.subr.mxu0 0.0
      %505 = vmatpush1.msra.mxu0 0.0
      %506 = vmatprep.subr.mxu0 0.0
      %507 = vmatpush1.msra.mxu0 0.0
      %508 = vmatprep.subr.mxu0 0.0
      %509 = vmatpush1.msra.mxu0 0.0
      %510 = vmatprep.subr.mxu0 0.0
      %511 = vmatpush1.msra.mxu0 0.0
      %512 = vmatprep.subr.mxu0 0.0
      %513 = vmatpush1.msra.mxu0 0.0
      %514 = vmatprep.subr.mxu0 0.0
      %515 = vmatpush1.msra.mxu0 0.0
      %516 = vmatprep.subr.mxu0 0.0
      %517 = vmatpush1.msra.mxu0 0.0
      %518 = vmatprep.subr.mxu0 0.0
      %519 = vmatpush1.msra.mxu0 0.0
      %520 = vmatprep.mubr.f32.mxu0 0.0
      %521 = vmatmul.mubr.f32.gmra.mrb[0].mxu0 %v454
      %v522 = vpop.f32.mrb[0].mxu0
      %v523 = vadd.f32 %v420, %v522
      %v524 = vpop.f32.mrb[0].mxu0
      %525 = vdwg.mxu0
      %526 = vset.pattern.permute.xlu0 1
      %527 = vperm.xlu0 %526, %v416
      %v528 = vpop.permute.xlu0 %527
      %v538 = vrot.slane %v400, 7
      %v539 = vsel %vm431, %v538, %v399
      %v540 = vrot.slane %v401, 6
      %v541 = vsel %vm434, %v540, %v539
      %v542 = vrot.slane %v402, 5
      %v543 = vsel %vm437, %v542, %v541
      %v544 = vrot.slane %v403, 4
      %v545 = vsel %vm440, %v544, %v543
      %v546 = vrot.slane %v404, 3
      %v547 = vsel %vm443, %v546, %v545
      %v548 = vrot.slane %v405, 2
      %v549 = vsel %vm446, %v548, %v547
      %v550 = vrot.slane %v406, 1
      %v551 = vsel %vm449, %v550, %v549
      %553 = vmatprep.subr.mxu0 0.0
      %554 = vmatpush1.msra.mxu0 %v551
      %555 = vmatprep.subr.mxu0 0.0
      %556 = vmatpush1.msra.mxu0 0.0
      %557 = vmatprep.subr.mxu0 0.0
      %558 = vmatpush1.msra.mxu0 0.0
      %559 = vmatprep.subr.mxu0 0.0
      %560 = vmatpush1.msra.mxu0 0.0
      %561 = vmatprep.subr.mxu0 0.0
      %562 = vmatpush1.msra.mxu0 0.0
      %563 = vmatprep.subr.mxu0 0.0
      %564 = vmatpush1.msra.mxu0 0.0
      %565 = vmatprep.subr.mxu0 0.0
      %566 = vmatpush1.msra.mxu0 0.0
      %567 = vmatprep.subr.mxu0 0.0
      %568 = vmatpush1.msra.mxu0 0.0
      %569 = vmatprep.subr.mxu0 0.0
      %570 = vmatpush1.msra.mxu0 0.0
      %571 = vmatprep.subr.mxu0 0.0
      %572 = vmatpush1.msra.mxu0 0.0
      %573 = vmatprep.subr.mxu0 0.0
      %574 = vmatpush1.msra.mxu0 0.0
      %575 = vmatprep.subr.mxu0 0.0
      %576 = vmatpush1.msra.mxu0 0.0
      %577 = vmatprep.subr.mxu0 0.0
      %578 = vmatpush1.msra.mxu0 0.0
      %579 = vmatprep.subr.mxu0 0.0
      %580 = vmatpush1.msra.mxu0 0.0
      %581 = vmatprep.subr.mxu0 0.0
      %582 = vmatpush1.msra.mxu0 0.0
      %583 = vmatprep.subr.mxu0 0.0
      %584 = vmatpush1.msra.mxu0 0.0
      %585 = vmatprep.subr.mxu0 0.0
      %586 = vmatpush1.msra.mxu0 0.0
      %587 = vmatprep.subr.mxu0 0.0
      %588 = vmatpush1.msra.mxu0 0.0
      %589 = vmatprep.subr.mxu0 0.0
      %590 = vmatpush1.msra.mxu0 0.0
      %591 = vmatprep.subr.mxu0 0.0
      %592 = vmatpush1.msra.mxu0 0.0
      %593 = vmatprep.subr.mxu0 0.0
      %594 = vmatpush1.msra.mxu0 0.0
      %595 = vmatprep.subr.mxu0 0.0
      %596 = vmatpush1.msra.mxu0 0.0
      %597 = vmatprep.subr.mxu0 0.0
      %598 = vmatpush1.msra.mxu0 0.0
      %599 = vmatprep.subr.mxu0 0.0
      %600 = vmatpush1.msra.mxu0 0.0
      %601 = vmatprep.subr.mxu0 0.0
      %602 = vmatpush1.msra.mxu0 0.0
      %603 = vmatprep.subr.mxu0 0.0
      %604 = vmatpush1.msra.mxu0 0.0
      %605 = vmatprep.subr.mxu0 0.0
      %606 = vmatpush1.msra.mxu0 0.0
      %607 = vmatprep.subr.mxu0 0.0
      %608 = vmatpush1.msra.mxu0 0.0
      %609 = vmatprep.subr.mxu0 0.0
      %610 = vmatpush1.msra.mxu0 0.0
      %611 = vmatprep.subr.mxu0 0.0
      %612 = vmatpush1.msra.mxu0 0.0
      %613 = vmatprep.subr.mxu0 0.0
      %614 = vmatpush1.msra.mxu0 0.0
      %615 = vmatprep.subr.mxu0 0.0
      %616 = vmatpush1.msra.mxu0 0.0
      %617 = vmatprep.mubr.f32.mxu0 0.0
      %618 = vmatmul.mubr.f32.gmra.mrb[0].mxu0 %v454
      %v619 = vpop.f32.mrb[0].mxu0
      %v620 = vadd.f32 %v528, %v619
      %v621 = vpop.f32.mrb[0].mxu0
      %622 = vdwg.mxu0
      %623 = vset.pattern.permute.xlu0 2
      %624 = vperm.xlu0 %623, %v416
      %v625 = vpop.permute.xlu0 %624
      %v635 = vrot.slane %v408, 7
      %v636 = vsel %vm431, %v635, %v407
      %v637 = vrot.slane %v409, 6
      %v638 = vsel %vm434, %v637, %v636
      %v639 = vrot.slane %v410, 5
      %v640 = vsel %vm437, %v639, %v638
      %v641 = vrot.slane %v411, 4
      %v642 = vsel %vm440, %v641, %v640
      %v643 = vrot.slane %v412, 3
      %v644 = vsel %vm443, %v643, %v642
      %v645 = vrot.slane %v413, 2
      %v646 = vsel %vm446, %v645, %v644
      %v647 = vrot.slane %v414, 1
      %v648 = vsel %vm449, %v647, %v646
      %650 = vmatprep.subr.mxu0 0.0
      %651 = vmatpush1.msra.mxu0 %v648
      %652 = vmatprep.subr.mxu0 0.0
      %653 = vmatpush1.msra.mxu0 0.0
      %654 = vmatprep.subr.mxu0 0.0
      %655 = vmatpush1.msra.mxu0 0.0
      %656 = vmatprep.subr.mxu0 0.0
      %657 = vmatpush1.msra.mxu0 0.0
      %658 = vmatprep.subr.mxu0 0.0
      %659 = vmatpush1.msra.mxu0 0.0
      %660 = vmatprep.subr.mxu0 0.0
      %661 = vmatpush1.msra.mxu0 0.0
      %662 = vmatprep.subr.mxu0 0.0
      %663 = vmatpush1.msra.mxu0 0.0
      %664 = vmatprep.subr.mxu0 0.0
      %665 = vmatpush1.msra.mxu0 0.0
      %666 = vmatprep.subr.mxu0 0.0
      %667 = vmatpush1.msra.mxu0 0.0
      %668 = vmatprep.subr.mxu0 0.0
      %669 = vmatpush1.msra.mxu0 0.0
      %670 = vmatprep.subr.mxu0 0.0
      %671 = vmatpush1.msra.mxu0 0.0
      %672 = vmatprep.subr.mxu0 0.0
      %673 = vmatpush1.msra.mxu0 0.0
      %674 = vmatprep.subr.mxu0 0.0
      %675 = vmatpush1.msra.mxu0 0.0
      %676 = vmatprep.subr.mxu0 0.0
      %677 = vmatpush1.msra.mxu0 0.0
      %678 = vmatprep.subr.mxu0 0.0
      %679 = vmatpush1.msra.mxu0 0.0
      %680 = vmatprep.subr.mxu0 0.0
      %681 = vmatpush1.msra.mxu0 0.0
      %682 = vmatprep.subr.mxu0 0.0
      %683 = vmatpush1.msra.mxu0 0.0
      %684 = vmatprep.subr.mxu0 0.0
      %685 = vmatpush1.msra.mxu0 0.0
      %686 = vmatprep.subr.mxu0 0.0
      %687 = vmatpush1.msra.mxu0 0.0
      %688 = vmatprep.subr.mxu0 0.0
      %689 = vmatpush1.msra.mxu0 0.0
      %690 = vmatprep.subr.mxu0 0.0
      %691 = vmatpush1.msra.mxu0 0.0
      %692 = vmatprep.subr.mxu0 0.0
      %693 = vmatpush1.msra.mxu0 0.0
      %694 = vmatprep.subr.mxu0 0.0
      %695 = vmatpush1.msra.mxu0 0.0
      %696 = vmatprep.subr.mxu0 0.0
      %697 = vmatpush1.msra.mxu0 0.0
      %698 = vmatprep.subr.mxu0 0.0
      %699 = vmatpush1.msra.mxu0 0.0
      %700 = vmatprep.subr.mxu0 0.0
      %701 = vmatpush1.msra.mxu0 0.0
      %702 = vmatprep.subr.mxu0 0.0
      %703 = vmatpush1.msra.mxu0 0.0
      %704 = vmatprep.subr.mxu0 0.0
      %705 = vmatpush1.msra.mxu0 0.0
      %706 = vmatprep.subr.mxu0 0.0
      %707 = vmatpush1.msra.mxu0 0.0
      %708 = vmatprep.subr.mxu0 0.0
      %709 = vmatpush1.msra.mxu0 0.0
      %710 = vmatprep.subr.mxu0 0.0
      %711 = vmatpush1.msra.mxu0 0.0
      %712 = vmatprep.subr.mxu0 0.0
      %713 = vmatpush1.msra.mxu0 0.0
      %714 = vmatprep.mubr.f32.mxu0 0.0
      %715 = vmatmul.mubr.f32.gmra.mrb[0].mxu0 %v454
      %v716 = vpop.f32.mrb[0].mxu0
      %v717 = vadd.f32 %v625, %v716
      %v718 = vpop.f32.mrb[0].mxu0
      %719 = vdwg.mxu0
      %v720 = vmul.f32 %v523, %v523
      %v721 = vmul.f32 %v620, %v620
      %v722 = vadd.f32 %v720, %v721
      %v723 = vmul.f32 %v717, %v717
      %v724 = vadd.f32 %v722, %v723
      %v725 = vrsqrt.pop %v724
      %v726 = vmul.f32 %v724, %v725
      %vm727 = vcmp.eq.f32.partialorder %v724, inf
      %v728 = vsel %vm727, %v724, %v726
      %vm729 = vcmp.eq.f32.partialorder %v724, 0.0
      %v730 = vand.u32 %v724, 2147483648
      %v731 = vsel %vm729, %v730, %v728
      %v732 = vadd.f32 %v731, 1e-06
      %v733 = vld [vmem:[%s6] sm:$0xff]
      %735 = vset.pattern.permute.xlu0 0
      %736 = vperm.xlu0 %735, %v733
      %v737 = vpop.permute.xlu0 %736
      %v739 = vmul.f32 %v737, %v732
      %v740 = vld [vmem:[%s7] sm:$0xff]
      %742 = vset.pattern.permute.xlu0 0
      %743 = vperm.xlu0 %742, %v740
      %v744 = vpop.permute.xlu0 %743
      %v746 = vadd.f32 %v739, %v744
      %v747 = vrcp.pop %v732
      %v748 = vmul.f32 %v746, %v747
      %v749 = vmul.f32 %v523, %v748
      %v750 = vmul.f32 %v620, %v748
      %v751 = vmul.f32 %v717, %v748
      %v752 = vld [vmem:[%s2] sm:$0xff]
      %v754 = vsel %vm452, %v752, 0
      %756 = vmatprep.subr.mxu0 0.0
      %757 = vmatpush1.msra.mxu0 %v749
      %758 = vmatprep.subr.mxu0 0.0
      %759 = vmatpush1.msra.mxu0 0.0
      %760 = vmatprep.subr.mxu0 0.0
      %761 = vmatpush1.msra.mxu0 0.0
      %762 = vmatprep.subr.mxu0 0.0
      %763 = vmatpush1.msra.mxu0 0.0
      %764 = vmatprep.subr.mxu0 0.0
      %765 = vmatpush1.msra.mxu0 0.0
      %766 = vmatprep.subr.mxu0 0.0
      %767 = vmatpush1.msra.mxu0 0.0
      %768 = vmatprep.subr.mxu0 0.0
      %769 = vmatpush1.msra.mxu0 0.0
      %770 = vmatprep.subr.mxu0 0.0
      %771 = vmatpush1.msra.mxu0 0.0
      %772 = vmatprep.subr.mxu0 0.0
      %773 = vmatpush1.msra.mxu0 0.0
      %774 = vmatprep.subr.mxu0 0.0
      %775 = vmatpush1.msra.mxu0 0.0
      %776 = vmatprep.subr.mxu0 0.0
      %777 = vmatpush1.msra.mxu0 0.0
      %778 = vmatprep.subr.mxu0 0.0
      %779 = vmatpush1.msra.mxu0 0.0
      %780 = vmatprep.subr.mxu0 0.0
      %781 = vmatpush1.msra.mxu0 0.0
      %782 = vmatprep.subr.mxu0 0.0
      %783 = vmatpush1.msra.mxu0 0.0
      %784 = vmatprep.subr.mxu0 0.0
      %785 = vmatpush1.msra.mxu0 0.0
      %786 = vmatprep.subr.mxu0 0.0
      %787 = vmatpush1.msra.mxu0 0.0
      %788 = vmatprep.subr.mxu0 0.0
      %789 = vmatpush1.msra.mxu0 0.0
      %790 = vmatprep.subr.mxu0 0.0
      %791 = vmatpush1.msra.mxu0 0.0
      %792 = vmatprep.subr.mxu0 0.0
      %793 = vmatpush1.msra.mxu0 0.0
      %794 = vmatprep.subr.mxu0 0.0
      %795 = vmatpush1.msra.mxu0 0.0
      %796 = vmatprep.subr.mxu0 0.0
      %797 = vmatpush1.msra.mxu0 0.0
      %798 = vmatprep.subr.mxu0 0.0
      %799 = vmatpush1.msra.mxu0 0.0
      %800 = vmatprep.subr.mxu0 0.0
      %801 = vmatpush1.msra.mxu0 0.0
      %802 = vmatprep.subr.mxu0 0.0
      %803 = vmatpush1.msra.mxu0 0.0
      %804 = vmatprep.subr.mxu0 0.0
      %805 = vmatpush1.msra.mxu0 0.0
      %806 = vmatprep.subr.mxu0 0.0
      %807 = vmatpush1.msra.mxu0 0.0
      %808 = vmatprep.subr.mxu0 0.0
      %809 = vmatpush1.msra.mxu0 0.0
      %810 = vmatprep.subr.mxu0 0.0
      %811 = vmatpush1.msra.mxu0 0.0
      %812 = vmatprep.subr.mxu0 0.0
      %813 = vmatpush1.msra.mxu0 0.0
      %814 = vmatprep.subr.mxu0 0.0
      %815 = vmatpush1.msra.mxu0 0.0
      %816 = vmatprep.subr.mxu0 0.0
      %817 = vmatpush1.msra.mxu0 0.0
      %818 = vmatprep.subr.mxu0 0.0
      %819 = vmatpush1.msra.mxu0 0.0
      %820 = vmatprep.mubr.f32.mxu0 0.0
      %821 = vmatmul.mubr.f32.gmra.mrb[0].mxu0 %v754
      %v822 = vpop.f32.mrb[0].mxu0
      %v823 = vadd.f32 0.0, %v822
      %v824 = vpop.f32.mrb[0].mxu0
      %825 = vdwg.mxu0
      %826 = vmatprep.subr.mxu0 0.0
      %827 = vmatpush1.msra.mxu0 %v750
      %828 = vmatprep.subr.mxu0 0.0
      %829 = vmatpush1.msra.mxu0 0.0
      %830 = vmatprep.subr.mxu0 0.0
      %831 = vmatpush1.msra.mxu0 0.0
      %832 = vmatprep.subr.mxu0 0.0
      %833 = vmatpush1.msra.mxu0 0.0
      %834 = vmatprep.subr.mxu0 0.0
      %835 = vmatpush1.msra.mxu0 0.0
      %836 = vmatprep.subr.mxu0 0.0
      %837 = vmatpush1.msra.mxu0 0.0
      %838 = vmatprep.subr.mxu0 0.0
      %839 = vmatpush1.msra.mxu0 0.0
      %840 = vmatprep.subr.mxu0 0.0
      %841 = vmatpush1.msra.mxu0 0.0
      %842 = vmatprep.subr.mxu0 0.0
      %843 = vmatpush1.msra.mxu0 0.0
      %844 = vmatprep.subr.mxu0 0.0
      %845 = vmatpush1.msra.mxu0 0.0
      %846 = vmatprep.subr.mxu0 0.0
      %847 = vmatpush1.msra.mxu0 0.0
      %848 = vmatprep.subr.mxu0 0.0
      %849 = vmatpush1.msra.mxu0 0.0
      %850 = vmatprep.subr.mxu0 0.0
      %851 = vmatpush1.msra.mxu0 0.0
      %852 = vmatprep.subr.mxu0 0.0
      %853 = vmatpush1.msra.mxu0 0.0
      %854 = vmatprep.subr.mxu0 0.0
      %855 = vmatpush1.msra.mxu0 0.0
      %856 = vmatprep.subr.mxu0 0.0
      %857 = vmatpush1.msra.mxu0 0.0
      %858 = vmatprep.subr.mxu0 0.0
      %859 = vmatpush1.msra.mxu0 0.0
      %860 = vmatprep.subr.mxu0 0.0
      %861 = vmatpush1.msra.mxu0 0.0
      %862 = vmatprep.subr.mxu0 0.0
      %863 = vmatpush1.msra.mxu0 0.0
      %864 = vmatprep.subr.mxu0 0.0
      %865 = vmatpush1.msra.mxu0 0.0
      %866 = vmatprep.subr.mxu0 0.0
      %867 = vmatpush1.msra.mxu0 0.0
      %868 = vmatprep.subr.mxu0 0.0
      %869 = vmatpush1.msra.mxu0 0.0
      %870 = vmatprep.subr.mxu0 0.0
      %871 = vmatpush1.msra.mxu0 0.0
      %872 = vmatprep.subr.mxu0 0.0
      %873 = vmatpush1.msra.mxu0 0.0
      %874 = vmatprep.subr.mxu0 0.0
      %875 = vmatpush1.msra.mxu0 0.0
      %876 = vmatprep.subr.mxu0 0.0
      %877 = vmatpush1.msra.mxu0 0.0
      %878 = vmatprep.subr.mxu0 0.0
      %879 = vmatpush1.msra.mxu0 0.0
      %880 = vmatprep.subr.mxu0 0.0
      %881 = vmatpush1.msra.mxu0 0.0
      %882 = vmatprep.subr.mxu0 0.0
      %883 = vmatpush1.msra.mxu0 0.0
      %884 = vmatprep.subr.mxu0 0.0
      %885 = vmatpush1.msra.mxu0 0.0
      %886 = vmatprep.subr.mxu0 0.0
      %887 = vmatpush1.msra.mxu0 0.0
      %888 = vmatprep.subr.mxu0 0.0
      %889 = vmatpush1.msra.mxu0 0.0
      %890 = vmatprep.mubr.f32.mxu0 0.0
      %891 = vmatmul.mubr.f32.gmra.mrb[0].mxu0 %v754
      %v892 = vpop.f32.mrb[0].mxu0
      %v893 = vadd.f32 0.0, %v892
      %v894 = vpop.f32.mrb[0].mxu0
      %895 = vdwg.mxu0
      %896 = vmatprep.subr.mxu0 0.0
      %897 = vmatpush1.msra.mxu0 %v751
      %898 = vmatprep.subr.mxu0 0.0
      %899 = vmatpush1.msra.mxu0 0.0
      %900 = vmatprep.subr.mxu0 0.0
      %901 = vmatpush1.msra.mxu0 0.0
      %902 = vmatprep.subr.mxu0 0.0
      %903 = vmatpush1.msra.mxu0 0.0
      %904 = vmatprep.subr.mxu0 0.0
      %905 = vmatpush1.msra.mxu0 0.0
      %906 = vmatprep.subr.mxu0 0.0
      %907 = vmatpush1.msra.mxu0 0.0
      %908 = vmatprep.subr.mxu0 0.0
      %909 = vmatpush1.msra.mxu0 0.0
      %910 = vmatprep.subr.mxu0 0.0
      %911 = vmatpush1.msra.mxu0 0.0
      %912 = vmatprep.subr.mxu0 0.0
      %913 = vmatpush1.msra.mxu0 0.0
      %914 = vmatprep.subr.mxu0 0.0
      %915 = vmatpush1.msra.mxu0 0.0
      %916 = vmatprep.subr.mxu0 0.0
      %917 = vmatpush1.msra.mxu0 0.0
      %918 = vmatprep.subr.mxu0 0.0
      %919 = vmatpush1.msra.mxu0 0.0
      %920 = vmatprep.subr.mxu0 0.0
      %921 = vmatpush1.msra.mxu0 0.0
      %922 = vmatprep.subr.mxu0 0.0
      %923 = vmatpush1.msra.mxu0 0.0
      %924 = vmatprep.subr.mxu0 0.0
      %925 = vmatpush1.msra.mxu0 0.0
      %926 = vmatprep.subr.mxu0 0.0
      %927 = vmatpush1.msra.mxu0 0.0
      %928 = vmatprep.subr.mxu0 0.0
      %929 = vmatpush1.msra.mxu0 0.0
      %930 = vmatprep.subr.mxu0 0.0
      %931 = vmatpush1.msra.mxu0 0.0
      %932 = vmatprep.subr.mxu0 0.0
      %933 = vmatpush1.msra.mxu0 0.0
      %934 = vmatprep.subr.mxu0 0.0
      %935 = vmatpush1.msra.mxu0 0.0
      %936 = vmatprep.subr.mxu0 0.0
      %937 = vmatpush1.msra.mxu0 0.0
      %938 = vmatprep.subr.mxu0 0.0
      %939 = vmatpush1.msra.mxu0 0.0
      %940 = vmatprep.subr.mxu0 0.0
      %941 = vmatpush1.msra.mxu0 0.0
      %942 = vmatprep.subr.mxu0 0.0
      %943 = vmatpush1.msra.mxu0 0.0
      %944 = vmatprep.subr.mxu0 0.0
      %945 = vmatpush1.msra.mxu0 0.0
      %946 = vmatprep.subr.mxu0 0.0
      %947 = vmatpush1.msra.mxu0 0.0
      %948 = vmatprep.subr.mxu0 0.0
      %949 = vmatpush1.msra.mxu0 0.0
      %950 = vmatprep.subr.mxu0 0.0
      %951 = vmatpush1.msra.mxu0 0.0
      %952 = vmatprep.subr.mxu0 0.0
      %953 = vmatpush1.msra.mxu0 0.0
      %954 = vmatprep.subr.mxu0 0.0
      %955 = vmatpush1.msra.mxu0 0.0
      %956 = vmatprep.subr.mxu0 0.0
      %957 = vmatpush1.msra.mxu0 0.0
      %958 = vmatprep.subr.mxu0 0.0
      %959 = vmatpush1.msra.mxu0 0.0
      %960 = vmatprep.mubr.f32.mxu0 0.0
      %961 = vmatmul.mubr.f32.gmra.mrb[0].mxu0 %v754
      %v962 = vpop.f32.mrb[0].mxu0
      %v963 = vadd.f32 0.0, %v962
      %v964 = vpop.f32.mrb[0].mxu0
      %965 = vdwg.mxu0
      %v966 = vmul.f32 %v749, %v823
      %v967 = vmul.f32 %v750, %v893
      %v968 = vadd.f32 %v966, %v967
      %v969 = vmul.f32 %v751, %v963
      %v970 = vadd.f32 %v968, %v969
      %v971 = vmul.f32 %v823, %v823
      %v972 = vmul.f32 %v893, %v893
      %v973 = vadd.f32 %v971, %v972
      %v974 = vmul.f32 %v963, %v963
      %v975 = vadd.f32 %v973, %v974
      %vm976 = vcmp.ge.f32.partialorder %v970, 0.0
      %v977 = vadd.f32 %v975, 1e-06
      %v978 = vrcp.pop %v977
      %v979 = vmul.f32 %v970, %v978
      %v980 = vmul.f32 %v749, 0.0
      %v981 = vmul.f32 %v979, %v823
      %v982 = vsub.f32 %v749, %v981
      %v983 = vsel %vm976, %v749, %v982
      %v984 = vadd.f32 %v980, %v983
      %v985 = vmul.f32 %v750, 0.0
      %v986 = vmul.f32 %v979, %v893
      %v987 = vsub.f32 %v750, %v986
      %v988 = vsel %vm976, %v750, %v987
      %v989 = vadd.f32 %v985, %v988
      %v990 = vmul.f32 %v751, 0.0
      %v991 = vmul.f32 %v979, %v963
      %v992 = vsub.f32 %v751, %v991
      %v993 = vsel %vm976, %v751, %v992
      %v994 = vadd.f32 %v990, %v993
      %v995 = vld [vmem:[%s3] sm:$0xff]
      %v996 = vld [vmem:[%s5] sm:$0xff]
      %998 = vset.pattern.permute.xlu0 0
      %999 = vperm.xlu0 %998, %v996
      %v1000 = vpop.permute.xlu0 %999
      %v1003 = vsel %vm452, %v995, 0
      %1005 = vmatprep.subr.mxu0 0.0
      %1006 = vmatpush1.msra.mxu0 %v984
      %1007 = vmatprep.subr.mxu0 0.0
      %1008 = vmatpush1.msra.mxu0 0.0
      %1009 = vmatprep.subr.mxu0 0.0
      %1010 = vmatpush1.msra.mxu0 0.0
      %1011 = vmatprep.subr.mxu0 0.0
      %1012 = vmatpush1.msra.mxu0 0.0
      %1013 = vmatprep.subr.mxu0 0.0
      %1014 = vmatpush1.msra.mxu0 0.0
      %1015 = vmatprep.subr.mxu0 0.0
      %1016 = vmatpush1.msra.mxu0 0.0
      %1017 = vmatprep.subr.mxu0 0.0
      %1018 = vmatpush1.msra.mxu0 0.0
      %1019 = vmatprep.subr.mxu0 0.0
      %1020 = vmatpush1.msra.mxu0 0.0
      %1021 = vmatprep.subr.mxu0 0.0
      %1022 = vmatpush1.msra.mxu0 0.0
      %1023 = vmatprep.subr.mxu0 0.0
      %1024 = vmatpush1.msra.mxu0 0.0
      %1025 = vmatprep.subr.mxu0 0.0
      %1026 = vmatpush1.msra.mxu0 0.0
      %1027 = vmatprep.subr.mxu0 0.0
      %1028 = vmatpush1.msra.mxu0 0.0
      %1029 = vmatprep.subr.mxu0 0.0
      %1030 = vmatpush1.msra.mxu0 0.0
      %1031 = vmatprep.subr.mxu0 0.0
      %1032 = vmatpush1.msra.mxu0 0.0
      %1033 = vmatprep.subr.mxu0 0.0
      %1034 = vmatpush1.msra.mxu0 0.0
      %1035 = vmatprep.subr.mxu0 0.0
      %1036 = vmatpush1.msra.mxu0 0.0
      %1037 = vmatprep.subr.mxu0 0.0
      %1038 = vmatpush1.msra.mxu0 0.0
      %1039 = vmatprep.subr.mxu0 0.0
      %1040 = vmatpush1.msra.mxu0 0.0
      %1041 = vmatprep.subr.mxu0 0.0
      %1042 = vmatpush1.msra.mxu0 0.0
      %1043 = vmatprep.subr.mxu0 0.0
      %1044 = vmatpush1.msra.mxu0 0.0
      %1045 = vmatprep.subr.mxu0 0.0
      %1046 = vmatpush1.msra.mxu0 0.0
      %1047 = vmatprep.subr.mxu0 0.0
      %1048 = vmatpush1.msra.mxu0 0.0
      %1049 = vmatprep.subr.mxu0 0.0
      %1050 = vmatpush1.msra.mxu0 0.0
      %1051 = vmatprep.subr.mxu0 0.0
      %1052 = vmatpush1.msra.mxu0 0.0
      %1053 = vmatprep.subr.mxu0 0.0
      %1054 = vmatpush1.msra.mxu0 0.0
      %1055 = vmatprep.subr.mxu0 0.0
      %1056 = vmatpush1.msra.mxu0 0.0
      %1057 = vmatprep.subr.mxu0 0.0
      %1058 = vmatpush1.msra.mxu0 0.0
      %1059 = vmatprep.subr.mxu0 0.0
      %1060 = vmatpush1.msra.mxu0 0.0
      %1061 = vmatprep.subr.mxu0 0.0
      %1062 = vmatpush1.msra.mxu0 0.0
      %1063 = vmatprep.subr.mxu0 0.0
      %1064 = vmatpush1.msra.mxu0 0.0
      %1065 = vmatprep.subr.mxu0 0.0
      %1066 = vmatpush1.msra.mxu0 0.0
      %1067 = vmatprep.subr.mxu0 0.0
      %1068 = vmatpush1.msra.mxu0 0.0
      %1069 = vmatprep.mubr.f32.mxu0 0.0
      %1070 = vmatmul.mubr.f32.gmra.mrb[0].mxu0 %v1003
      %v1071 = vpop.f32.mrb[0].mxu0
      %v1072 = vadd.f32 %v1000, %v1071
      %v1073 = vpop.f32.mrb[0].mxu0
      %1074 = vdwg.mxu0
      %1075 = vset.pattern.permute.xlu0 1
      %1076 = vperm.xlu0 %1075, %v996
      %v1077 = vpop.permute.xlu0 %1076
      %1079 = vmatprep.subr.mxu0 0.0
      %1080 = vmatpush1.msra.mxu0 %v989
      %1081 = vmatprep.subr.mxu0 0.0
      %1082 = vmatpush1.msra.mxu0 0.0
      %1083 = vmatprep.subr.mxu0 0.0
      %1084 = vmatpush1.msra.mxu0 0.0
      %1085 = vmatprep.subr.mxu0 0.0
      %1086 = vmatpush1.msra.mxu0 0.0
      %1087 = vmatprep.subr.mxu0 0.0
      %1088 = vmatpush1.msra.mxu0 0.0
      %1089 = vmatprep.subr.mxu0 0.0
      %1090 = vmatpush1.msra.mxu0 0.0
      %1091 = vmatprep.subr.mxu0 0.0
      %1092 = vmatpush1.msra.mxu0 0.0
      %1093 = vmatprep.subr.mxu0 0.0
      %1094 = vmatpush1.msra.mxu0 0.0
      %1095 = vmatprep.subr.mxu0 0.0
      %1096 = vmatpush1.msra.mxu0 0.0
      %1097 = vmatprep.subr.mxu0 0.0
      %1098 = vmatpush1.msra.mxu0 0.0
      %1099 = vmatprep.subr.mxu0 0.0
      %1100 = vmatpush1.msra.mxu0 0.0
      %1101 = vmatprep.subr.mxu0 0.0
      %1102 = vmatpush1.msra.mxu0 0.0
      %1103 = vmatprep.subr.mxu0 0.0
      %1104 = vmatpush1.msra.mxu0 0.0
      %1105 = vmatprep.subr.mxu0 0.0
      %1106 = vmatpush1.msra.mxu0 0.0
      %1107 = vmatprep.subr.mxu0 0.0
      %1108 = vmatpush1.msra.mxu0 0.0
      %1109 = vmatprep.subr.mxu0 0.0
      %1110 = vmatpush1.msra.mxu0 0.0
      %1111 = vmatprep.subr.mxu0 0.0
      %1112 = vmatpush1.msra.mxu0 0.0
      %1113 = vmatprep.subr.mxu0 0.0
      %1114 = vmatpush1.msra.mxu0 0.0
      %1115 = vmatprep.subr.mxu0 0.0
      %1116 = vmatpush1.msra.mxu0 0.0
      %1117 = vmatprep.subr.mxu0 0.0
      %1118 = vmatpush1.msra.mxu0 0.0
      %1119 = vmatprep.subr.mxu0 0.0
      %1120 = vmatpush1.msra.mxu0 0.0
      %1121 = vmatprep.subr.mxu0 0.0
      %1122 = vmatpush1.msra.mxu0 0.0
      %1123 = vmatprep.subr.mxu0 0.0
      %1124 = vmatpush1.msra.mxu0 0.0
      %1125 = vmatprep.subr.mxu0 0.0
      %1126 = vmatpush1.msra.mxu0 0.0
      %1127 = vmatprep.subr.mxu0 0.0
      %1128 = vmatpush1.msra.mxu0 0.0
      %1129 = vmatprep.subr.mxu0 0.0
      %1130 = vmatpush1.msra.mxu0 0.0
      %1131 = vmatprep.subr.mxu0 0.0
      %1132 = vmatpush1.msra.mxu0 0.0
      %1133 = vmatprep.subr.mxu0 0.0
      %1134 = vmatpush1.msra.mxu0 0.0
      %1135 = vmatprep.subr.mxu0 0.0
      %1136 = vmatpush1.msra.mxu0 0.0
      %1137 = vmatprep.subr.mxu0 0.0
      %1138 = vmatpush1.msra.mxu0 0.0
      %1139 = vmatprep.subr.mxu0 0.0
      %1140 = vmatpush1.msra.mxu0 0.0
      %1141 = vmatprep.subr.mxu0 0.0
      %1142 = vmatpush1.msra.mxu0 0.0
      %1143 = vmatprep.mubr.f32.mxu0 0.0
      %1144 = vmatmul.mubr.f32.gmra.mrb[0].mxu0 %v1003
      %v1145 = vpop.f32.mrb[0].mxu0
      %v1146 = vadd.f32 %v1077, %v1145
      %v1147 = vpop.f32.mrb[0].mxu0
      %1148 = vdwg.mxu0
      %1149 = vset.pattern.permute.xlu0 2
      %1150 = vperm.xlu0 %1149, %v996
      %v1151 = vpop.permute.xlu0 %1150
      %1153 = vmatprep.subr.mxu0 0.0
      %1154 = vmatpush1.msra.mxu0 %v994
      %1155 = vmatprep.subr.mxu0 0.0
      %1156 = vmatpush1.msra.mxu0 0.0
      %1157 = vmatprep.subr.mxu0 0.0
      %1158 = vmatpush1.msra.mxu0 0.0
      %1159 = vmatprep.subr.mxu0 0.0
      %1160 = vmatpush1.msra.mxu0 0.0
      %1161 = vmatprep.subr.mxu0 0.0
      %1162 = vmatpush1.msra.mxu0 0.0
      %1163 = vmatprep.subr.mxu0 0.0
      %1164 = vmatpush1.msra.mxu0 0.0
      %1165 = vmatprep.subr.mxu0 0.0
      %1166 = vmatpush1.msra.mxu0 0.0
      %1167 = vmatprep.subr.mxu0 0.0
      %1168 = vmatpush1.msra.mxu0 0.0
      %1169 = vmatprep.subr.mxu0 0.0
      %1170 = vmatpush1.msra.mxu0 0.0
      %1171 = vmatprep.subr.mxu0 0.0
      %1172 = vmatpush1.msra.mxu0 0.0
      %1173 = vmatprep.subr.mxu0 0.0
      %1174 = vmatpush1.msra.mxu0 0.0
      %1175 = vmatprep.subr.mxu0 0.0
      %1176 = vmatpush1.msra.mxu0 0.0
      %1177 = vmatprep.subr.mxu0 0.0
      %1178 = vmatpush1.msra.mxu0 0.0
      %1179 = vmatprep.subr.mxu0 0.0
      %1180 = vmatpush1.msra.mxu0 0.0
      %1181 = vmatprep.subr.mxu0 0.0
      %1182 = vmatpush1.msra.mxu0 0.0
      %1183 = vmatprep.subr.mxu0 0.0
      %1184 = vmatpush1.msra.mxu0 0.0
      %1185 = vmatprep.subr.mxu0 0.0
      %1186 = vmatpush1.msra.mxu0 0.0
      %1187 = vmatprep.subr.mxu0 0.0
      %1188 = vmatpush1.msra.mxu0 0.0
      %1189 = vmatprep.subr.mxu0 0.0
      %1190 = vmatpush1.msra.mxu0 0.0
      %1191 = vmatprep.subr.mxu0 0.0
      %1192 = vmatpush1.msra.mxu0 0.0
      %1193 = vmatprep.subr.mxu0 0.0
      %1194 = vmatpush1.msra.mxu0 0.0
      %1195 = vmatprep.subr.mxu0 0.0
      %1196 = vmatpush1.msra.mxu0 0.0
      %1197 = vmatprep.subr.mxu0 0.0
      %1198 = vmatpush1.msra.mxu0 0.0
      %1199 = vmatprep.subr.mxu0 0.0
      %1200 = vmatpush1.msra.mxu0 0.0
      %1201 = vmatprep.subr.mxu0 0.0
      %1202 = vmatpush1.msra.mxu0 0.0
      %1203 = vmatprep.subr.mxu0 0.0
      %1204 = vmatpush1.msra.mxu0 0.0
      %1205 = vmatprep.subr.mxu0 0.0
      %1206 = vmatpush1.msra.mxu0 0.0
      %1207 = vmatprep.subr.mxu0 0.0
      %1208 = vmatpush1.msra.mxu0 0.0
      %1209 = vmatprep.subr.mxu0 0.0
      %1210 = vmatpush1.msra.mxu0 0.0
      %1211 = vmatprep.subr.mxu0 0.0
      %1212 = vmatpush1.msra.mxu0 0.0
      %1213 = vmatprep.subr.mxu0 0.0
      %1214 = vmatpush1.msra.mxu0 0.0
      %1215 = vmatprep.subr.mxu0 0.0
      %1216 = vmatpush1.msra.mxu0 0.0
      %1217 = vmatprep.mubr.f32.mxu0 0.0
      %1218 = vmatmul.mubr.f32.gmra.mrb[0].mxu0 %v1003
      %v1219 = vpop.f32.mrb[0].mxu0
      %v1220 = vadd.f32 %v1151, %v1219
      %v1221 = vpop.f32.mrb[0].mxu0
      %1222 = vdwg.mxu0
      %v1223 = vmul.f32 %v1072, %v1072
      %v1224 = vmul.f32 %v1146, %v1146
      %v1225 = vadd.f32 %v1223, %v1224
      %v1226 = vmul.f32 %v1220, %v1220
      %v1227 = vadd.f32 %v1225, %v1226
      %v1228 = vrsqrt.pop %v1227
      %v1229 = vmul.f32 %v1227, %v1228
      %vm1230 = vcmp.eq.f32.partialorder %v1227, inf
      %v1231 = vsel %vm1230, %v1227, %v1229
      %vm1232 = vcmp.eq.f32.partialorder %v1227, 0.0
      %v1233 = vand.u32 %v1227, 2147483648
      %v1234 = vsel %vm1232, %v1233, %v1231
      %v1235 = vadd.f32 %v1234, 1e-06
      %vm1236 = vcmask 130048
      %v1237 = vsel %vm1236, %v1235, 0.0
      %v1238 = vrot.slane %v1237, 4
      %v1239 = vadd.f32 %v1237, %v1238
      %v1240 = vrot.slane %v1239, 2
      %v1241 = vadd.f32 %v1239, %v1240
      %v1242 = vrot.slane %v1241, 1
      %v1243 = vadd.f32 %v1241, %v1242
      %v1244 = vrcp.pop 8.0
      %v1245 = vmul.f32 %v1243, %v1244
      %v1246 = vsub.f32 %v1235, %v1245
      %v1247 = vmul.f32 %v1246, %v1246
      %v1248 = vsel %vm1236, %v1247, 0.0
      %v1249 = vrot.slane %v1248, 4
      %v1250 = vadd.f32 %v1248, %v1249
      %v1251 = vrot.slane %v1250, 2
      %v1252 = vadd.f32 %v1250, %v1251
      %v1253 = vrot.slane %v1252, 1
      %v1254 = vadd.f32 %v1252, %v1253
      %v1255 = vmul.f32 %v1254, %v1244
      %v1256 = vadd.f32 %v1255, 1e-05
      %v1257 = vrsqrt.pop %v1256
      %v1258 = vmul.f32 %v1246, %v1257
      %v1259 = vld [vmem:[%s8] sm:$0xff]
      %1261 = vset.pattern.permute.xlu0 0
      %1262 = vperm.xlu0 %1261, %v1259
      %v1263 = vpop.permute.xlu0 %1262
      %v1265 = vmul.f32 %v1258, %v1263
      %v1266 = vld [vmem:[%s9] sm:$0xff]
      %1268 = vset.pattern.permute.xlu0 0
      %1269 = vperm.xlu0 %1268, %v1266
      %v1270 = vpop.permute.xlu0 %1269
      %v1272 = vadd.f32 %v1265, %v1270
      %v1273 = vrcp.pop %v1235
      %v1274 = vmul.f32 %v1272, %v1273
      %v1275 = vmul.f32 %v1072, %v1274
      %v1276 = vadd.f32 %v1275, %v450
      %v1278 = vcombine.high %v1276, %v1276
      %v1280 = vunpack.c.l.s4 1966171168
      %v1281 = vunpack.c.0.s8 %v1280
      %v1282 = vlaneseq
      %v1283 = vshrl.u32 %v1282, 7
      %v1284 = vsub.s32 %v1281, %v1283
      %v1285 = vrot.slane %v1276, %v1284
      %v1287 = vunpack.c.l.s4 1966171168
      %v1288 = vunpack.c.0.s8 %v1287
      %v1289 = vlaneseq
      %v1290 = vshrl.u32 %v1289, 7
      %v1291 = vsub.s32 %v1288, %v1290
      %v1292 = vrot.slane %v1278, %v1291
      %v1293 = vcombine.high %v1285, %v1285
      %v1294 = vcombine.high %v1292, %v1292
      %v1296 = vunpack.c.l.s4 1966171168
      %v1297 = vunpack.c.0.s8 %v1296
      %v1298 = vlaneseq
      %v1299 = vshrl.u32 %v1298, 7
      %v1300 = vsub.s32 %v1297, %v1299
      %v1301 = vrot.slane %v1285, %v1300
      %v1303 = vunpack.c.l.s4 1966171168
      %v1304 = vunpack.c.0.s8 %v1303
      %v1305 = vlaneseq
      %v1306 = vshrl.u32 %v1305, 7
      %v1307 = vsub.s32 %v1304, %v1306
      %v1308 = vrot.slane %v1292, %v1307
      %v1310 = vunpack.c.l.s4 1966171168
      %v1311 = vunpack.c.0.s8 %v1310
      %v1312 = vlaneseq
      %v1313 = vshrl.u32 %v1312, 7
      %v1314 = vsub.s32 %v1311, %v1313
      %v1315 = vrot.slane %v1293, %v1314
      %v1317 = vunpack.c.l.s4 1966171168
      %v1318 = vunpack.c.0.s8 %v1317
      %v1319 = vlaneseq
      %v1320 = vshrl.u32 %v1319, 7
      %v1321 = vsub.s32 %v1318, %v1320
      %v1322 = vrot.slane %v1294, %v1321
      %v1323 = vcombine.high %v1301, %v1301
      %v1324 = vcombine.high %v1308, %v1308
      %v1325 = vcombine.high %v1315, %v1315
      %v1326 = vcombine.high %v1322, %v1322
      %vm1335 = vcmask 122880
      %1336 = vst.msk [vmem:[%s390] sm:$0x1] %vm1335, %v1301
      %1337 = vst.msk [vmem:[%s390 + $0x4] sm:$0x1] %vm1335, %v1315
      %1338 = vst.msk [vmem:[%s390 + $0x8] sm:$0x1] %vm1335, %v1323
      %1339 = vst.msk [vmem:[%s390 + $0xc] sm:$0x1] %vm1335, %v1325
      %1340 = vst.msk [vmem:[%s390 + $0x10] sm:$0x1] %vm1335, %v1308
      %1341 = vst.msk [vmem:[%s390 + $0x14] sm:$0x1] %vm1335, %v1322
      %1342 = vst.msk [vmem:[%s390 + $0x18] sm:$0x1] %vm1335, %v1324
      %1343 = vst.msk [vmem:[%s390 + $0x1c] sm:$0x1] %vm1335, %v1326
      %v1344 = vmul.f32 %v1146, %v1274
      %v1345 = vadd.f32 %v1344, %v551
      %v1347 = vcombine.high %v1345, %v1345
      %v1349 = vunpack.c.l.s4 1966171168
      %v1350 = vunpack.c.0.s8 %v1349
      %v1351 = vlaneseq
      %v1352 = vshrl.u32 %v1351, 7
      %v1353 = vsub.s32 %v1350, %v1352
      %v1354 = vrot.slane %v1345, %v1353
      %v1356 = vunpack.c.l.s4 1966171168
      %v1357 = vunpack.c.0.s8 %v1356
      %v1358 = vlaneseq
      %v1359 = vshrl.u32 %v1358, 7
      %v1360 = vsub.s32 %v1357, %v1359
      %v1361 = vrot.slane %v1347, %v1360
      %v1362 = vcombine.high %v1354, %v1354
      %v1363 = vcombine.high %v1361, %v1361
      %v1365 = vunpack.c.l.s4 1966171168
      %v1366 = vunpack.c.0.s8 %v1365
      %v1367 = vlaneseq
      %v1368 = vshrl.u32 %v1367, 7
      %v1369 = vsub.s32 %v1366, %v1368
      %v1370 = vrot.slane %v1354, %v1369
      %v1372 = vunpack.c.l.s4 1966171168
      %v1373 = vunpack.c.0.s8 %v1372
      %v1374 = vlaneseq
      %v1375 = vshrl.u32 %v1374, 7
      %v1376 = vsub.s32 %v1373, %v1375
      %v1377 = vrot.slane %v1361, %v1376
      %v1379 = vunpack.c.l.s4 1966171168
      %v1380 = vunpack.c.0.s8 %v1379
      %v1381 = vlaneseq
      %v1382 = vshrl.u32 %v1381, 7
      %v1383 = vsub.s32 %v1380, %v1382
      %v1384 = vrot.slane %v1362, %v1383
      %v1386 = vunpack.c.l.s4 1966171168
      %v1387 = vunpack.c.0.s8 %v1386
      %v1388 = vlaneseq
      %v1389 = vshrl.u32 %v1388, 7
      %v1390 = vsub.s32 %v1387, %v1389
      %v1391 = vrot.slane %v1363, %v1390
      %v1392 = vcombine.high %v1370, %v1370
      %v1393 = vcombine.high %v1377, %v1377
      %v1394 = vcombine.high %v1384, %v1384
      %v1395 = vcombine.high %v1391, %v1391
      %1404 = vst.msk [vmem:[%s390 + $0x1] sm:$0x1] %vm1335, %v1370
      %1405 = vst.msk [vmem:[%s390 + $0x5] sm:$0x1] %vm1335, %v1384
      %1406 = vst.msk [vmem:[%s390 + $0x9] sm:$0x1] %vm1335, %v1392
      %1407 = vst.msk [vmem:[%s390 + $0xd] sm:$0x1] %vm1335, %v1394
      %1408 = vst.msk [vmem:[%s390 + $0x11] sm:$0x1] %vm1335, %v1377
      %1409 = vst.msk [vmem:[%s390 + $0x15] sm:$0x1] %vm1335, %v1391
      %1410 = vst.msk [vmem:[%s390 + $0x19] sm:$0x1] %vm1335, %v1393
      %1411 = vst.msk [vmem:[%s390 + $0x1d] sm:$0x1] %vm1335, %v1395
      %v1412 = vmul.f32 %v1220, %v1274
      %v1413 = vadd.f32 %v1412, %v648
      %v1415 = vcombine.high %v1413, %v1413
      %v1417 = vunpack.c.l.s4 1966171168
      %v1418 = vunpack.c.0.s8 %v1417
      %v1419 = vlaneseq
      %v1420 = vshrl.u32 %v1419, 7
      %v1421 = vsub.s32 %v1418, %v1420
      %v1422 = vrot.slane %v1413, %v1421
      %v1424 = vunpack.c.l.s4 1966171168
      %v1425 = vunpack.c.0.s8 %v1424
      %v1426 = vlaneseq
      %v1427 = vshrl.u32 %v1426, 7
      %v1428 = vsub.s32 %v1425, %v1427
      %v1429 = vrot.slane %v1415, %v1428
      %v1430 = vcombine.high %v1422, %v1422
      %v1431 = vcombine.high %v1429, %v1429
      %v1433 = vunpack.c.l.s4 1966171168
      %v1434 = vunpack.c.0.s8 %v1433
      %v1435 = vlaneseq
      %v1436 = vshrl.u32 %v1435, 7
      %v1437 = vsub.s32 %v1434, %v1436
      %v1438 = vrot.slane %v1422, %v1437
      %v1440 = vunpack.c.l.s4 1966171168
      %v1441 = vunpack.c.0.s8 %v1440
      %v1442 = vlaneseq
      %v1443 = vshrl.u32 %v1442, 7
      %v1444 = vsub.s32 %v1441, %v1443
      %v1445 = vrot.slane %v1429, %v1444
      %v1447 = vunpack.c.l.s4 1966171168
      %v1448 = vunpack.c.0.s8 %v1447
      %v1449 = vlaneseq
      %v1450 = vshrl.u32 %v1449, 7
      %v1451 = vsub.s32 %v1448, %v1450
      %v1452 = vrot.slane %v1430, %v1451
      %v1454 = vunpack.c.l.s4 1966171168
      %v1455 = vunpack.c.0.s8 %v1454
      %v1456 = vlaneseq
      %v1457 = vshrl.u32 %v1456, 7
      %v1458 = vsub.s32 %v1455, %v1457
      %v1459 = vrot.slane %v1431, %v1458
      %v1460 = vcombine.high %v1438, %v1438
      %v1461 = vcombine.high %v1445, %v1445
      %v1462 = vcombine.high %v1452, %v1452
      %v1463 = vcombine.high %v1459, %v1459
      %1472 = vst.msk [vmem:[%s390 + $0x2] sm:$0x1] %vm1335, %v1438
      %1473 = vst.msk [vmem:[%s390 + $0x6] sm:$0x1] %vm1335, %v1452
      %1474 = vst.msk [vmem:[%s390 + $0xa] sm:$0x1] %vm1335, %v1460
      %1475 = vst.msk [vmem:[%s390 + $0xe] sm:$0x1] %vm1335, %v1462
      %1476 = vst.msk [vmem:[%s390 + $0x12] sm:$0x1] %vm1335, %v1445
      %1477 = vst.msk [vmem:[%s390 + $0x16] sm:$0x1] %vm1335, %v1459
      %1478 = vst.msk [vmem:[%s390 + $0x1a] sm:$0x1] %vm1335, %v1461
      %1479 = vst.msk [vmem:[%s390 + $0x1e] sm:$0x1] %vm1335, %v1463
      %p1480 = scmp.lt.s32.totalorder %s25, 1
      %s1481 = scalar_select %p1480, %s25, 1
      %p1482 = scmp.lt.s32.totalorder %s26, 0
      %s1483 = scalar_select %p1482, %s26, 0
      %s1484 = smul.addr %s1481, 8
      %s1485 = sadd.s32 %s1483, %s1484
      %s1486 = smul.addr %s1485, 4
      %s1487 = scalar_lea.vmem %s10, %s1486
      // Predicated region
      $region61: #{transformer_block.3} parent=59 // pred_check
        %p1488 = pneg %p270
      $region62: #{transformer_block.3} parent=59 // pred_check_branch
        %1490 = sbr.rel (%p1488) target = $region64
      $region63: #{transformer_block.3} parent=59 // pred_region
        _
      $region64: #{transformer_block.3} parent=59 // pred_fallthru
        _
    $region60: #{transformer_block.3} parent=5 // pred_fallthru
      _
    %p1491 = scmp.le.s32.totalorder 2, %s16
    // Predicated region
    $region65: #{transformer_block.3} parent=5 // pred_check
      %p1492 = pneg %p1491
    $region66: #{transformer_block.3} parent=5 // pred_check_branch
      %1494 = sbr.rel (%p1492) target = $region68
    $region67: #{transformer_block.3} parent=5 // pred_region
      %s1495 = ssub.s32 %s16, 2
      // Predicated region
      $region69: #{transformer_block.3} parent=67 // pred_check
        %p1496 = pneg %p276
      $region70: #{transformer_block.3} parent=67 // pred_check_branch
        %1498 = sbr.rel (%p1496) target = $region72
      $region71: #{transformer_block.3} parent=67 // pred_region
        %p1499 = scmp.lt.s32.totalorder %s27, 1
        %s1500 = scalar_select %p1499, %s27, 1
        %p1501 = scmp.lt.s32.totalorder %s28, 0
        %s1502 = scalar_select %p1501, %s28, 0
        %s1503 = smul.addr %s1500, 8
        %s1504 = sadd.s32 %s1502, %s1503
        %s1505 = smul.addr %s1504, 4
        %s1506 = scalar_lea.vmem %s10, %s1505
      $region72: #{transformer_block.3} parent=67 // pred_fallthru
        _
    $region68: #{transformer_block.3} parent=5 // pred_fallthru
      _
  $region6: #{transformer_block.3} parent=0 // loop_footer
    %s20 = sadd.s32 1, %s16
  $region7: #{transformer_block.3} parent=0 // loop_footer_branch
    %15 = sbr.rel target = $region3
  $region8: #{transformer_block.3} parent=0 // loop_exit
    _

// kernel: transformer_block.2
$region0: #{transformer_block.2}
  #allocation0 [shape = 'u32[]', space=smem, size = 0x4, offset = 0x4, fixed_abs, tag = 'smem constant byte address 0x4 - core index']
  #allocation1 [shape = 'u32[144,128]{1,0:T(1,128)}', space=vmem, size = 0x12000, scoped, tag = 'internal scratch']
  %s0 = inlined_call_operand.vmem [shape: f32[2,8,3,16], index: 0, kind: input, shape index: {}]
  %s1 = inlined_call_operand.vmem [shape: f32[4,8,8], index: 1, kind: input, shape index: {}]
  %s2 = inlined_call_operand.vmem [shape: f32[4,8,3], index: 2, kind: input, shape index: {}]
  %s3 = inlined_call_operand.vmem [shape: f32[8,1], index: 3, kind: input, shape index: {}]
  %s4 = inlined_call_operand.vmem [shape: f32[8,1], index: 4, kind: input, shape index: {}]
  %s5 = inlined_call_operand.vmem [shape: f32[8,8], index: 5, kind: input, shape index: {}]
  %s6 = inlined_call_operand.vmem [shape: f32[8,3], index: 6, kind: input, shape index: {}]
  %s7 = inlined_call_operand.vmem [shape: f32[2,8,3,16], index: 7, kind: output, shape index: {0}]
  %s8 = inlined_call_operand.vmem [shape: f32[2,8,2], index: 8, kind: output, shape index: {1}]
  %9 = xla_tuple %s7, %s8
  %s10 = sld [smem:[#allocation0]]
  $region69: #{transformer_block.2} parent=0
    _
  %s12 = ssub.s32 1, %s10
  %s13 = scalar_select 0, %s12, %s10
  loop: start=0, step=1, limit=4
  $region2: #{transformer_block.2} parent=0 // loop_pre_header
    _
  $region3: #{transformer_block.2} parent=0 // loop_header
    %s15 = sphi 0, %s19
    %p16 = scmp.ge.s32.totalorder %s15, 4
    %s25 = sphi 0, %s27
    %s28 = sphi 0, %s25
    %s29 = sphi 0, %s28
    %s45 = sphi 0, %s29
    %s49 = sphi 0, %s49
    %s51 = sphi 0, %s49
    %s52 = sphi 0, %s51
    %s66 = sphi 0, %s52
    %s70 = sphi 0, %s70
    %s72 = sphi 0, %s70
    %s73 = sphi 0, %s72
    %s87 = sphi 0, %s73
    %s91 = sphi 0, %s91
    %s93 = sphi 0, %s91
    %s94 = sphi 0, %s93
    %s108 = sphi 0, %s94
    %s112 = sphi 0, %s112
    %s114 = sphi 0, %s112
    %s115 = sphi 0, %s114
    %s129 = sphi 0, %s115
    %s133 = sphi 0, %s133
    %s135 = sphi 0, %s133
    %s136 = sphi 0, %s135
    %s150 = sphi 0, %s136
    %s154 = sphi 0, %s154
    %s156 = sphi 0, %s154
    %s157 = sphi 0, %s156
    %s171 = sphi 0, %s157
    %s177 = sphi 0, %s179
    %s180 = sphi 0, %s177
    %s181 = sphi 0, %s180
    %s197 = sphi 0, %s181
    %s203 = sphi 0, %s205
    %s206 = sphi 0, %s203
    %s207 = sphi 0, %s206
    %s223 = sphi 0, %s207
  $region4: #{transformer_block.2} parent=0 // loop_header_branch
    %18 = sbr.rel (%p16) target = $region8
  $region5: #{transformer_block.2} parent=0 // loop_body
    %s20 = ssub.s32 %s15, 1
    %s21 = ssub.s32 %s15, 2
    %s22 = sadd.s32 %s15, 1
    %s23 = ssub.s32 %s15, %s22
    %p24 = scmp.eq.s32.totalorder %s23, 0
    %s26 = sadd.s32 %s25, 1
    %s27 = scalar_select %p24, %s25, %s26
    %p30 = pneg %p24
    %p31 = scmp.eq.s32.totalorder %s15, 1
    %p32 = por %p30, %p31
    %p33 = scmp.ne.s32.totalorder %s25, %s28
    %p34 = scmp.eq.s32.totalorder %s15, 0
    %p35 = por %p33, %p34
    %p36 = scmp.ne.s32.totalorder %s25, %s28
    %p37 = scmp.eq.s32.totalorder %s20, 1
    %p38 = por %p36, %p37
    %p39 = scmp.ne.s32.totalorder %s28, %s29
    %p40 = scmp.eq.s32.totalorder %s20, 0
    %p41 = por %p39, %p40
    %p42 = scmp.ne.s32.totalorder %s28, %s29
    %p43 = scmp.eq.s32.totalorder %s21, 1
    %p44 = por %p42, %p43
    %p46 = scmp.ne.s32.totalorder %s29, %s45
    %p47 = scmp.eq.s32.totalorder %s21, 0
    %p48 = por %p46, %p47
    %s50 = sadd.s32 %s49, 1
    %p53 = scmp.eq.s32.totalorder %s15, 1
    %p54 = scmp.ne.s32.totalorder %s49, %s51
    %p55 = scmp.eq.s32.totalorder %s15, 0
    %p56 = por %p54, %p55
    %p57 = scmp.ne.s32.totalorder %s49, %s51
    %p58 = scmp.eq.s32.totalorder %s20, 1
    %p59 = por %p57, %p58
    %p60 = scmp.ne.s32.totalorder %s51, %s52
    %p61 = scmp.eq.s32.totalorder %s20, 0
    %p62 = por %p60, %p61
    %p63 = scmp.ne.s32.totalorder %s51, %s52
    %p64 = scmp.eq.s32.totalorder %s21, 1
    %p65 = por %p63, %p64
    %p67 = scmp.ne.s32.totalorder %s52, %s66
    %p68 = scmp.eq.s32.totalorder %s21, 0
    %p69 = por %p67, %p68
    %s71 = sadd.s32 %s70, 1
    %p74 = scmp.eq.s32.totalorder %s15, 1
    %p75 = scmp.ne.s32.totalorder %s70, %s72
    %p76 = scmp.eq.s32.totalorder %s15, 0
    %p77 = por %p75, %p76
    %p78 = scmp.ne.s32.totalorder %s70, %s72
    %p79 = scmp.eq.s32.totalorder %s20, 1
    %p80 = por %p78, %p79
    %p81 = scmp.ne.s32.totalorder %s72, %s73
    %p82 = scmp.eq.s32.totalorder %s20, 0
    %p83 = por %p81, %p82
    %p84 = scmp.ne.s32.totalorder %s72, %s73
    %p85 = scmp.eq.s32.totalorder %s21, 1
    %p86 = por %p84, %p85
    %p88 = scmp.ne.s32.totalorder %s73, %s87
    %p89 = scmp.eq.s32.totalorder %s21, 0
    %p90 = por %p88, %p89
    %s92 = sadd.s32 %s91, 1
    %p95 = scmp.eq.s32.totalorder %s15, 1
    %p96 = scmp.ne.s32.totalorder %s91, %s93
    %p97 = scmp.eq.s32.totalorder %s15, 0
    %p98 = por %p96, %p97
    %p99 = scmp.ne.s32.totalorder %s91, %s93
    %p100 = scmp.eq.s32.totalorder %s20, 1
    %p101 = por %p99, %p100
    %p102 = scmp.ne.s32.totalorder %s93, %s94
    %p103 = scmp.eq.s32.totalorder %s20, 0
    %p104 = por %p102, %p103
    %p105 = scmp.ne.s32.totalorder %s93, %s94
    %p106 = scmp.eq.s32.totalorder %s21, 1
    %p107 = por %p105, %p106
    %p109 = scmp.ne.s32.totalorder %s94, %s108
    %p110 = scmp.eq.s32.totalorder %s21, 0
    %p111 = por %p109, %p110
    %s113 = sadd.s32 %s112, 1
    %p116 = scmp.eq.s32.totalorder %s15, 1
    %p117 = scmp.ne.s32.totalorder %s112, %s114
    %p118 = scmp.eq.s32.totalorder %s15, 0
    %p119 = por %p117, %p118
    %p120 = scmp.ne.s32.totalorder %s112, %s114
    %p121 = scmp.eq.s32.totalorder %s20, 1
    %p122 = por %p120, %p121
    %p123 = scmp.ne.s32.totalorder %s114, %s115
    %p124 = scmp.eq.s32.totalorder %s20, 0
    %p125 = por %p123, %p124
    %p126 = scmp.ne.s32.totalorder %s114, %s115
    %p127 = scmp.eq.s32.totalorder %s21, 1
    %p128 = por %p126, %p127
    %p130 = scmp.ne.s32.totalorder %s115, %s129
    %p131 = scmp.eq.s32.totalorder %s21, 0
    %p132 = por %p130, %p131
    %s134 = sadd.s32 %s133, 1
    %p137 = scmp.eq.s32.totalorder %s15, 1
    %p138 = scmp.ne.s32.totalorder %s133, %s135
    %p139 = scmp.eq.s32.totalorder %s15, 0
    %p140 = por %p138, %p139
    %p141 = scmp.ne.s32.totalorder %s133, %s135
    %p142 = scmp.eq.s32.totalorder %s20, 1
    %p143 = por %p141, %p142
    %p144 = scmp.ne.s32.totalorder %s135, %s136
    %p145 = scmp.eq.s32.totalorder %s20, 0
    %p146 = por %p144, %p145
    %p147 = scmp.ne.s32.totalorder %s135, %s136
    %p148 = scmp.eq.s32.totalorder %s21, 1
    %p149 = por %p147, %p148
    %p151 = scmp.ne.s32.totalorder %s136, %s150
    %p152 = scmp.eq.s32.totalorder %s21, 0
    %p153 = por %p151, %p152
    %s155 = sadd.s32 %s154, 1
    %p158 = scmp.eq.s32.totalorder %s15, 1
    %p159 = scmp.ne.s32.totalorder %s154, %s156
    %p160 = scmp.eq.s32.totalorder %s15, 0
    %p161 = por %p159, %p160
    %p162 = scmp.ne.s32.totalorder %s154, %s156
    %p163 = scmp.eq.s32.totalorder %s20, 1
    %p164 = por %p162, %p163
    %p165 = scmp.ne.s32.totalorder %s156, %s157
    %p166 = scmp.eq.s32.totalorder %s20, 0
    %p167 = por %p165, %p166
    %p168 = scmp.ne.s32.totalorder %s156, %s157
    %p169 = scmp.eq.s32.totalorder %s21, 1
    %p170 = por %p168, %p169
    %p172 = scmp.ne.s32.totalorder %s157, %s171
    %p173 = scmp.eq.s32.totalorder %s21, 0
    %p174 = por %p172, %p173
    %s175 = ssub.s32 %s15, %s22
    %p176 = scmp.eq.s32.totalorder %s175, 0
    %s178 = sadd.s32 %s177, 1
    %s179 = scalar_select %p176, %s177, %s178
    %p182 = pneg %p176
    %p183 = scmp.eq.s32.totalorder %s15, 1
    %p184 = por %p182, %p183
    %p185 = scmp.ne.s32.totalorder %s177, %s180
    %p186 = scmp.eq.s32.totalorder %s15, 0
    %p187 = por %p185, %p186
    %p188 = scmp.ne.s32.totalorder %s177, %s180
    %p189 = scmp.eq.s32.totalorder %s20, 1
    %p190 = por %p188, %p189
    %p191 = scmp.ne.s32.totalorder %s180, %s181
    %p192 = scmp.eq.s32.totalorder %s20, 0
    %p193 = por %p191, %p192
    %p194 = scmp.ne.s32.totalorder %s180, %s181
    %p195 = scmp.eq.s32.totalorder %s21, 1
    %p196 = por %p194, %p195
    %p198 = scmp.ne.s32.totalorder %s181, %s197
    %p199 = scmp.eq.s32.totalorder %s21, 0
    %p200 = por %p198, %p199
    %s201 = ssub.s32 %s15, %s22
    %p202 = scmp.eq.s32.totalorder %s201, 0
    %s204 = sadd.s32 %s203, 1
    %s205 = scalar_select %p202, %s203, %s204
    %p208 = pneg %p202
    %p209 = scmp.eq.s32.totalorder %s15, 1
    %p210 = por %p208, %p209
    %p211 = scmp.ne.s32.totalorder %s203, %s206
    %p212 = scmp.eq.s32.totalorder %s15, 0
    %p213 = por %p211, %p212
    %p214 = scmp.ne.s32.totalorder %s203, %s206
    %p215 = scmp.eq.s32.totalorder %s20, 1
    %p216 = por %p214, %p215
    %p217 = scmp.ne.s32.totalorder %s206, %s207
    %p218 = scmp.eq.s32.totalorder %s20, 0
    %p219 = por %p217, %p218
    %p220 = scmp.ne.s32.totalorder %s206, %s207
    %p221 = scmp.eq.s32.totalorder %s21, 1
    %p222 = por %p220, %p221
    %p224 = scmp.ne.s32.totalorder %s207, %s223
    %p225 = scmp.eq.s32.totalorder %s21, 0
    %p226 = por %p224, %p225
    %p227 = scmp.le.s32.totalorder 1, %s15
    %p228 = scmp.lt.s32.totalorder %s15, 3
    %p229 = pnand %p227, %p228
    %p230 = pneg %p229
    // Predicated region
    $region9: #{transformer_block.2} parent=5 // pred_check
      _
    $region10: #{transformer_block.2} parent=5 // pred_check_branch
      %232 = sbr.rel (%p229) target = $region12
    $region11: #{transformer_block.2} parent=5 // pred_region
      %s233 = ssub.s32 %s15, 1
      // Predicated region
      $region13: #{transformer_block.2} parent=11 // pred_check
        %p234 = pneg %p62
      $region14: #{transformer_block.2} parent=11 // pred_check_branch
        %236 = sbr.rel (%p234) target = $region16
      $region15: #{transformer_block.2} parent=11 // pred_region
        _
      $region16: #{transformer_block.2} parent=11 // pred_fallthru
        _
      // Predicated region
      $region17: #{transformer_block.2} parent=11 // pred_check
        %p237 = pneg %p83
      $region18: #{transformer_block.2} parent=11 // pred_check_branch
        %239 = sbr.rel (%p237) target = $region20
      $region19: #{transformer_block.2} parent=11 // pred_region
        _
      $region20: #{transformer_block.2} parent=11 // pred_fallthru
        _
      // Predicated region
      $region21: #{transformer_block.2} parent=11 // pred_check
        %p240 = pneg %p104
      $region22: #{transformer_block.2} parent=11 // pred_check_branch
        %242 = sbr.rel (%p240) target = $region24
      $region23: #{transformer_block.2} parent=11 // pred_region
        _
      $region24: #{transformer_block.2} parent=11 // pred_fallthru
        _
      // Predicated region
      $region25: #{transformer_block.2} parent=11 // pred_check
        %p243 = pneg %p125
      $region26: #{transformer_block.2} parent=11 // pred_check_branch
        %245 = sbr.rel (%p243) target = $region28
      $region27: #{transformer_block.2} parent=11 // pred_region
        _
      $region28: #{transformer_block.2} parent=11 // pred_fallthru
        _
      // Predicated region
      $region29: #{transformer_block.2} parent=11 // pred_check
        %p246 = pneg %p146
      $region30: #{transformer_block.2} parent=11 // pred_check_branch
        %248 = sbr.rel (%p246) target = $region32
      $region31: #{transformer_block.2} parent=11 // pred_region
        _
      $region32: #{transformer_block.2} parent=11 // pred_fallthru
        _
      // Predicated region
      $region33: #{transformer_block.2} parent=11 // pred_check
        %p249 = pneg %p167
      $region34: #{transformer_block.2} parent=11 // pred_check_branch
        %251 = sbr.rel (%p249) target = $region36
      $region35: #{transformer_block.2} parent=11 // pred_region
        _
      $region36: #{transformer_block.2} parent=11 // pred_fallthru
        _
    $region12: #{transformer_block.2} parent=5 // pred_fallthru
      _
    %p252 = scmp.lt.s32.totalorder %s15, 2
    // Predicated region
    $region37: #{transformer_block.2} parent=5 // pred_check
      %p253 = pneg %p252
    $region38: #{transformer_block.2} parent=5 // pred_check_branch
      %255 = sbr.rel (%p253) target = $region40
    $region39: #{transformer_block.2} parent=5 // pred_region
      // Predicated region
      $region41: #{transformer_block.2} parent=39 // pred_check
        %p256 = pneg %p35
      $region42: #{transformer_block.2} parent=39 // pred_check_branch
        %258 = sbr.rel (%p256) target = $region44
      $region43: #{transformer_block.2} parent=39 // pred_region
        %p259 = scmp.lt.s32.totalorder %s15, 1
        %s260 = scalar_select %p259, %s15, 1
        %s261 = smul.addr %s260, 8
        %s262 = smul.addr %s261, 4
        %s263 = scalar_lea.vmem %s0, %s262
      $region44: #{transformer_block.2} parent=39 // pred_fallthru
        _
    $region40: #{transformer_block.2} parent=5 // pred_fallthru
      _
    %p264 = scmp.le.s32.totalorder 1, %s15
    %p265 = scmp.lt.s32.totalorder %s15, 3
    %p266 = pnand %p264, %p265
    %p267 = pneg %p266
    // Predicated region
    $region45: #{transformer_block.2} parent=5 // pred_check
      _
    $region46: #{transformer_block.2} parent=5 // pred_check_branch
      %269 = sbr.rel (%p266) target = $region48
    $region47: #{transformer_block.2} parent=5 // pred_region
      %s270 = ssub.s32 %s15, 1
      %p271 = scmp.lt.s32.totalorder %s20, 1
      %s272 = scalar_select %p271, %s20, 1
      %s273 = smul.addr %s272, 8
      %s274 = smul.addr %s273, 4
      %s275 = scalar_lea.vmem %s0, %s274
      %p276 = pneg %p41
      %p277 = pneg %p38
      %p278 = pneg %p62
      %p279 = pneg %p59
      %p280 = pneg %p83
      %p281 = pneg %p80
      %p282 = pneg %p104
      %p283 = pneg %p101
      %p284 = pneg %p125
      %p285 = pneg %p122
      %p286 = pneg %p146
      %p287 = pneg %p143
      %p288 = pneg %p167
      %p289 = pneg %p164
      %p290 = pneg %p193
      %p291 = pneg %p190
      %p292 = scmp.lt.s32.totalorder %s20, 1
      %s293 = scalar_select %p292, %s20, 1
      %s294 = smul.addr %s293, 8
      %s295 = smul.addr %s294, 4
      %s296 = scalar_lea.vmem %s7, %s295
      %p297 = pneg %p219
      %p298 = pneg %p216
      %p299 = scmp.lt.s32.totalorder %s20, 1
      %s300 = scalar_select %p299, %s20, 1
      %s301 = smul.addr %s300, 8
      %s302 = scalar_lea.vmem %s8, %s301
      %p303 = scmp.lt.s32.totalorder %s20, 1
      %s304 = scalar_select %p303, %s20, 1
      %s305 = smul.addr %s304, 8
      %s306 = smul.addr %s305, 4
      %s307 = scalar_lea.vmem %s0, %s306
      %p308 = scmp.lt.s32.totalorder %s20, 1
      %s309 = scalar_select %p308, %s20, 1
      %s310 = smul.addr %s309, 8
      %s311 = smul.addr %s310, 4
      %s312 = scalar_lea.vmem %s7, %s311
      %p313 = scmp.lt.s32.totalorder %s20, 1
      %s314 = scalar_select %p313, %s20, 1
      %s315 = smul.addr %s314, 8
      %s316 = scalar_lea.vmem %s8, %s315
      %v317 = vld [vmem:[%s307] sm:$0x1]
      %v318 = vld [vmem:[%s307 + $0x4] sm:$0x1]
      %v319 = vld [vmem:[%s307 + $0x8] sm:$0x1]
      %v320 = vld [vmem:[%s307 + $0xc] sm:$0x1]
      %v321 = vld [vmem:[%s307 + $0x10] sm:$0x1]
      %v322 = vld [vmem:[%s307 + $0x14] sm:$0x1]
      %v323 = vld [vmem:[%s307 + $0x18] sm:$0x1]
      %v324 = vld [vmem:[%s307 + $0x1c] sm:$0x1]
      %v325 = vld [vmem:[%s307 + $0x1] sm:$0x1]
      %v326 = vld [vmem:[%s307 + $0x5] sm:$0x1]
      %v327 = vld [vmem:[%s307 + $0x9] sm:$0x1]
      %v328 = vld [vmem:[%s307 + $0xd] sm:$0x1]
      %v329 = vld [vmem:[%s307 + $0x11] sm:$0x1]
      %v330 = vld [vmem:[%s307 + $0x15] sm:$0x1]
      %v331 = vld [vmem:[%s307 + $0x19] sm:$0x1]
      %v332 = vld [vmem:[%s307 + $0x1d] sm:$0x1]
      %v333 = vld [vmem:[%s307 + $0x2] sm:$0x1]
      %v334 = vld [vmem:[%s307 + $0x6] sm:$0x1]
      %v335 = vld [vmem:[%s307 + $0xa] sm:$0x1]
      %v336 = vld [vmem:[%s307 + $0xe] sm:$0x1]
      %v337 = vld [vmem:[%s307 + $0x12] sm:$0x1]
      %v338 = vld [vmem:[%s307 + $0x16] sm:$0x1]
      %v339 = vld [vmem:[%s307 + $0x1a] sm:$0x1]
      %v340 = vld [vmem:[%s307 + $0x1e] sm:$0x1]
      %v341 = vld [vmem:[%s1] sm:$0xff]
      %v342 = vld [vmem:[%s2] sm:$0xff]
      %344 = vset.pattern.permute.xlu0 0
      %345 = vperm.xlu0 %344, %v342
      %v346 = vpop.permute.xlu0 %345
      %v356 = vrot.slane %v318, 7
      %vm357 = vcmask 1041409
      %v358 = vsel %vm357, %v356, %v317
      %v359 = vrot.slane %v319, 6
      %vm360 = vcmask 1042434
      %v361 = vsel %vm360, %v359, %v358
      %v362 = vrot.slane %v320, 5
      %vm363 = vcmask 1043459
      %v364 = vsel %vm363, %v362, %v361
      %v365 = vrot.slane %v321, 4
      %vm366 = vcmask 1044484
      %v367 = vsel %vm366, %v365, %v364
      %v368 = vrot.slane %v322, 3
      %vm369 = vcmask 1045509
      %v370 = vsel %vm369, %v368, %v367
      %v371 = vrot.slane %v323, 2
      %vm372 = vcmask 1046534
      %v373 = vsel %vm372, %v371, %v370
      %v374 = vrot.slane %v324, 1
      %vm375 = vcmask 1047559
      %v376 = vsel %vm375, %v374, %v373
      %vm378 = vcmask 64512
      %v380 = vsel %vm378, %v341, 0
      %382 = vmatprep.subr.mxu0 0.0
      %383 = vmatpush1.msra.mxu0 %v376
      %384 = vmatprep.subr.mxu0 0.0
      %385 = vmatpush1.msra.mxu0 0.0
      %386 = vmatprep.subr.mxu0 0.0
      %387 = vmatpush1.msra.mxu0 0.0
      %388 = vmatprep.subr.mxu0 0.0
      %389 = vmatpush1.msra.mxu0 0.0
      %390 = vmatprep.subr.mxu0 0.0
      %391 = vmatpush1.msra.mxu0 0.0
      %392 = vmatprep.subr.mxu0 0.0
      %393 = vmatpush1.msra.mxu0 0.0
      %394 = vmatprep.subr.mxu0 0.0
      %395 = vmatpush1.msra.mxu0 0.0
      %396 = vmatprep.subr.mxu0 0.0
      %397 = vmatpush1.msra.mxu0 0.0
      %398 = vmatprep.subr.mxu0 0.0
      %399 = vmatpush1.msra.mxu0 0.0
      %400 = vmatprep.subr.mxu0 0.0
      %401 = vmatpush1.msra.mxu0 0.0
      %402 = vmatprep.subr.mxu0 0.0
      %403 = vmatpush1.msra.mxu0 0.0
      %404 = vmatprep.subr.mxu0 0.0
      %405 = vmatpush1.msra.mxu0 0.0
      %406 = vmatprep.subr.mxu0 0.0
      %407 = vmatpush1.msra.mxu0 0.0
      %408 = vmatprep.subr.mxu0 0.0
      %409 = vmatpush1.msra.mxu0 0.0
      %410 = vmatprep.subr.mxu0 0.0
      %411 = vmatpush1.msra.mxu0 0.0
      %412 = vmatprep.subr.mxu0 0.0
      %413 = vmatpush1.msra.mxu0 0.0
      %414 = vmatprep.subr.mxu0 0.0
      %415 = vmatpush1.msra.mxu0 0.0
      %416 = vmatprep.subr.mxu0 0.0
      %417 = vmatpush1.msra.mxu0 0.0
      %418 = vmatprep.subr.mxu0 0.0
      %419 = vmatpush1.msra.mxu0 0.0
      %420 = vmatprep.subr.mxu0 0.0
      %421 = vmatpush1.msra.mxu0 0.0
      %422 = vmatprep.subr.mxu0 0.0
      %423 = vmatpush1.msra.mxu0 0.0
      %424 = vmatprep.subr.mxu0 0.0
      %425 = vmatpush1.msra.mxu0 0.0
      %426 = vmatprep.subr.mxu0 0.0
      %427 = vmatpush1.msra.mxu0 0.0
      %428 = vmatprep.subr.mxu0 0.0
      %429 = vmatpush1.msra.mxu0 0.0
      %430 = vmatprep.subr.mxu0 0.0
      %431 = vmatpush1.msra.mxu0 0.0
      %432 = vmatprep.subr.mxu0 0.0
      %433 = vmatpush1.msra.mxu0 0.0
      %434 = vmatprep.subr.mxu0 0.0
      %435 = vmatpush1.msra.mxu0 0.0
      %436 = vmatprep.subr.mxu0 0.0
      %437 = vmatpush1.msra.mxu0 0.0
      %438 = vmatprep.subr.mxu0 0.0
      %439 = vmatpush1.msra.mxu0 0.0
      %440 = vmatprep.subr.mxu0 0.0
      %441 = vmatpush1.msra.mxu0 0.0
      %442 = vmatprep.subr.mxu0 0.0
      %443 = vmatpush1.msra.mxu0 0.0
      %444 = vmatprep.subr.mxu0 0.0
      %445 = vmatpush1.msra.mxu0 0.0
      %446 = vmatprep.mubr.f32.mxu0 0.0
      %447 = vmatmul.mubr.f32.gmra.mrb[0].mxu0 %v380
      %v448 = vpop.f32.mrb[0].mxu0
      %v449 = vadd.f32 %v346, %v448
      %v450 = vpop.f32.mrb[0].mxu0
      %451 = vdwg.mxu0
      %452 = vset.pattern.permute.xlu0 1
      %453 = vperm.xlu0 %452, %v342
      %v454 = vpop.permute.xlu0 %453
      %v464 = vrot.slane %v326, 7
      %v465 = vsel %vm357, %v464, %v325
      %v466 = vrot.slane %v327, 6
      %v467 = vsel %vm360, %v466, %v465
      %v468 = vrot.slane %v328, 5
      %v469 = vsel %vm363, %v468, %v467
      %v470 = vrot.slane %v329, 4
      %v471 = vsel %vm366, %v470, %v469
      %v472 = vrot.slane %v330, 3
      %v473 = vsel %vm369, %v472, %v471
      %v474 = vrot.slane %v331, 2
      %v475 = vsel %vm372, %v474, %v473
      %v476 = vrot.slane %v332, 1
      %v477 = vsel %vm375, %v476, %v475
      %479 = vmatprep.subr.mxu0 0.0
      %480 = vmatpush1.msra.mxu0 %v477
      %481 = vmatprep.subr.mxu0 0.0
      %482 = vmatpush1.msra.mxu0 0.0
      %483 = vmatprep.subr.mxu0 0.0
      %484 = vmatpush1.msra.mxu0 0.0
      %485 = vmatprep.subr.mxu0 0.0
      %486 = vmatpush1.msra.mxu0 0.0
      %487 = vmatprep.subr.mxu0 0.0
      %488 = vmatpush1.msra.mxu0 0.0
      %489 = vmatprep.subr.mxu0 0.0
      %490 = vmatpush1.msra.mxu0 0.0
      %491 = vmatprep.subr.mxu0 0.0
      %492 = vmatpush1.msra.mxu0 0.0
      %493 = vmatprep.subr.mxu0 0.0
      %494 = vmatpush1.msra.mxu0 0.0
      %495 = vmatprep.subr.mxu0 0.0
      %496 = vmatpush1.msra.mxu0 0.0
      %497 = vmatprep.subr.mxu0 0.0
      %498 = vmatpush1.msra.mxu0 0.0
      %499 = vmatprep.subr.mxu0 0.0
      %500 = vmatpush1.msra.mxu0 0.0
      %501 = vmatprep.subr.mxu0 0.0
      %502 = vmatpush1.msra.mxu0 0.0
      %503 = vmatprep.subr.mxu0 0.0
      %504 = vmatpush1.msra.mxu0 0.0
      %505 = vmatprep.subr.mxu0 0.0
      %506 = vmatpush1.msra.mxu0 0.0
      %507 = vmatprep.subr.mxu0 0.0
      %508 = vmatpush1.msra.mxu0 0.0
      %509 = vmatprep.subr.mxu0 0.0
      %510 = vmatpush1.msra.mxu0 0.0
      %511 = vmatprep.subr.mxu0 0.0
      %512 = vmatpush1.msra.mxu0 0.0
      %513 = vmatprep.subr.mxu0 0.0
      %514 = vmatpush1.msra.mxu0 0.0
      %515 = vmatprep.subr.mxu0 0.0
      %516 = vmatpush1.msra.mxu0 0.0
      %517 = vmatprep.subr.mxu0 0.0
      %518 = vmatpush1.msra.mxu0 0.0
      %519 = vmatprep.subr.mxu0 0.0
      %520 = vmatpush1.msra.mxu0 0.0
      %521 = vmatprep.subr.mxu0 0.0
      %522 = vmatpush1.msra.mxu0 0.0
      %523 = vmatprep.subr.mxu0 0.0
      %524 = vmatpush1.msra.mxu0 0.0
      %525 = vmatprep.subr.mxu0 0.0
      %526 = vmatpush1.msra.mxu0 0.0
      %527 = vmatprep.subr.mxu0 0.0
      %528 = vmatpush1.msra.mxu0 0.0
      %529 = vmatprep.subr.mxu0 0.0
      %530 = vmatpush1.msra.mxu0 0.0
      %531 = vmatprep.subr.mxu0 0.0
      %532 = vmatpush1.msra.mxu0 0.0
      %533 = vmatprep.subr.mxu0 0.0
      %534 = vmatpush1.msra.mxu0 0.0
      %535 = vmatprep.subr.mxu0 0.0
      %536 = vmatpush1.msra.mxu0 0.0
      %537 = vmatprep.subr.mxu0 0.0
      %538 = vmatpush1.msra.mxu0 0.0
      %539 = vmatprep.subr.mxu0 0.0
      %540 = vmatpush1.msra.mxu0 0.0
      %541 = vmatprep.subr.mxu0 0.0
      %542 = vmatpush1.msra.mxu0 0.0
      %543 = vmatprep.mubr.f32.mxu0 0.0
      %544 = vmatmul.mubr.f32.gmra.mrb[0].mxu0 %v380
      %v545 = vpop.f32.mrb[0].mxu0
      %v546 = vadd.f32 %v454, %v545
      %v547 = vpop.f32.mrb[0].mxu0
      %548 = vdwg.mxu0
      %549 = vset.pattern.permute.xlu0 2
      %550 = vperm.xlu0 %549, %v342
      %v551 = vpop.permute.xlu0 %550
      %v561 = vrot.slane %v334, 7
      %v562 = vsel %vm357, %v561, %v333
      %v563 = vrot.slane %v335, 6
      %v564 = vsel %vm360, %v563, %v562
      %v565 = vrot.slane %v336, 5
      %v566 = vsel %vm363, %v565, %v564
      %v567 = vrot.slane %v337, 4
      %v568 = vsel %vm366, %v567, %v566
      %v569 = vrot.slane %v338, 3
      %v570 = vsel %vm369, %v569, %v568
      %v571 = vrot.slane %v339, 2
      %v572 = vsel %vm372, %v571, %v570
      %v573 = vrot.slane %v340, 1
      %v574 = vsel %vm375, %v573, %v572
      %576 = vmatprep.subr.mxu0 0.0
      %577 = vmatpush1.msra.mxu0 %v574
      %578 = vmatprep.subr.mxu0 0.0
      %579 = vmatpush1.msra.mxu0 0.0
      %580 = vmatprep.subr.mxu0 0.0
      %581 = vmatpush1.msra.mxu0 0.0
      %582 = vmatprep.subr.mxu0 0.0
      %583 = vmatpush1.msra.mxu0 0.0
      %584 = vmatprep.subr.mxu0 0.0
      %585 = vmatpush1.msra.mxu0 0.0
      %586 = vmatprep.subr.mxu0 0.0
      %587 = vmatpush1.msra.mxu0 0.0
      %588 = vmatprep.subr.mxu0 0.0
      %589 = vmatpush1.msra.mxu0 0.0
      %590 = vmatprep.subr.mxu0 0.0
      %591 = vmatpush1.msra.mxu0 0.0
      %592 = vmatprep.subr.mxu0 0.0
      %593 = vmatpush1.msra.mxu0 0.0
      %594 = vmatprep.subr.mxu0 0.0
      %595 = vmatpush1.msra.mxu0 0.0
      %596 = vmatprep.subr.mxu0 0.0
      %597 = vmatpush1.msra.mxu0 0.0
      %598 = vmatprep.subr.mxu0 0.0
      %599 = vmatpush1.msra.mxu0 0.0
      %600 = vmatprep.subr.mxu0 0.0
      %601 = vmatpush1.msra.mxu0 0.0
      %602 = vmatprep.subr.mxu0 0.0
      %603 = vmatpush1.msra.mxu0 0.0
      %604 = vmatprep.subr.mxu0 0.0
      %605 = vmatpush1.msra.mxu0 0.0
      %606 = vmatprep.subr.mxu0 0.0
      %607 = vmatpush1.msra.mxu0 0.0
      %608 = vmatprep.subr.mxu0 0.0
      %609 = vmatpush1.msra.mxu0 0.0
      %610 = vmatprep.subr.mxu0 0.0
      %611 = vmatpush1.msra.mxu0 0.0
      %612 = vmatprep.subr.mxu0 0.0
      %613 = vmatpush1.msra.mxu0 0.0
      %614 = vmatprep.subr.mxu0 0.0
      %615 = vmatpush1.msra.mxu0 0.0
      %616 = vmatprep.subr.mxu0 0.0
      %617 = vmatpush1.msra.mxu0 0.0
      %618 = vmatprep.subr.mxu0 0.0
      %619 = vmatpush1.msra.mxu0 0.0
      %620 = vmatprep.subr.mxu0 0.0
      %621 = vmatpush1.msra.mxu0 0.0
      %622 = vmatprep.subr.mxu0 0.0
      %623 = vmatpush1.msra.mxu0 0.0
      %624 = vmatprep.subr.mxu0 0.0
      %625 = vmatpush1.msra.mxu0 0.0
      %626 = vmatprep.subr.mxu0 0.0
      %627 = vmatpush1.msra.mxu0 0.0
      %628 = vmatprep.subr.mxu0 0.0
      %629 = vmatpush1.msra.mxu0 0.0
      %630 = vmatprep.subr.mxu0 0.0
      %631 = vmatpush1.msra.mxu0 0.0
      %632 = vmatprep.subr.mxu0 0.0
      %633 = vmatpush1.msra.mxu0 0.0
      %634 = vmatprep.subr.mxu0 0.0
      %635 = vmatpush1.msra.mxu0 0.0
      %636 = vmatprep.subr.mxu0 0.0
      %637 = vmatpush1.msra.mxu0 0.0
      %638 = vmatprep.subr.mxu0 0.0
      %639 = vmatpush1.msra.mxu0 0.0
      %640 = vmatprep.mubr.f32.mxu0 0.0
      %641 = vmatmul.mubr.f32.gmra.mrb[0].mxu0 %v380
      %v642 = vpop.f32.mrb[0].mxu0
      %v643 = vadd.f32 %v551, %v642
      %v644 = vpop.f32.mrb[0].mxu0
      %645 = vdwg.mxu0
      %s646 = scalar_lea.vmem %s1, 8
      %v647 = vld [vmem:[%s646] sm:$0xff]
      %s648 = scalar_lea.vmem %s2, 8
      %v649 = vld [vmem:[%s648] sm:$0xff]
      %651 = vset.pattern.permute.xlu0 0
      %652 = vperm.xlu0 %651, %v649
      %v653 = vpop.permute.xlu0 %652
      %v656 = vsel %vm378, %v647, 0
      %658 = vmatprep.subr.mxu0 0.0
      %659 = vmatpush1.msra.mxu0 %v376
      %660 = vmatprep.subr.mxu0 0.0
      %661 = vmatpush1.msra.mxu0 0.0
      %662 = vmatprep.subr.mxu0 0.0
      %663 = vmatpush1.msra.mxu0 0.0
      %664 = vmatprep.subr.mxu0 0.0
      %665 = vmatpush1.msra.mxu0 0.0
      %666 = vmatprep.subr.mxu0 0.0
      %667 = vmatpush1.msra.mxu0 0.0
      %668 = vmatprep.subr.mxu0 0.0
      %669 = vmatpush1.msra.mxu0 0.0
      %670 = vmatprep.subr.mxu0 0.0
      %671 = vmatpush1.msra.mxu0 0.0
      %672 = vmatprep.subr.mxu0 0.0
      %673 = vmatpush1.msra.mxu0 0.0
      %674 = vmatprep.subr.mxu0 0.0
      %675 = vmatpush1.msra.mxu0 0.0
      %676 = vmatprep.subr.mxu0 0.0
      %677 = vmatpush1.msra.mxu0 0.0
      %678 = vmatprep.subr.mxu0 0.0
      %679 = vmatpush1.msra.mxu0 0.0
      %680 = vmatprep.subr.mxu0 0.0
      %681 = vmatpush1.msra.mxu0 0.0
      %682 = vmatprep.subr.mxu0 0.0
      %683 = vmatpush1.msra.mxu0 0.0
      %684 = vmatprep.subr.mxu0 0.0
      %685 = vmatpush1.msra.mxu0 0.0
      %686 = vmatprep.subr.mxu0 0.0
      %687 = vmatpush1.msra.mxu0 0.0
      %688 = vmatprep.subr.mxu0 0.0
      %689 = vmatpush1.msra.mxu0 0.0
      %690 = vmatprep.subr.mxu0 0.0
      %691 = vmatpush1.msra.mxu0 0.0
      %692 = vmatprep.subr.mxu0 0.0
      %693 = vmatpush1.msra.mxu0 0.0
      %694 = vmatprep.subr.mxu0 0.0
      %695 = vmatpush1.msra.mxu0 0.0
      %696 = vmatprep.subr.mxu0 0.0
      %697 = vmatpush1.msra.mxu0 0.0
      %698 = vmatprep.subr.mxu0 0.0
      %699 = vmatpush1.msra.mxu0 0.0
      %700 = vmatprep.subr.mxu0 0.0
      %701 = vmatpush1.msra.mxu0 0.0
      %702 = vmatprep.subr.mxu0 0.0
      %703 = vmatpush1.msra.mxu0 0.0
      %704 = vmatprep.subr.mxu0 0.0
      %705 = vmatpush1.msra.mxu0 0.0
      %706 = vmatprep.subr.mxu0 0.0
      %707 = vmatpush1.msra.mxu0 0.0
      %708 = vmatprep.subr.mxu0 0.0
      %709 = vmatpush1.msra.mxu0 0.0
      %710 = vmatprep.subr.mxu0 0.0
      %711 = vmatpush1.msra.mxu0 0.0
      %712 = vmatprep.subr.mxu0 0.0
      %713 = vmatpush1.msra.mxu0 0.0
      %714 = vmatprep.subr.mxu0 0.0
      %715 = vmatpush1.msra.mxu0 0.0
      %716 = vmatprep.subr.mxu0 0.0
      %717 = vmatpush1.msra.mxu0 0.0
      %718 = vmatprep.subr.mxu0 0.0
      %719 = vmatpush1.msra.mxu0 0.0
      %720 = vmatprep.subr.mxu0 0.0
      %721 = vmatpush1.msra.mxu0 0.0
      %722 = vmatprep.mubr.f32.mxu0 0.0
      %723 = vmatmul.mubr.f32.gmra.mrb[0].mxu0 %v656
      %v724 = vpop.f32.mrb[0].mxu0
      %v725 = vadd.f32 %v653, %v724
      %v726 = vpop.f32.mrb[0].mxu0
      %727 = vdwg.mxu0
      %728 = vset.pattern.permute.xlu0 1
      %729 = vperm.xlu0 %728, %v649
      %v730 = vpop.permute.xlu0 %729
      %732 = vmatprep.subr.mxu0 0.0
      %733 = vmatpush1.msra.mxu0 %v477
      %734 = vmatprep.subr.mxu0 0.0
      %735 = vmatpush1.msra.mxu0 0.0
      %736 = vmatprep.subr.mxu0 0.0
      %737 = vmatpush1.msra.mxu0 0.0
      %738 = vmatprep.subr.mxu0 0.0
      %739 = vmatpush1.msra.mxu0 0.0
      %740 = vmatprep.subr.mxu0 0.0
      %741 = vmatpush1.msra.mxu0 0.0
      %742 = vmatprep.subr.mxu0 0.0
      %743 = vmatpush1.msra.mxu0 0.0
      %744 = vmatprep.subr.mxu0 0.0
      %745 = vmatpush1.msra.mxu0 0.0
      %746 = vmatprep.subr.mxu0 0.0
      %747 = vmatpush1.msra.mxu0 0.0
      %748 = vmatprep.subr.mxu0 0.0
      %749 = vmatpush1.msra.mxu0 0.0
      %750 = vmatprep.subr.mxu0 0.0
      %751 = vmatpush1.msra.mxu0 0.0
      %752 = vmatprep.subr.mxu0 0.0
      %753 = vmatpush1.msra.mxu0 0.0
      %754 = vmatprep.subr.mxu0 0.0
      %755 = vmatpush1.msra.mxu0 0.0
      %756 = vmatprep.subr.mxu0 0.0
      %757 = vmatpush1.msra.mxu0 0.0
      %758 = vmatprep.subr.mxu0 0.0
      %759 = vmatpush1.msra.mxu0 0.0
      %760 = vmatprep.subr.mxu0 0.0
      %761 = vmatpush1.msra.mxu0 0.0
      %762 = vmatprep.subr.mxu0 0.0
      %763 = vmatpush1.msra.mxu0 0.0
      %764 = vmatprep.subr.mxu0 0.0
      %765 = vmatpush1.msra.mxu0 0.0
      %766 = vmatprep.subr.mxu0 0.0
      %767 = vmatpush1.msra.mxu0 0.0
      %768 = vmatprep.subr.mxu0 0.0
      %769 = vmatpush1.msra.mxu0 0.0
      %770 = vmatprep.subr.mxu0 0.0
      %771 = vmatpush1.msra.mxu0 0.0
      %772 = vmatprep.subr.mxu0 0.0
      %773 = vmatpush1.msra.mxu0 0.0
      %774 = vmatprep.subr.mxu0 0.0
      %775 = vmatpush1.msra.mxu0 0.0
      %776 = vmatprep.subr.mxu0 0.0
      %777 = vmatpush1.msra.mxu0 0.0
      %778 = vmatprep.subr.mxu0 0.0
      %779 = vmatpush1.msra.mxu0 0.0
      %780 = vmatprep.subr.mxu0 0.0
      %781 = vmatpush1.msra.mxu0 0.0
      %782 = vmatprep.subr.mxu0 0.0
      %783 = vmatpush1.msra.mxu0 0.0
      %784 = vmatprep.subr.mxu0 0.0
      %785 = vmatpush1.msra.mxu0 0.0
      %786 = vmatprep.subr.mxu0 0.0
      %787 = vmatpush1.msra.mxu0 0.0
      %788 = vmatprep.subr.mxu0 0.0
      %789 = vmatpush1.msra.mxu0 0.0
      %790 = vmatprep.subr.mxu0 0.0
      %791 = vmatpush1.msra.mxu0 0.0
      %792 = vmatprep.subr.mxu0 0.0
      %793 = vmatpush1.msra.mxu0 0.0
      %794 = vmatprep.subr.mxu0 0.0
      %795 = vmatpush1.msra.mxu0 0.0
      %796 = vmatprep.mubr.f32.mxu0 0.0
      %797 = vmatmul.mubr.f32.gmra.mrb[0].mxu0 %v656
      %v798 = vpop.f32.mrb[0].mxu0
      %v799 = vadd.f32 %v730, %v798
      %v800 = vpop.f32.mrb[0].mxu0
      %801 = vdwg.mxu0
      %802 = vset.pattern.permute.xlu0 2
      %803 = vperm.xlu0 %802, %v649
      %v804 = vpop.permute.xlu0 %803
      %806 = vmatprep.subr.mxu0 0.0
      %807 = vmatpush1.msra.mxu0 %v574
      %808 = vmatprep.subr.mxu0 0.0
      %809 = vmatpush1.msra.mxu0 0.0
      %810 = vmatprep.subr.mxu0 0.0
      %811 = vmatpush1.msra.mxu0 0.0
      %812 = vmatprep.subr.mxu0 0.0
      %813 = vmatpush1.msra.mxu0 0.0
      %814 = vmatprep.subr.mxu0 0.0
      %815 = vmatpush1.msra.mxu0 0.0
      %816 = vmatprep.subr.mxu0 0.0
      %817 = vmatpush1.msra.mxu0 0.0
      %818 = vmatprep.subr.mxu0 0.0
      %819 = vmatpush1.msra.mxu0 0.0
      %820 = vmatprep.subr.mxu0 0.0
      %821 = vmatpush1.msra.mxu0 0.0
      %822 = vmatprep.subr.mxu0 0.0
      %823 = vmatpush1.msra.mxu0 0.0
      %824 = vmatprep.subr.mxu0 0.0
      %825 = vmatpush1.msra.mxu0 0.0
      %826 = vmatprep.subr.mxu0 0.0
      %827 = vmatpush1.msra.mxu0 0.0
      %828 = vmatprep.subr.mxu0 0.0
      %829 = vmatpush1.msra.mxu0 0.0
      %830 = vmatprep.subr.mxu0 0.0
      %831 = vmatpush1.msra.mxu0 0.0
      %832 = vmatprep.subr.mxu0 0.0
      %833 = vmatpush1.msra.mxu0 0.0
      %834 = vmatprep.subr.mxu0 0.0
      %835 = vmatpush1.msra.mxu0 0.0
      %836 = vmatprep.subr.mxu0 0.0
      %837 = vmatpush1.msra.mxu0 0.0
      %838 = vmatprep.subr.mxu0 0.0
      %839 = vmatpush1.msra.mxu0 0.0
      %840 = vmatprep.subr.mxu0 0.0
      %841 = vmatpush1.msra.mxu0 0.0
      %842 = vmatprep.subr.mxu0 0.0
      %843 = vmatpush1.msra.mxu0 0.0
      %844 = vmatprep.subr.mxu0 0.0
      %845 = vmatpush1.msra.mxu0 0.0
      %846 = vmatprep.subr.mxu0 0.0
      %847 = vmatpush1.msra.mxu0 0.0
      %848 = vmatprep.subr.mxu0 0.0
      %849 = vmatpush1.msra.mxu0 0.0
      %850 = vmatprep.subr.mxu0 0.0
      %851 = vmatpush1.msra.mxu0 0.0
      %852 = vmatprep.subr.mxu0 0.0
      %853 = vmatpush1.msra.mxu0 0.0
      %854 = vmatprep.subr.mxu0 0.0
      %855 = vmatpush1.msra.mxu0 0.0
      %856 = vmatprep.subr.mxu0 0.0
      %857 = vmatpush1.msra.mxu0 0.0
      %858 = vmatprep.subr.mxu0 0.0
      %859 = vmatpush1.msra.mxu0 0.0
      %860 = vmatprep.subr.mxu0 0.0
      %861 = vmatpush1.msra.mxu0 0.0
      %862 = vmatprep.subr.mxu0 0.0
      %863 = vmatpush1.msra.mxu0 0.0
      %864 = vmatprep.subr.mxu0 0.0
      %865 = vmatpush1.msra.mxu0 0.0
      %866 = vmatprep.subr.mxu0 0.0
      %867 = vmatpush1.msra.mxu0 0.0
      %868 = vmatprep.subr.mxu0 0.0
      %869 = vmatpush1.msra.mxu0 0.0
      %870 = vmatprep.mubr.f32.mxu0 0.0
      %871 = vmatmul.mubr.f32.gmra.mrb[0].mxu0 %v656
      %v872 = vpop.f32.mrb[0].mxu0
      %v873 = vadd.f32 %v804, %v872
      %v874 = vpop.f32.mrb[0].mxu0
      %875 = vdwg.mxu0
      %s876 = scalar_lea.vmem %s1, 16
      %v877 = vld [vmem:[%s876] sm:$0xff]
      %s878 = scalar_lea.vmem %s2, 16
      %v879 = vld [vmem:[%s878] sm:$0xff]
      %881 = vset.pattern.permute.xlu0 0
      %882 = vperm.xlu0 %881, %v879
      %v883 = vpop.permute.xlu0 %882
      %v886 = vsel %vm378, %v877, 0
      %888 = vmatprep.subr.mxu0 0.0
      %889 = vmatpush1.msra.mxu0 %v376
      %890 = vmatprep.subr.mxu0 0.0
      %891 = vmatpush1.msra.mxu0 0.0
      %892 = vmatprep.subr.mxu0 0.0
      %893 = vmatpush1.msra.mxu0 0.0
      %894 = vmatprep.subr.mxu0 0.0
      %895 = vmatpush1.msra.mxu0 0.0
      %896 = vmatprep.subr.mxu0 0.0
      %897 = vmatpush1.msra.mxu0 0.0
      %898 = vmatprep.subr.mxu0 0.0
      %899 = vmatpush1.msra.mxu0 0.0
      %900 = vmatprep.subr.mxu0 0.0
      %901 = vmatpush1.msra.mxu0 0.0
      %902 = vmatprep.subr.mxu0 0.0
      %903 = vmatpush1.msra.mxu0 0.0
      %904 = vmatprep.subr.mxu0 0.0
      %905 = vmatpush1.msra.mxu0 0.0
      %906 = vmatprep.subr.mxu0 0.0
      %907 = vmatpush1.msra.mxu0 0.0
      %908 = vmatprep.subr.mxu0 0.0
      %909 = vmatpush1.msra.mxu0 0.0
      %910 = vmatprep.subr.mxu0 0.0
      %911 = vmatpush1.msra.mxu0 0.0
      %912 = vmatprep.subr.mxu0 0.0
      %913 = vmatpush1.msra.mxu0 0.0
      %914 = vmatprep.subr.mxu0 0.0
      %915 = vmatpush1.msra.mxu0 0.0
      %916 = vmatprep.subr.mxu0 0.0
      %917 = vmatpush1.msra.mxu0 0.0
      %918 = vmatprep.subr.mxu0 0.0
      %919 = vmatpush1.msra.mxu0 0.0
      %920 = vmatprep.subr.mxu0 0.0
      %921 = vmatpush1.msra.mxu0 0.0
      %922 = vmatprep.subr.mxu0 0.0
      %923 = vmatpush1.msra.mxu0 0.0
      %924 = vmatprep.subr.mxu0 0.0
      %925 = vmatpush1.msra.mxu0 0.0
      %926 = vmatprep.subr.mxu0 0.0
      %927 = vmatpush1.msra.mxu0 0.0
      %928 = vmatprep.subr.mxu0 0.0
      %929 = vmatpush1.msra.mxu0 0.0
      %930 = vmatprep.subr.mxu0 0.0
      %931 = vmatpush1.msra.mxu0 0.0
      %932 = vmatprep.subr.mxu0 0.0
      %933 = vmatpush1.msra.mxu0 0.0
      %934 = vmatprep.subr.mxu0 0.0
      %935 = vmatpush1.msra.mxu0 0.0
      %936 = vmatprep.subr.mxu0 0.0
      %937 = vmatpush1.msra.mxu0 0.0
      %938 = vmatprep.subr.mxu0 0.0
      %939 = vmatpush1.msra.mxu0 0.0
      %940 = vmatprep.subr.mxu0 0.0
      %941 = vmatpush1.msra.mxu0 0.0
      %942 = vmatprep.subr.mxu0 0.0
      %943 = vmatpush1.msra.mxu0 0.0
      %944 = vmatprep.subr.mxu0 0.0
      %945 = vmatpush1.msra.mxu0 0.0
      %946 = vmatprep.subr.mxu0 0.0
      %947 = vmatpush1.msra.mxu0 0.0
      %948 = vmatprep.subr.mxu0 0.0
      %949 = vmatpush1.msra.mxu0 0.0
      %950 = vmatprep.subr.mxu0 0.0
      %951 = vmatpush1.msra.mxu0 0.0
      %952 = vmatprep.mubr.f32.mxu0 0.0
      %953 = vmatmul.mubr.f32.gmra.mrb[0].mxu0 %v886
      %v954 = vpop.f32.mrb[0].mxu0
      %v955 = vadd.f32 %v883, %v954
      %v956 = vpop.f32.mrb[0].mxu0
      %957 = vdwg.mxu0
      %958 = vset.pattern.permute.xlu0 1
      %959 = vperm.xlu0 %958, %v879
      %v960 = vpop.permute.xlu0 %959
      %962 = vmatprep.subr.mxu0 0.0
      %963 = vmatpush1.msra.mxu0 %v477
      %964 = vmatprep.subr.mxu0 0.0
      %965 = vmatpush1.msra.mxu0 0.0
      %966 = vmatprep.subr.mxu0 0.0
      %967 = vmatpush1.msra.mxu0 0.0
      %968 = vmatprep.subr.mxu0 0.0
      %969 = vmatpush1.msra.mxu0 0.0
      %970 = vmatprep.subr.mxu0 0.0
      %971 = vmatpush1.msra.mxu0 0.0
      %972 = vmatprep.subr.mxu0 0.0
      %973 = vmatpush1.msra.mxu0 0.0
      %974 = vmatprep.subr.mxu0 0.0
      %975 = vmatpush1.msra.mxu0 0.0
      %976 = vmatprep.subr.mxu0 0.0
      %977 = vmatpush1.msra.mxu0 0.0
      %978 = vmatprep.subr.mxu0 0.0
      %979 = vmatpush1.msra.mxu0 0.0
      %980 = vmatprep.subr.mxu0 0.0
      %981 = vmatpush1.msra.mxu0 0.0
      %982 = vmatprep.subr.mxu0 0.0
      %983 = vmatpush1.msra.mxu0 0.0
      %984 = vmatprep.subr.mxu0 0.0
      %985 = vmatpush1.msra.mxu0 0.0
      %986 = vmatprep.subr.mxu0 0.0
      %987 = vmatpush1.msra.mxu0 0.0
      %988 = vmatprep.subr.mxu0 0.0
      %989 = vmatpush1.msra.mxu0 0.0
      %990 = vmatprep.subr.mxu0 0.0
      %991 = vmatpush1.msra.mxu0 0.0
      %992 = vmatprep.subr.mxu0 0.0
      %993 = vmatpush1.msra.mxu0 0.0
      %994 = vmatprep.subr.mxu0 0.0
      %995 = vmatpush1.msra.mxu0 0.0
      %996 = vmatprep.subr.mxu0 0.0
      %997 = vmatpush1.msra.mxu0 0.0
      %998 = vmatprep.subr.mxu0 0.0
      %999 = vmatpush1.msra.mxu0 0.0
      %1000 = vmatprep.subr.mxu0 0.0
      %1001 = vmatpush1.msra.mxu0 0.0
      %1002 = vmatprep.subr.mxu0 0.0
      %1003 = vmatpush1.msra.mxu0 0.0
      %1004 = vmatprep.subr.mxu0 0.0
      %1005 = vmatpush1.msra.mxu0 0.0
      %1006 = vmatprep.subr.mxu0 0.0
      %1007 = vmatpush1.msra.mxu0 0.0
      %1008 = vmatprep.subr.mxu0 0.0
      %1009 = vmatpush1.msra.mxu0 0.0
      %1010 = vmatprep.subr.mxu0 0.0
      %1011 = vmatpush1.msra.mxu0 0.0
      %1012 = vmatprep.subr.mxu0 0.0
      %1013 = vmatpush1.msra.mxu0 0.0
      %1014 = vmatprep.subr.mxu0 0.0
      %1015 = vmatpush1.msra.mxu0 0.0
      %1016 = vmatprep.subr.mxu0 0.0
      %1017 = vmatpush1.msra.mxu0 0.0
      %1018 = vmatprep.subr.mxu0 0.0
      %1019 = vmatpush1.msra.mxu0 0.0
      %1020 = vmatprep.subr.mxu0 0.0
      %1021 = vmatpush1.msra.mxu0 0.0
      %1022 = vmatprep.subr.mxu0 0.0
      %1023 = vmatpush1.msra.mxu0 0.0
      %1024 = vmatprep.subr.mxu0 0.0
      %1025 = vmatpush1.msra.mxu0 0.0
      %1026 = vmatprep.mubr.f32.mxu0 0.0
      %1027 = vmatmul.mubr.f32.gmra.mrb[0].mxu0 %v886
      %v1028 = vpop.f32.mrb[0].mxu0
      %v1029 = vadd.f32 %v960, %v1028
      %v1030 = vpop.f32.mrb[0].mxu0
      %1031 = vdwg.mxu0
      %1032 = vset.pattern.permute.xlu0 2
      %1033 = vperm.xlu0 %1032, %v879
      %v1034 = vpop.permute.xlu0 %1033
      %1036 = vmatprep.subr.mxu0 0.0
      %1037 = vmatpush1.msra.mxu0 %v574
      %1038 = vmatprep.subr.mxu0 0.0
      %1039 = vmatpush1.msra.mxu0 0.0
      %1040 = vmatprep.subr.mxu0 0.0
      %1041 = vmatpush1.msra.mxu0 0.0
      %1042 = vmatprep.subr.mxu0 0.0
      %1043 = vmatpush1.msra.mxu0 0.0
      %1044 = vmatprep.subr.mxu0 0.0
      %1045 = vmatpush1.msra.mxu0 0.0
      %1046 = vmatprep.subr.mxu0 0.0
      %1047 = vmatpush1.msra.mxu0 0.0
      %1048 = vmatprep.subr.mxu0 0.0
      %1049 = vmatpush1.msra.mxu0 0.0
      %1050 = vmatprep.subr.mxu0 0.0
      %1051 = vmatpush1.msra.mxu0 0.0
      %1052 = vmatprep.subr.mxu0 0.0
      %1053 = vmatpush1.msra.mxu0 0.0
      %1054 = vmatprep.subr.mxu0 0.0
      %1055 = vmatpush1.msra.mxu0 0.0
      %1056 = vmatprep.subr.mxu0 0.0
      %1057 = vmatpush1.msra.mxu0 0.0
      %1058 = vmatprep.subr.mxu0 0.0
      %1059 = vmatpush1.msra.mxu0 0.0
      %1060 = vmatprep.subr.mxu0 0.0
      %1061 = vmatpush1.msra.mxu0 0.0
      %1062 = vmatprep.subr.mxu0 0.0
      %1063 = vmatpush1.msra.mxu0 0.0
      %1064 = vmatprep.subr.mxu0 0.0
      %1065 = vmatpush1.msra.mxu0 0.0
      %1066 = vmatprep.subr.mxu0 0.0
      %1067 = vmatpush1.msra.mxu0 0.0
      %1068 = vmatprep.subr.mxu0 0.0
      %1069 = vmatpush1.msra.mxu0 0.0
      %1070 = vmatprep.subr.mxu0 0.0
      %1071 = vmatpush1.msra.mxu0 0.0
      %1072 = vmatprep.subr.mxu0 0.0
      %1073 = vmatpush1.msra.mxu0 0.0
      %1074 = vmatprep.subr.mxu0 0.0
      %1075 = vmatpush1.msra.mxu0 0.0
      %1076 = vmatprep.subr.mxu0 0.0
      %1077 = vmatpush1.msra.mxu0 0.0
      %1078 = vmatprep.subr.mxu0 0.0
      %1079 = vmatpush1.msra.mxu0 0.0
      %1080 = vmatprep.subr.mxu0 0.0
      %1081 = vmatpush1.msra.mxu0 0.0
      %1082 = vmatprep.subr.mxu0 0.0
      %1083 = vmatpush1.msra.mxu0 0.0
      %1084 = vmatprep.subr.mxu0 0.0
      %1085 = vmatpush1.msra.mxu0 0.0
      %1086 = vmatprep.subr.mxu0 0.0
      %1087 = vmatpush1.msra.mxu0 0.0
      %1088 = vmatprep.subr.mxu0 0.0
      %1089 = vmatpush1.msra.mxu0 0.0
      %1090 = vmatprep.subr.mxu0 0.0
      %1091 = vmatpush1.msra.mxu0 0.0
      %1092 = vmatprep.subr.mxu0 0.0
      %1093 = vmatpush1.msra.mxu0 0.0
      %1094 = vmatprep.subr.mxu0 0.0
      %1095 = vmatpush1.msra.mxu0 0.0
      %1096 = vmatprep.subr.mxu0 0.0
      %1097 = vmatpush1.msra.mxu0 0.0
      %1098 = vmatprep.subr.mxu0 0.0
      %1099 = vmatpush1.msra.mxu0 0.0
      %1100 = vmatprep.mubr.f32.mxu0 0.0
      %1101 = vmatmul.mubr.f32.gmra.mrb[0].mxu0 %v886
      %v1102 = vpop.f32.mrb[0].mxu0
      %v1103 = vadd.f32 %v1034, %v1102
      %v1104 = vpop.f32.mrb[0].mxu0
      %1105 = vdwg.mxu0
      %1106 = vxpose.xlu0.b32.start [1/16] %v546, 128
      %1107 = vxpose.xlu0.b32.cont [2/16] 0.0, 128
      %1108 = vxpose.xlu0.b32.cont [3/16] 0.0, 128
      %1109 = vxpose.xlu0.b32.cont [4/16] 0.0, 128
      %1110 = vxpose.xlu0.b32.cont [5/16] 0.0, 128
      %1111 = vxpose.xlu0.b32.cont [6/16] 0.0, 128
      %1112 = vxpose.xlu0.b32.cont [7/16] 0.0, 128
      %1113 = vxpose.xlu0.b32.cont [8/16] 0.0, 128
      %1114 = vxpose.xlu0.b32.cont [9/16] 0.0, 128
      %1115 = vxpose.xlu0.b32.cont [10/16] 0.0, 128
      %1116 = vxpose.xlu0.b32.cont [11/16] 0.0, 128
      %1117 = vxpose.xlu0.b32.cont [12/16] 0.0, 128
      %1118 = vxpose.xlu0.b32.cont [13/16] 0.0, 128
      %1119 = vxpose.xlu0.b32.cont [14/16] 0.0, 128
      %1120 = vxpose.xlu0.b32.cont [15/16] 0.0, 128
      %1121 = vxpose.xlu0.b32.end [16/16] 0.0, 128
      %v1122 = vpop.trf.xlu0
      %v1123 = vpop.trf.xlu0
      %v1124 = vpop.trf.xlu0
      %v1125 = vpop.trf.xlu0
      %v1126 = vpop.trf.xlu0
      %v1127 = vpop.trf.xlu0
      %v1128 = vpop.trf.xlu0
      %v1129 = vpop.trf.xlu0
      %v1130 = vpop.trf.xlu0
      %v1131 = vpop.trf.xlu0
      %v1132 = vpop.trf.xlu0
      %v1133 = vpop.trf.xlu0
      %v1134 = vpop.trf.xlu0
      %v1135 = vpop.trf.xlu0
      %v1136 = vpop.trf.xlu0
      %v1137 = vpop.trf.xlu0
      %vm1138 = vcmask 31744
      %v1140 = vsel %vm1138, %v1122, 0
      %v1143 = vsel %vm1138, %v1123, 0
      %vm1145 = vcmask 1043456
      %v1147 = vsel %vm1145, %v799, 0
      %1149 = vmatprep.subr.mxu0 0.0
      %1150 = vmatpush1.msra.mxu0 %v1147
      %1151 = vmatprep.subr.mxu0 0.0
      %1152 = vmatpush1.msra.mxu0 0.0
      %1153 = vmatprep.subr.mxu0 0.0
      %1154 = vmatpush1.msra.mxu0 0.0
      %1155 = vmatprep.subr.mxu0 0.0
      %1156 = vmatpush1.msra.mxu0 0.0
      %1157 = vmatprep.subr.mxu0 0.0
      %1158 = vmatpush1.msra.mxu0 0.0
      %1159 = vmatprep.subr.mxu0 0.0
      %1160 = vmatpush1.msra.mxu0 0.0
      %1161 = vmatprep.subr.mxu0 0.0
      %1162 = vmatpush1.msra.mxu0 0.0
      %1163 = vmatprep.subr.mxu0 0.0
      %1164 = vmatpush1.msra.mxu0 0.0
      %1165 = vmatprep.subr.mxu0 0.0
      %1166 = vmatpush1.msra.mxu0 0.0
      %1167 = vmatprep.subr.mxu0 0.0
      %1168 = vmatpush1.msra.mxu0 0.0
      %1169 = vmatprep.subr.mxu0 0.0
      %1170 = vmatpush1.msra.mxu0 0.0
      %1171 = vmatprep.subr.mxu0 0.0
      %1172 = vmatpush1.msra.mxu0 0.0
      %1173 = vmatprep.subr.mxu0 0.0
      %1174 = vmatpush1.msra.mxu0 0.0
      %1175 = vmatprep.subr.mxu0 0.0
      %1176 = vmatpush1.msra.mxu0 0.0
      %1177 = vmatprep.subr.mxu0 0.0
      %1178 = vmatpush1.msra.mxu0 0.0
      %1179 = vmatprep.subr.mxu0 0.0
      %1180 = vmatpush1.msra.mxu0 0.0
      %1181 = vmatprep.subr.mxu0 0.0
      %1182 = vmatpush1.msra.mxu0 0.0
      %1183 = vmatprep.subr.mxu0 0.0
      %1184 = vmatpush1.msra.mxu0 0.0
      %1185 = vmatprep.subr.mxu0 0.0
      %1186 = vmatpush1.msra.mxu0 0.0
      %1187 = vmatprep.subr.mxu0 0.0
      %1188 = vmatpush1.msra.mxu0 0.0
      %1189 = vmatprep.subr.mxu0 0.0
      %1190 = vmatpush1.msra.mxu0 0.0
      %1191 = vmatprep.subr.mxu0 0.0
      %1192 = vmatpush1.msra.mxu0 0.0
      %1193 = vmatprep.subr.mxu0 0.0
      %1194 = vmatpush1.msra.mxu0 0.0
      %1195 = vmatprep.subr.mxu0 0.0
      %1196 = vmatpush1.msra.mxu0 0.0
      %1197 = vmatprep.subr.mxu0 0.0
      %1198 = vmatpush1.msra.mxu0 0.0
      %1199 = vmatprep.subr.mxu0 0.0
      %1200 = vmatpush1.msra.mxu0 0.0
      %1201 = vmatprep.subr.mxu0 0.0
      %1202 = vmatpush1.msra.mxu0 0.0
      %1203 = vmatprep.subr.mxu0 0.0
      %1204 = vmatpush1.msra.mxu0 0.0
      %1205 = vmatprep.subr.mxu0 0.0
      %1206 = vmatpush1.msra.mxu0 0.0
      %1207 = vmatprep.subr.mxu0 0.0
      %1208 = vmatpush1.msra.mxu0 0.0
      %1209 = vmatprep.subr.mxu0 0.0
      %1210 = vmatpush1.msra.mxu0 0.0
      %1211 = vmatprep.subr.mxu0 0.0
      %1212 = vmatpush1.msra.mxu0 0.0
      %1213 = vmatprep.mubr.f32.mxu0 0.0
      %1214 = vmatmul.mubr.f32.gmra.mrb[0].mxu0 %v1140
      %v1215 = vpop.f32.mrb[0].mxu0
      %v1216 = vadd.f32 0.0, %v1215
      %v1217 = vpop.f32.mrb[0].mxu0
      %1218 = vmatprep.mubr.f32.mxu0 0.0
      %1219 = vmatmul.mubr.f32.gmra.mrb[0].mxu0 %v1143
      %v1220 = vpop.f32.mrb[0].mxu0
      %v1221 = vadd.f32 0.0, %v1220
      %v1222 = vpop.f32.mrb[0].mxu0
      %1223 = vdwg.mxu0
      %1224 = vxpose.xlu0.b32.start [1/16] %v449, 128
      %1225 = vxpose.xlu0.b32.cont [2/16] 0.0, 128
      %1226 = vxpose.xlu0.b32.cont [3/16] 0.0, 128
      %1227 = vxpose.xlu0.b32.cont [4/16] 0.0, 128
      %1228 = vxpose.xlu0.b32.cont [5/16] 0.0, 128
      %1229 = vxpose.xlu0.b32.cont [6/16] 0.0, 128
      %1230 = vxpose.xlu0.b32.cont [7/16] 0.0, 128
      %1231 = vxpose.xlu0.b32.cont [8/16] 0.0, 128
      %1232 = vxpose.xlu0.b32.cont [9/16] 0.0, 128
      %1233 = vxpose.xlu0.b32.cont [10/16] 0.0, 128
      %1234 = vxpose.xlu0.b32.cont [11/16] 0.0, 128
      %1235 = vxpose.xlu0.b32.cont [12/16] 0.0, 128
      %1236 = vxpose.xlu0.b32.cont [13/16] 0.0, 128
      %1237 = vxpose.xlu0.b32.cont [14/16] 0.0, 128
      %1238 = vxpose.xlu0.b32.cont [15/16] 0.0, 128
      %1239 = vxpose.xlu0.b32.end [16/16] 0.0, 128
      %v1240 = vpop.trf.xlu0
      %v1241 = vpop.trf.xlu0
      %v1242 = vpop.trf.xlu0
      %v1243 = vpop.trf.xlu0
      %v1244 = vpop.trf.xlu0
      %v1245 = vpop.trf.xlu0
      %v1246 = vpop.trf.xlu0
      %v1247 = vpop.trf.xlu0
      %v1248 = vpop.trf.xlu0
      %v1249 = vpop.trf.xlu0
      %v1250 = vpop.trf.xlu0
      %v1251 = vpop.trf.xlu0
      %v1252 = vpop.trf.xlu0
      %v1253 = vpop.trf.xlu0
      %v1254 = vpop.trf.xlu0
      %v1255 = vpop.trf.xlu0
      %v1257 = vsel %vm1138, %v1240, 0
      %v1260 = vsel %vm1138, %v1241, 0
      %v1263 = vsel %vm1145, %v725, 0
      %1265 = vmatprep.subr.mxu0 0.0
      %1266 = vmatpush1.msra.mxu0 %v1263
      %1267 = vmatprep.subr.mxu0 0.0
      %1268 = vmatpush1.msra.mxu0 0.0
      %1269 = vmatprep.subr.mxu0 0.0
      %1270 = vmatpush1.msra.mxu0 0.0
      %1271 = vmatprep.subr.mxu0 0.0
      %1272 = vmatpush1.msra.mxu0 0.0
      %1273 = vmatprep.subr.mxu0 0.0
      %1274 = vmatpush1.msra.mxu0 0.0
      %1275 = vmatprep.subr.mxu0 0.0
      %1276 = vmatpush1.msra.mxu0 0.0
      %1277 = vmatprep.subr.mxu0 0.0
      %1278 = vmatpush1.msra.mxu0 0.0
      %1279 = vmatprep.subr.mxu0 0.0
      %1280 = vmatpush1.msra.mxu0 0.0
      %1281 = vmatprep.subr.mxu0 0.0
      %1282 = vmatpush1.msra.mxu0 0.0
      %1283 = vmatprep.subr.mxu0 0.0
      %1284 = vmatpush1.msra.mxu0 0.0
      %1285 = vmatprep.subr.mxu0 0.0
      %1286 = vmatpush1.msra.mxu0 0.0
      %1287 = vmatprep.subr.mxu0 0.0
      %1288 = vmatpush1.msra.mxu0 0.0
      %1289 = vmatprep.subr.mxu0 0.0
      %1290 = vmatpush1.msra.mxu0 0.0
      %1291 = vmatprep.subr.mxu0 0.0
      %1292 = vmatpush1.msra.mxu0 0.0
      %1293 = vmatprep.subr.mxu0 0.0
      %1294 = vmatpush1.msra.mxu0 0.0
      %1295 = vmatprep.subr.mxu0 0.0
      %1296 = vmatpush1.msra.mxu0 0.0
      %1297 = vmatprep.subr.mxu0 0.0
      %1298 = vmatpush1.msra.mxu0 0.0
      %1299 = vmatprep.subr.mxu0 0.0
      %1300 = vmatpush1.msra.mxu0 0.0
      %1301 = vmatprep.subr.mxu0 0.0
      %1302 = vmatpush1.msra.mxu0 0.0
      %1303 = vmatprep.subr.mxu0 0.0
      %1304 = vmatpush1.msra.mxu0 0.0
      %1305 = vmatprep.subr.mxu0 0.0
      %1306 = vmatpush1.msra.mxu0 0.0
      %1307 = vmatprep.subr.mxu0 0.0
      %1308 = vmatpush1.msra.mxu0 0.0
      %1309 = vmatprep.subr.mxu0 0.0
      %1310 = vmatpush1.msra.mxu0 0.0
      %1311 = vmatprep.subr.mxu0 0.0
      %1312 = vmatpush1.msra.mxu0 0.0
      %1313 = vmatprep.subr.mxu0 0.0
      %1314 = vmatpush1.msra.mxu0 0.0
      %1315 = vmatprep.subr.mxu0 0.0
      %1316 = vmatpush1.msra.mxu0 0.0
      %1317 = vmatprep.subr.mxu0 0.0
      %1318 = vmatpush1.msra.mxu0 0.0
      %1319 = vmatprep.subr.mxu0 0.0
      %1320 = vmatpush1.msra.mxu0 0.0
      %1321 = vmatprep.subr.mxu0 0.0
      %1322 = vmatpush1.msra.mxu0 0.0
      %1323 = vmatprep.subr.mxu0 0.0
      %1324 = vmatpush1.msra.mxu0 0.0
      %1325 = vmatprep.subr.mxu0 0.0
      %1326 = vmatpush1.msra.mxu0 0.0
      %1327 = vmatprep.subr.mxu0 0.0
      %1328 = vmatpush1.msra.mxu0 0.0
      %1329 = vmatprep.mubr.f32.mxu0 0.0
      %1330 = vmatmul.mubr.f32.gmra.mrb[0].mxu0 %v1257
      %v1331 = vpop.f32.mrb[0].mxu0
      %v1332 = vadd.f32 %v1216, %v1331
      %v1333 = vpop.f32.mrb[0].mxu0
      %1334 = vmatprep.mubr.f32.mxu0 0.0
      %1335 = vmatmul.mubr.f32.gmra.mrb[0].mxu0 %v1260
      %v1336 = vpop.f32.mrb[0].mxu0
      %v1337 = vadd.f32 %v1221, %v1336
      %v1338 = vpop.f32.mrb[0].mxu0
      %1339 = vdwg.mxu0
      %1340 = vxpose.xlu0.b32.start [1/16] %v643, 128
      %1341 = vxpose.xlu0.b32.cont [2/16] 0.0, 128
      %1342 = vxpose.xlu0.b32.cont [3/16] 0.0, 128
      %1343 = vxpose.xlu0.b32.cont [4/16] 0.0, 128
      %1344 = vxpose.xlu0.b32.cont [5/16] 0.0, 128
      %1345 = vxpose.xlu0.b32.cont [6/16] 0.0, 128
      %1346 = vxpose.xlu0.b32.cont [7/16] 0.0, 128
      %1347 = vxpose.xlu0.b32.cont [8/16] 0.0, 128
      %1348 = vxpose.xlu0.b32.cont [9/16] 0.0, 128
      %1349 = vxpose.xlu0.b32.cont [10/16] 0.0, 128
      %1350 = vxpose.xlu0.b32.cont [11/16] 0.0, 128
      %1351 = vxpose.xlu0.b32.cont [12/16] 0.0, 128
      %1352 = vxpose.xlu0.b32.cont [13/16] 0.0, 128
      %1353 = vxpose.xlu0.b32.cont [14/16] 0.0, 128
      %1354 = vxpose.xlu0.b32.cont [15/16] 0.0, 128
      %1355 = vxpose.xlu0.b32.end [16/16] 0.0, 128
      %v1356 = vpop.trf.xlu0
      %v1357 = vpop.trf.xlu0
      %v1358 = vpop.trf.xlu0
      %v1359 = vpop.trf.xlu0
      %v1360 = vpop.trf.xlu0
      %v1361 = vpop.trf.xlu0
      %v1362 = vpop.trf.xlu0
      %v1363 = vpop.trf.xlu0
      %v1364 = vpop.trf.xlu0
      %v1365 = vpop.trf.xlu0
      %v1366 = vpop.trf.xlu0
      %v1367 = vpop.trf.xlu0
      %v1368 = vpop.trf.xlu0
      %v1369 = vpop.trf.xlu0
      %v1370 = vpop.trf.xlu0
      %v1371 = vpop.trf.xlu0
      %v1373 = vsel %vm1138, %v1356, 0
      %v1376 = vsel %vm1138, %v1357, 0
      %v1379 = vsel %vm1145, %v873, 0
      %1381 = vmatprep.subr.mxu0 0.0
      %1382 = vmatpush1.msra.mxu0 %v1379
      %1383 = vmatprep.subr.mxu0 0.0
      %1384 = vmatpush1.msra.mxu0 0.0
      %1385 = vmatprep.subr.mxu0 0.0
      %1386 = vmatpush1.msra.mxu0 0.0
      %1387 = vmatprep.subr.mxu0 0.0
      %1388 = vmatpush1.msra.mxu0 0.0
      %1389 = vmatprep.subr.mxu0 0.0
      %1390 = vmatpush1.msra.mxu0 0.0
      %1391 = vmatprep.subr.mxu0 0.0
      %1392 = vmatpush1.msra.mxu0 0.0
      %1393 = vmatprep.subr.mxu0 0.0
      %1394 = vmatpush1.msra.mxu0 0.0
      %1395 = vmatprep.subr.mxu0 0.0
      %1396 = vmatpush1.msra.mxu0 0.0
      %1397 = vmatprep.subr.mxu0 0.0
      %1398 = vmatpush1.msra.mxu0 0.0
      %1399 = vmatprep.subr.mxu0 0.0
      %1400 = vmatpush1.msra.mxu0 0.0
      %1401 = vmatprep.subr.mxu0 0.0
      %1402 = vmatpush1.msra.mxu0 0.0
      %1403 = vmatprep.subr.mxu0 0.0
      %1404 = vmatpush1.msra.mxu0 0.0
      %1405 = vmatprep.subr.mxu0 0.0
      %1406 = vmatpush1.msra.mxu0 0.0
      %1407 = vmatprep.subr.mxu0 0.0
      %1408 = vmatpush1.msra.mxu0 0.0
      %1409 = vmatprep.subr.mxu0 0.0
      %1410 = vmatpush1.msra.mxu0 0.0
      %1411 = vmatprep.subr.mxu0 0.0
      %1412 = vmatpush1.msra.mxu0 0.0
      %1413 = vmatprep.subr.mxu0 0.0
      %1414 = vmatpush1.msra.mxu0 0.0
      %1415 = vmatprep.subr.mxu0 0.0
      %1416 = vmatpush1.msra.mxu0 0.0
      %1417 = vmatprep.subr.mxu0 0.0
      %1418 = vmatpush1.msra.mxu0 0.0
      %1419 = vmatprep.subr.mxu0 0.0
      %1420 = vmatpush1.msra.mxu0 0.0
      %1421 = vmatprep.subr.mxu0 0.0
      %1422 = vmatpush1.msra.mxu0 0.0
      %1423 = vmatprep.subr.mxu0 0.0
      %1424 = vmatpush1.msra.mxu0 0.0
      %1425 = vmatprep.subr.mxu0 0.0
      %1426 = vmatpush1.msra.mxu0 0.0
      %1427 = vmatprep.subr.mxu0 0.0
      %1428 = vmatpush1.msra.mxu0 0.0
      %1429 = vmatprep.subr.mxu0 0.0
      %1430 = vmatpush1.msra.mxu0 0.0
      %1431 = vmatprep.subr.mxu0 0.0
      %1432 = vmatpush1.msra.mxu0 0.0
      %1433 = vmatprep.subr.mxu0 0.0
      %1434 = vmatpush1.msra.mxu0 0.0
      %1435 = vmatprep.subr.mxu0 0.0
      %1436 = vmatpush1.msra.mxu0 0.0
      %1437 = vmatprep.subr.mxu0 0.0
      %1438 = vmatpush1.msra.mxu0 0.0
      %1439 = vmatprep.subr.mxu0 0.0
      %1440 = vmatpush1.msra.mxu0 0.0
      %1441 = vmatprep.subr.mxu0 0.0
      %1442 = vmatpush1.msra.mxu0 0.0
      %1443 = vmatprep.subr.mxu0 0.0
      %1444 = vmatpush1.msra.mxu0 0.0
      %1445 = vmatprep.mubr.f32.mxu0 0.0
      %1446 = vmatmul.mubr.f32.gmra.mrb[0].mxu0 %v1373
      %v1447 = vpop.f32.mrb[0].mxu0
      %v1448 = vadd.f32 0.0, %v1447
      %v1449 = vpop.f32.mrb[0].mxu0
      %1450 = vmatprep.mubr.f32.mxu0 0.0
      %1451 = vmatmul.mubr.f32.gmra.mrb[0].mxu0 %v1376
      %v1452 = vpop.f32.mrb[0].mxu0
      %v1453 = vadd.f32 0.0, %v1452
      %v1454 = vpop.f32.mrb[0].mxu0
      %1455 = vdwg.mxu0
      %v1456 = vadd.f32 %v1332, %v1448
      %v1457 = vadd.f32 %v1337, %v1453
      %v1458 = vmul.f32 %v1456, 0.28867513
      %v1459 = vmul.f32 %v1457, 0.28867513
      %vm1460 = vcmask 130048
      %v1461 = vsel %vm1460, %v1458, -inf
      %1462 = vmax.xlane.f32.xlu0 %v1461
      %v1463 = vpop.xlane.xlu0 %1462
      %v1464 = vsel %vm1460, %v1459, -inf
      %1465 = vmax.xlane.f32.xlu0 %v1464
      %v1466 = vpop.xlane.xlu0 %1465
      %v1467 = vsub.f32 %v1458, %v1463
      %v1468 = vsub.f32 %v1459, %v1466
      %v1469 = vmul.f32 %v1467, 1.442695
      %v1470 = vpow.pop %v1469
      %v1471 = vmul.f32 %v1468, 1.442695
      %v1472 = vpow.pop %v1471
      %v1473 = vsel %vm1460, %v1470, 0.0
      %1474 = vadd.xlane.f32.xlu0 %v1473
      %v1475 = vpop.xlane.xlu0 %1474
      %v1476 = vsel %vm1460, %v1472, 0.0
      %1477 = vadd.xlane.f32.xlu0 %v1476
      %v1478 = vpop.xlane.xlu0 %1477
      %v1479 = vrcp.pop %v1475
      %v1480 = vmul.f32 %v1470, %v1479
      %v1481 = vrcp.pop %v1478
      %v1482 = vmul.f32 %v1472, %v1481
      %v1484 = vsel %vm1460, %v955, 0
      %v1487 = vsel %vm1460, %v1480, 0
      %v1490 = vsel %vm1460, %v1482, 0
      %1492 = vmatprep.subr.mxu0 0.0
      %1493 = vmatpush1.xpose.msra.mxu0 %v1487
      %1494 = vmatprep.subr.mxu0 0.0
      %1495 = vmatpush1.xpose.msra.mxu0 %v1490
      %1496 = vmatprep.subr.mxu0 0.0
      %1497 = vmatpush1.xpose.msra.mxu0 0.0
      %1498 = vmatprep.subr.mxu0 0.0
      %1499 = vmatpush1.xpose.msra.mxu0 0.0
      %1500 = vmatprep.subr.mxu0 0.0
      %1501 = vmatpush1.xpose.msra.mxu0 0.0
      %1502 = vmatprep.subr.mxu0 0.0
      %1503 = vmatpush1.xpose.msra.mxu0 0.0
      %1504 = vmatprep.subr.mxu0 0.0
      %1505 = vmatpush1.xpose.msra.mxu0 0.0
      %1506 = vmatprep.subr.mxu0 0.0
      %1507 = vmatpush1.xpose.msra.mxu0 0.0
      %1508 = vmatprep.subr.mxu0 0.0
      %1509 = vmatpush1.xpose.msra.mxu0 0.0
      %1510 = vmatprep.subr.mxu0 0.0
      %1511 = vmatpush1.xpose.msra.mxu0 0.0
      %1512 = vmatprep.subr.mxu0 0.0
      %1513 = vmatpush1.xpose.msra.mxu0 0.0
      %1514 = vmatprep.subr.mxu0 0.0
      %1515 = vmatpush1.xpose.msra.mxu0 0.0
      %1516 = vmatprep.subr.mxu0 0.0
      %1517 = vmatpush1.xpose.msra.mxu0 0.0
      %1518 = vmatprep.subr.mxu0 0.0
      %1519 = vmatpush1.xpose.msra.mxu0 0.0
      %1520 = vmatprep.subr.mxu0 0.0
      %1521 = vmatpush1.xpose.msra.mxu0 0.0
      %1522 = vmatprep.subr.mxu0 0.0
      %1523 = vmatpush1.xpose.msra.mxu0 0.0
      %1524 = vmatprep.subr.mxu0 0.0
      %1525 = vmatpush1.xpose.msra.mxu0 0.0
      %1526 = vmatprep.subr.mxu0 0.0
      %1527 = vmatpush1.xpose.msra.mxu0 0.0
      %1528 = vmatprep.subr.mxu0 0.0
      %1529 = vmatpush1.xpose.msra.mxu0 0.0
      %1530 = vmatprep.subr.mxu0 0.0
      %1531 = vmatpush1.xpose.msra.mxu0 0.0
      %1532 = vmatprep.subr.mxu0 0.0
      %1533 = vmatpush1.xpose.msra.mxu0 0.0
      %1534 = vmatprep.subr.mxu0 0.0
      %1535 = vmatpush1.xpose.msra.mxu0 0.0
      %1536 = vmatprep.subr.mxu0 0.0
      %1537 = vmatpush1.xpose.msra.mxu0 0.0
      %1538 = vmatprep.subr.mxu0 0.0
      %1539 = vmatpush1.xpose.msra.mxu0 0.0
      %1540 = vmatprep.subr.mxu0 0.0
      %1541 = vmatpush1.xpose.msra.mxu0 0.0
      %1542 = vmatprep.subr.mxu0 0.0
      %1543 = vmatpush1.xpose.msra.mxu0 0.0
      %1544 = vmatprep.subr.mxu0 0.0
      %1545 = vmatpush1.xpose.msra.mxu0 0.0
      %1546 = vmatprep.subr.mxu0 0.0
      %1547 = vmatpush1.xpose.msra.mxu0 0.0
      %1548 = vmatprep.subr.mxu0 0.0
      %1549 = vmatpush1.xpose.msra.mxu0 0.0
      %1550 = vmatprep.subr.mxu0 0.0
      %1551 = vmatpush1.xpose.msra.mxu0 0.0
      %1552 = vmatprep.subr.mxu0 0.0
      %1553 = vmatpush1.xpose.msra.mxu0 0.0
      %1554 = vmatprep.subr.mxu0 0.0
      %1555 = vmatpush1.xpose.msra.mxu0 0.0
      %1556 = vmatprep.mubr.f32.mxu0 0.0
      %1557 = vmatmul.mubr.f32.gmra.mrb[0].mxu0 %v1484
      %v1558 = vpop.f32.mrb[0].mxu0
      %v1559 = vadd.f32 0.0, %v1558
      %v1560 = vpop.f32.mrb[0].mxu0
      %1561 = vdwg.mxu0
      %v1563 = vsel %vm1460, %v1029, 0
      %1565 = vmatprep.subr.mxu0 0.0
      %1566 = vmatpush1.xpose.msra.mxu0 %v1487
      %1567 = vmatprep.subr.mxu0 0.0
      %1568 = vmatpush1.xpose.msra.mxu0 %v1490
      %1569 = vmatprep.subr.mxu0 0.0
      %1570 = vmatpush1.xpose.msra.mxu0 0.0
      %1571 = vmatprep.subr.mxu0 0.0
      %1572 = vmatpush1.xpose.msra.mxu0 0.0
      %1573 = vmatprep.subr.mxu0 0.0
      %1574 = vmatpush1.xpose.msra.mxu0 0.0
      %1575 = vmatprep.subr.mxu0 0.0
      %1576 = vmatpush1.xpose.msra.mxu0 0.0
      %1577 = vmatprep.subr.mxu0 0.0
      %1578 = vmatpush1.xpose.msra.mxu0 0.0
      %1579 = vmatprep.subr.mxu0 0.0
      %1580 = vmatpush1.xpose.msra.mxu0 0.0
      %1581 = vmatprep.subr.mxu0 0.0
      %1582 = vmatpush1.xpose.msra.mxu0 0.0
      %1583 = vmatprep.subr.mxu0 0.0
      %1584 = vmatpush1.xpose.msra.mxu0 0.0
      %1585 = vmatprep.subr.mxu0 0.0
      %1586 = vmatpush1.xpose.msra.mxu0 0.0
      %1587 = vmatprep.subr.mxu0 0.0
      %1588 = vmatpush1.xpose.msra.mxu0 0.0
      %1589 = vmatprep.subr.mxu0 0.0
      %1590 = vmatpush1.xpose.msra.mxu0 0.0
      %1591 = vmatprep.subr.mxu0 0.0
      %1592 = vmatpush1.xpose.msra.mxu0 0.0
      %1593 = vmatprep.subr.mxu0 0.0
      %1594 = vmatpush1.xpose.msra.mxu0 0.0
      %1595 = vmatprep.subr.mxu0 0.0
      %1596 = vmatpush1.xpose.msra.mxu0 0.0
      %1597 = vmatprep.subr.mxu0 0.0
      %1598 = vmatpush1.xpose.msra.mxu0 0.0
      %1599 = vmatprep.subr.mxu0 0.0
      %1600 = vmatpush1.xpose.msra.mxu0 0.0
      %1601 = vmatprep.subr.mxu0 0.0
      %1602 = vmatpush1.xpose.msra.mxu0 0.0
      %1603 = vmatprep.subr.mxu0 0.0
      %1604 = vmatpush1.xpose.msra.mxu0 0.0
      %1605 = vmatprep.subr.mxu0 0.0
      %1606 = vmatpush1.xpose.msra.mxu0 0.0
      %1607 = vmatprep.subr.mxu0 0.0
      %1608 = vmatpush1.xpose.msra.mxu0 0.0
      %1609 = vmatprep.subr.mxu0 0.0
      %1610 = vmatpush1.xpose.msra.mxu0 0.0
      %1611 = vmatprep.subr.mxu0 0.0
      %1612 = vmatpush1.xpose.msra.mxu0 0.0
      %1613 = vmatprep.subr.mxu0 0.0
      %1614 = vmatpush1.xpose.msra.mxu0 0.0
      %1615 = vmatprep.subr.mxu0 0.0
      %1616 = vmatpush1.xpose.msra.mxu0 0.0
      %1617 = vmatprep.subr.mxu0 0.0
      %1618 = vmatpush1.xpose.msra.mxu0 0.0
      %1619 = vmatprep.subr.mxu0 0.0
      %1620 = vmatpush1.xpose.msra.mxu0 0.0
      %1621 = vmatprep.subr.mxu0 0.0
      %1622 = vmatpush1.xpose.msra.mxu0 0.0
      %1623 = vmatprep.subr.mxu0 0.0
      %1624 = vmatpush1.xpose.msra.mxu0 0.0
      %1625 = vmatprep.subr.mxu0 0.0
      %1626 = vmatpush1.xpose.msra.mxu0 0.0
      %1627 = vmatprep.subr.mxu0 0.0
      %1628 = vmatpush1.xpose.msra.mxu0 0.0
      %1629 = vmatprep.mubr.f32.mxu0 0.0
      %1630 = vmatmul.mubr.f32.gmra.mrb[0].mxu0 %v1563
      %v1631 = vpop.f32.mrb[0].mxu0
      %v1632 = vadd.f32 0.0, %v1631
      %v1633 = vpop.f32.mrb[0].mxu0
      %1634 = vdwg.mxu0
      %v1636 = vsel %vm1460, %v1103, 0
      %1638 = vmatprep.subr.mxu0 0.0
      %1639 = vmatpush1.xpose.msra.mxu0 %v1487
      %1640 = vmatprep.subr.mxu0 0.0
      %1641 = vmatpush1.xpose.msra.mxu0 %v1490
      %1642 = vmatprep.subr.mxu0 0.0
      %1643 = vmatpush1.xpose.msra.mxu0 0.0
      %1644 = vmatprep.subr.mxu0 0.0
      %1645 = vmatpush1.xpose.msra.mxu0 0.0
      %1646 = vmatprep.subr.mxu0 0.0
      %1647 = vmatpush1.xpose.msra.mxu0 0.0
      %1648 = vmatprep.subr.mxu0 0.0
      %1649 = vmatpush1.xpose.msra.mxu0 0.0
      %1650 = vmatprep.subr.mxu0 0.0
      %1651 = vmatpush1.xpose.msra.mxu0 0.0
      %1652 = vmatprep.subr.mxu0 0.0
      %1653 = vmatpush1.xpose.msra.mxu0 0.0
      %1654 = vmatprep.subr.mxu0 0.0
      %1655 = vmatpush1.xpose.msra.mxu0 0.0
      %1656 = vmatprep.subr.mxu0 0.0
      %1657 = vmatpush1.xpose.msra.mxu0 0.0
      %1658 = vmatprep.subr.mxu0 0.0
      %1659 = vmatpush1.xpose.msra.mxu0 0.0
      %1660 = vmatprep.subr.mxu0 0.0
      %1661 = vmatpush1.xpose.msra.mxu0 0.0
      %1662 = vmatprep.subr.mxu0 0.0
      %1663 = vmatpush1.xpose.msra.mxu0 0.0
      %1664 = vmatprep.subr.mxu0 0.0
      %1665 = vmatpush1.xpose.msra.mxu0 0.0
      %1666 = vmatprep.subr.mxu0 0.0
      %1667 = vmatpush1.xpose.msra.mxu0 0.0
      %1668 = vmatprep.subr.mxu0 0.0
      %1669 = vmatpush1.xpose.msra.mxu0 0.0
      %1670 = vmatprep.subr.mxu0 0.0
      %1671 = vmatpush1.xpose.msra.mxu0 0.0
      %1672 = vmatprep.subr.mxu0 0.0
      %1673 = vmatpush1.xpose.msra.mxu0 0.0
      %1674 = vmatprep.subr.mxu0 0.0
      %1675 = vmatpush1.xpose.msra.mxu0 0.0
      %1676 = vmatprep.subr.mxu0 0.0
      %1677 = vmatpush1.xpose.msra.mxu0 0.0
      %1678 = vmatprep.subr.mxu0 0.0
      %1679 = vmatpush1.xpose.msra.mxu0 0.0
      %1680 = vmatprep.subr.mxu0 0.0
      %1681 = vmatpush1.xpose.msra.mxu0 0.0
      %1682 = vmatprep.subr.mxu0 0.0
      %1683 = vmatpush1.xpose.msra.mxu0 0.0
      %1684 = vmatprep.subr.mxu0 0.0
      %1685 = vmatpush1.xpose.msra.mxu0 0.0
      %1686 = vmatprep.subr.mxu0 0.0
      %1687 = vmatpush1.xpose.msra.mxu0 0.0
      %1688 = vmatprep.subr.mxu0 0.0
      %1689 = vmatpush1.xpose.msra.mxu0 0.0
      %1690 = vmatprep.subr.mxu0 0.0
      %1691 = vmatpush1.xpose.msra.mxu0 0.0
      %1692 = vmatprep.subr.mxu0 0.0
      %1693 = vmatpush1.xpose.msra.mxu0 0.0
      %1694 = vmatprep.subr.mxu0 0.0
      %1695 = vmatpush1.xpose.msra.mxu0 0.0
      %1696 = vmatprep.subr.mxu0 0.0
      %1697 = vmatpush1.xpose.msra.mxu0 0.0
      %1698 = vmatprep.subr.mxu0 0.0
      %1699 = vmatpush1.xpose.msra.mxu0 0.0
      %1700 = vmatprep.subr.mxu0 0.0
      %1701 = vmatpush1.xpose.msra.mxu0 0.0
      %1702 = vmatprep.mubr.f32.mxu0 0.0
      %1703 = vmatmul.mubr.f32.gmra.mrb[0].mxu0 %v1636
      %v1704 = vpop.f32.mrb[0].mxu0
      %v1705 = vadd.f32 0.0, %v1704
      %v1706 = vpop.f32.mrb[0].mxu0
      %1707 = vdwg.mxu0
      %v1709 = vrot.slane %v546, 4
      %1711 = vxpose.xlu0.b32.start [1/16] %v1709, 128
      %1712 = vxpose.xlu0.b32.cont [2/16] 0.0, 128
      %1713 = vxpose.xlu0.b32.cont [3/16] 0.0, 128
      %1714 = vxpose.xlu0.b32.cont [4/16] 0.0, 128
      %1715 = vxpose.xlu0.b32.cont [5/16] 0.0, 128
      %1716 = vxpose.xlu0.b32.cont [6/16] 0.0, 128
      %1717 = vxpose.xlu0.b32.cont [7/16] 0.0, 128
      %1718 = vxpose.xlu0.b32.cont [8/16] 0.0, 128
      %1719 = vxpose.xlu0.b32.cont [9/16] 0.0, 128
      %1720 = vxpose.xlu0.b32.cont [10/16] 0.0, 128
      %1721 = vxpose.xlu0.b32.cont [11/16] 0.0, 128
      %1722 = vxpose.xlu0.b32.cont [12/16] 0.0, 128
      %1723 = vxpose.xlu0.b32.cont [13/16] 0.0, 128
      %1724 = vxpose.xlu0.b32.cont [14/16] 0.0, 128
      %1725 = vxpose.xlu0.b32.cont [15/16] 0.0, 128
      %1726 = vxpose.xlu0.b32.end [16/16] 0.0, 128
      %v1727 = vpop.trf.xlu0
      %v1728 = vpop.trf.xlu0
      %v1729 = vpop.trf.xlu0
      %v1730 = vpop.trf.xlu0
      %v1731 = vpop.trf.xlu0
      %v1732 = vpop.trf.xlu0
      %v1733 = vpop.trf.xlu0
      %v1734 = vpop.trf.xlu0
      %v1735 = vpop.trf.xlu0
      %v1736 = vpop.trf.xlu0
      %v1737 = vpop.trf.xlu0
      %v1738 = vpop.trf.xlu0
      %v1739 = vpop.trf.xlu0
      %v1740 = vpop.trf.xlu0
      %v1741 = vpop.trf.xlu0
      %v1742 = vpop.trf.xlu0
      %v1743 = vrot.slane %v799, 4
      %v1745 = vsel %vm1138, %v1727, 0
      %v1748 = vsel %vm1138, %v1728, 0
      %v1750 = vsel %vm1145, %v1743, 0
      %1752 = vmatprep.subr.mxu0 0.0
      %1753 = vmatpush1.msra.mxu0 %v1750
      %1754 = vmatprep.subr.mxu0 0.0
      %1755 = vmatpush1.msra.mxu0 0.0
      %1756 = vmatprep.subr.mxu0 0.0
      %1757 = vmatpush1.msra.mxu0 0.0
      %1758 = vmatprep.subr.mxu0 0.0
      %1759 = vmatpush1.msra.mxu0 0.0
      %1760 = vmatprep.subr.mxu0 0.0
      %1761 = vmatpush1.msra.mxu0 0.0
      %1762 = vmatprep.subr.mxu0 0.0
      %1763 = vmatpush1.msra.mxu0 0.0
      %1764 = vmatprep.subr.mxu0 0.0
      %1765 = vmatpush1.msra.mxu0 0.0
      %1766 = vmatprep.subr.mxu0 0.0
      %1767 = vmatpush1.msra.mxu0 0.0
      %1768 = vmatprep.subr.mxu0 0.0
      %1769 = vmatpush1.msra.mxu0 0.0
      %1770 = vmatprep.subr.mxu0 0.0
      %1771 = vmatpush1.msra.mxu0 0.0
      %1772 = vmatprep.subr.mxu0 0.0
      %1773 = vmatpush1.msra.mxu0 0.0
      %1774 = vmatprep.subr.mxu0 0.0
      %1775 = vmatpush1.msra.mxu0 0.0
      %1776 = vmatprep.subr.mxu0 0.0
      %1777 = vmatpush1.msra.mxu0 0.0
      %1778 = vmatprep.subr.mxu0 0.0
      %1779 = vmatpush1.msra.mxu0 0.0
      %1780 = vmatprep.subr.mxu0 0.0
      %1781 = vmatpush1.msra.mxu0 0.0
      %1782 = vmatprep.subr.mxu0 0.0
      %1783 = vmatpush1.msra.mxu0 0.0
      %1784 = vmatprep.subr.mxu0 0.0
      %1785 = vmatpush1.msra.mxu0 0.0
      %1786 = vmatprep.subr.mxu0 0.0
      %1787 = vmatpush1.msra.mxu0 0.0
      %1788 = vmatprep.subr.mxu0 0.0
      %1789 = vmatpush1.msra.mxu0 0.0
      %1790 = vmatprep.subr.mxu0 0.0
      %1791 = vmatpush1.msra.mxu0 0.0
      %1792 = vmatprep.subr.mxu0 0.0
      %1793 = vmatpush1.msra.mxu0 0.0
      %1794 = vmatprep.subr.mxu0 0.0
      %1795 = vmatpush1.msra.mxu0 0.0
      %1796 = vmatprep.subr.mxu0 0.0
      %1797 = vmatpush1.msra.mxu0 0.0
      %1798 = vmatprep.subr.mxu0 0.0
      %1799 = vmatpush1.msra.mxu0 0.0
      %1800 = vmatprep.subr.mxu0 0.0
      %1801 = vmatpush1.msra.mxu0 0.0
      %1802 = vmatprep.subr.mxu0 0.0
      %1803 = vmatpush1.msra.mxu0 0.0
      %1804 = vmatprep.subr.mxu0 0.0
      %1805 = vmatpush1.msra.mxu0 0.0
      %1806 = vmatprep.subr.mxu0 0.0
      %1807 = vmatpush1.msra.mxu0 0.0
      %1808 = vmatprep.subr.mxu0 0.0
      %1809 = vmatpush1.msra.mxu0 0.0
      %1810 = vmatprep.subr.mxu0 0.0
      %1811 = vmatpush1.msra.mxu0 0.0
      %1812 = vmatprep.subr.mxu0 0.0
      %1813 = vmatpush1.msra.mxu0 0.0
      %1814 = vmatprep.subr.mxu0 0.0
      %1815 = vmatpush1.msra.mxu0 0.0
      %1816 = vmatprep.mubr.f32.mxu0 0.0
      %1817 = vmatmul.mubr.f32.gmra.mrb[0].mxu0 %v1745
      %v1818 = vpop.f32.mrb[0].mxu0
      %v1819 = vadd.f32 0.0, %v1818
      %v1820 = vpop.f32.mrb[0].mxu0
      %1821 = vmatprep.mubr.f32.mxu0 0.0
      %1822 = vmatmul.mubr.f32.gmra.mrb[0].mxu0 %v1748
      %v1823 = vpop.f32.mrb[0].mxu0
      %v1824 = vadd.f32 0.0, %v1823
      %v1825 = vpop.f32.mrb[0].mxu0
      %1826 = vdwg.mxu0
      %v1828 = vrot.slane %v449, 4
      %1830 = vxpose.xlu0.b32.start [1/16] %v1828, 128
      %1831 = vxpose.xlu0.b32.cont [2/16] 0.0, 128
      %1832 = vxpose.xlu0.b32.cont [3/16] 0.0, 128
      %1833 = vxpose.xlu0.b32.cont [4/16] 0.0, 128
      %1834 = vxpose.xlu0.b32.cont [5/16] 0.0, 128
      %1835 = vxpose.xlu0.b32.cont [6/16] 0.0, 128
      %1836 = vxpose.xlu0.b32.cont [7/16] 0.0, 128
      %1837 = vxpose.xlu0.b32.cont [8/16] 0.0, 128
      %1838 = vxpose.xlu0.b32.cont [9/16] 0.0, 128
      %1839 = vxpose.xlu0.b32.cont [10/16] 0.0, 128
      %1840 = vxpose.xlu0.b32.cont [11/16] 0.0, 128
      %1841 = vxpose.xlu0.b32.cont [12/16] 0.0, 128
      %1842 = vxpose.xlu0.b32.cont [13/16] 0.0, 128
      %1843 = vxpose.xlu0.b32.cont [14/16] 0.0, 128
      %1844 = vxpose.xlu0.b32.cont [15/16] 0.0, 128
      %1845 = vxpose.xlu0.b32.end [16/16] 0.0, 128
      %v1846 = vpop.trf.xlu0
      %v1847 = vpop.trf.xlu0
      %v1848 = vpop.trf.xlu0
      %v1849 = vpop.trf.xlu0
      %v1850 = vpop.trf.xlu0
      %v1851 = vpop.trf.xlu0
      %v1852 = vpop.trf.xlu0
      %v1853 = vpop.trf.xlu0
      %v1854 = vpop.trf.xlu0
      %v1855 = vpop.trf.xlu0
      %v1856 = vpop.trf.xlu0
      %v1857 = vpop.trf.xlu0
      %v1858 = vpop.trf.xlu0
      %v1859 = vpop.trf.xlu0
      %v1860 = vpop.trf.xlu0
      %v1861 = vpop.trf.xlu0
      %v1862 = vrot.slane %v725, 4
      %v1864 = vsel %vm1138, %v1846, 0
      %v1867 = vsel %vm1138, %v1847, 0
      %v1869 = vsel %vm1145, %v1862, 0
      %1871 = vmatprep.subr.mxu0 0.0
      %1872 = vmatpush1.msra.mxu0 %v1869
      %1873 = vmatprep.subr.mxu0 0.0
      %1874 = vmatpush1.msra.mxu0 0.0
      %1875 = vmatprep.subr.mxu0 0.0
      %1876 = vmatpush1.msra.mxu0 0.0
      %1877 = vmatprep.subr.mxu0 0.0
      %1878 = vmatpush1.msra.mxu0 0.0
      %1879 = vmatprep.subr.mxu0 0.0
      %1880 = vmatpush1.msra.mxu0 0.0
      %1881 = vmatprep.subr.mxu0 0.0
      %1882 = vmatpush1.msra.mxu0 0.0
      %1883 = vmatprep.subr.mxu0 0.0
      %1884 = vmatpush1.msra.mxu0 0.0
      %1885 = vmatprep.subr.mxu0 0.0
      %1886 = vmatpush1.msra.mxu0 0.0
      %1887 = vmatprep.subr.mxu0 0.0
      %1888 = vmatpush1.msra.mxu0 0.0
      %1889 = vmatprep.subr.mxu0 0.0
      %1890 = vmatpush1.msra.mxu0 0.0
      %1891 = vmatprep.subr.mxu0 0.0
      %1892 = vmatpush1.msra.mxu0 0.0
      %1893 = vmatprep.subr.mxu0 0.0
      %1894 = vmatpush1.msra.mxu0 0.0
      %1895 = vmatprep.subr.mxu0 0.0
      %1896 = vmatpush1.msra.mxu0 0.0
      %1897 = vmatprep.subr.mxu0 0.0
      %1898 = vmatpush1.msra.mxu0 0.0
      %1899 = vmatprep.subr.mxu0 0.0
      %1900 = vmatpush1.msra.mxu0 0.0
      %1901 = vmatprep.subr.mxu0 0.0
      %1902 = vmatpush1.msra.mxu0 0.0
      %1903 = vmatprep.subr.mxu0 0.0
      %1904 = vmatpush1.msra.mxu0 0.0
      %1905 = vmatprep.subr.mxu0 0.0
      %1906 = vmatpush1.msra.mxu0 0.0
      %1907 = vmatprep.subr.mxu0 0.0
      %1908 = vmatpush1.msra.mxu0 0.0
      %1909 = vmatprep.subr.mxu0 0.0
      %1910 = vmatpush1.msra.mxu0 0.0
      %1911 = vmatprep.subr.mxu0 0.0
      %1912 = vmatpush1.msra.mxu0 0.0
      %1913 = vmatprep.subr.mxu0 0.0
      %1914 = vmatpush1.msra.mxu0 0.0
      %1915 = vmatprep.subr.mxu0 0.0
      %1916 = vmatpush1.msra.mxu0 0.0
      %1917 = vmatprep.subr.mxu0 0.0
      %1918 = vmatpush1.msra.mxu0 0.0
      %1919 = vmatprep.subr.mxu0 0.0
      %1920 = vmatpush1.msra.mxu0 0.0
      %1921 = vmatprep.subr.mxu0 0.0
      %1922 = vmatpush1.msra.mxu0 0.0
      %1923 = vmatprep.subr.mxu0 0.0
      %1924 = vmatpush1.msra.mxu0 0.0
      %1925 = vmatprep.subr.mxu0 0.0
      %1926 = vmatpush1.msra.mxu0 0.0
      %1927 = vmatprep.subr.mxu0 0.0
      %1928 = vmatpush1.msra.mxu0 0.0
      %1929 = vmatprep.subr.mxu0 0.0
      %1930 = vmatpush1.msra.mxu0 0.0
      %1931 = vmatprep.subr.mxu0 0.0
      %1932 = vmatpush1.msra.mxu0 0.0
      %1933 = vmatprep.subr.mxu0 0.0
      %1934 = vmatpush1.msra.mxu0 0.0
      %1935 = vmatprep.mubr.f32.mxu0 0.0
      %1936 = vmatmul.mubr.f32.gmra.mrb[0].mxu0 %v1864
      %v1937 = vpop.f32.mrb[0].mxu0
      %v1938 = vadd.f32 %v1819, %v1937
      %v1939 = vpop.f32.mrb[0].mxu0
      %1940 = vmatprep.mubr.f32.mxu0 0.0
      %1941 = vmatmul.mubr.f32.gmra.mrb[0].mxu0 %v1867
      %v1942 = vpop.f32.mrb[0].mxu0
      %v1943 = vadd.f32 %v1824, %v1942
      %v1944 = vpop.f32.mrb[0].mxu0
      %1945 = vdwg.mxu0
      %v1947 = vrot.slane %v643, 4
      %1949 = vxpose.xlu0.b32.start [1/16] %v1947, 128
      %1950 = vxpose.xlu0.b32.cont [2/16] 0.0, 128
      %1951 = vxpose.xlu0.b32.cont [3/16] 0.0, 128
      %1952 = vxpose.xlu0.b32.cont [4/16] 0.0, 128
      %1953 = vxpose.xlu0.b32.cont [5/16] 0.0, 128
      %1954 = vxpose.xlu0.b32.cont [6/16] 0.0, 128
      %1955 = vxpose.xlu0.b32.cont [7/16] 0.0, 128
      %1956 = vxpose.xlu0.b32.cont [8/16] 0.0, 128
      %1957 = vxpose.xlu0.b32.cont [9/16] 0.0, 128
      %1958 = vxpose.xlu0.b32.cont [10/16] 0.0, 128
      %1959 = vxpose.xlu0.b32.cont [11/16] 0.0, 128
      %1960 = vxpose.xlu0.b32.cont [12/16] 0.0, 128
      %1961 = vxpose.xlu0.b32.cont [13/16] 0.0, 128
      %1962 = vxpose.xlu0.b32.cont [14/16] 0.0, 128
      %1963 = vxpose.xlu0.b32.cont [15/16] 0.0, 128
      %1964 = vxpose.xlu0.b32.end [16/16] 0.0, 128
      %v1965 = vpop.trf.xlu0
      %v1966 = vpop.trf.xlu0
      %v1967 = vpop.trf.xlu0
      %v1968 = vpop.trf.xlu0
      %v1969 = vpop.trf.xlu0
      %v1970 = vpop.trf.xlu0
      %v1971 = vpop.trf.xlu0
      %v1972 = vpop.trf.xlu0
      %v1973 = vpop.trf.xlu0
      %v1974 = vpop.trf.xlu0
      %v1975 = vpop.trf.xlu0
      %v1976 = vpop.trf.xlu0
      %v1977 = vpop.trf.xlu0
      %v1978 = vpop.trf.xlu0
      %v1979 = vpop.trf.xlu0
      %v1980 = vpop.trf.xlu0
      %v1981 = vrot.slane %v873, 4
      %v1983 = vsel %vm1138, %v1965, 0
      %v1986 = vsel %vm1138, %v1966, 0
      %v1988 = vsel %vm1145, %v1981, 0
      %1990 = vmatprep.subr.mxu0 0.0
      %1991 = vmatpush1.msra.mxu0 %v1988
      %1992 = vmatprep.subr.mxu0 0.0
      %1993 = vmatpush1.msra.mxu0 0.0
      %1994 = vmatprep.subr.mxu0 0.0
      %1995 = vmatpush1.msra.mxu0 0.0
      %1996 = vmatprep.subr.mxu0 0.0
      %1997 = vmatpush1.msra.mxu0 0.0
      %1998 = vmatprep.subr.mxu0 0.0
      %1999 = vmatpush1.msra.mxu0 0.0
      %2000 = vmatprep.subr.mxu0 0.0
      %2001 = vmatpush1.msra.mxu0 0.0
      %2002 = vmatprep.subr.mxu0 0.0
      %2003 = vmatpush1.msra.mxu0 0.0
      %2004 = vmatprep.subr.mxu0 0.0
      %2005 = vmatpush1.msra.mxu0 0.0
      %2006 = vmatprep.subr.mxu0 0.0
      %2007 = vmatpush1.msra.mxu0 0.0
      %2008 = vmatprep.subr.mxu0 0.0
      %2009 = vmatpush1.msra.mxu0 0.0
      %2010 = vmatprep.subr.mxu0 0.0
      %2011 = vmatpush1.msra.mxu0 0.0
      %2012 = vmatprep.subr.mxu0 0.0
      %2013 = vmatpush1.msra.mxu0 0.0
      %2014 = vmatprep.subr.mxu0 0.0
      %2015 = vmatpush1.msra.mxu0 0.0
      %2016 = vmatprep.subr.mxu0 0.0
      %2017 = vmatpush1.msra.mxu0 0.0
      %2018 = vmatprep.subr.mxu0 0.0
      %2019 = vmatpush1.msra.mxu0 0.0
      %2020 = vmatprep.subr.mxu0 0.0
      %2021 = vmatpush1.msra.mxu0 0.0
      %2022 = vmatprep.subr.mxu0 0.0
      %2023 = vmatpush1.msra.mxu0 0.0
      %2024 = vmatprep.subr.mxu0 0.0
      %2025 = vmatpush1.msra.mxu0 0.0
      %2026 = vmatprep.subr.mxu0 0.0
      %2027 = vmatpush1.msra.mxu0 0.0
      %2028 = vmatprep.subr.mxu0 0.0
      %2029 = vmatpush1.msra.mxu0 0.0
      %2030 = vmatprep.subr.mxu0 0.0
      %2031 = vmatpush1.msra.mxu0 0.0
      %2032 = vmatprep.subr.mxu0 0.0
      %2033 = vmatpush1.msra.mxu0 0.0
      %2034 = vmatprep.subr.mxu0 0.0
      %2035 = vmatpush1.msra.mxu0 0.0
      %2036 = vmatprep.subr.mxu0 0.0
      %2037 = vmatpush1.msra.mxu0 0.0
      %2038 = vmatprep.subr.mxu0 0.0
      %2039 = vmatpush1.msra.mxu0 0.0
      %2040 = vmatprep.subr.mxu0 0.0
      %2041 = vmatpush1.msra.mxu0 0.0
      %2042 = vmatprep.subr.mxu0 0.0
      %2043 = vmatpush1.msra.mxu0 0.0
      %2044 = vmatprep.subr.mxu0 0.0
      %2045 = vmatpush1.msra.mxu0 0.0
      %2046 = vmatprep.subr.mxu0 0.0
      %2047 = vmatpush1.msra.mxu0 0.0
      %2048 = vmatprep.subr.mxu0 0.0
      %2049 = vmatpush1.msra.mxu0 0.0
      %2050 = vmatprep.subr.mxu0 0.0
      %2051 = vmatpush1.msra.mxu0 0.0
      %2052 = vmatprep.subr.mxu0 0.0
      %2053 = vmatpush1.msra.mxu0 0.0
      %2054 = vmatprep.mubr.f32.mxu0 0.0
      %2055 = vmatmul.mubr.f32.gmra.mrb[0].mxu0 %v1983
      %v2056 = vpop.f32.mrb[0].mxu0
      %v2057 = vadd.f32 0.0, %v2056
      %v2058 = vpop.f32.mrb[0].mxu0
      %2059 = vmatprep.mubr.f32.mxu0 0.0
      %2060 = vmatmul.mubr.f32.gmra.mrb[0].mxu0 %v1986
      %v2061 = vpop.f32.mrb[0].mxu0
      %v2062 = vadd.f32 0.0, %v2061
      %v2063 = vpop.f32.mrb[0].mxu0
      %2064 = vdwg.mxu0
      %v2065 = vadd.f32 %v1938, %v2057
      %v2066 = vadd.f32 %v1943, %v2062
      %v2067 = vmul.f32 %v2065, 0.28867513
      %v2068 = vmul.f32 %v2066, 0.28867513
      %v2069 = vsel %vm1460, %v2067, -inf
      %2070 = vmax.xlane.f32.xlu0 %v2069
      %v2071 = vpop.xlane.xlu0 %2070
      %v2072 = vsel %vm1460, %v2068, -inf
      %2073 = vmax.xlane.f32.xlu0 %v2072
      %v2074 = vpop.xlane.xlu0 %2073
      %v2075 = vsub.f32 %v2067, %v2071
      %v2076 = vsub.f32 %v2068, %v2074
      %v2077 = vmul.f32 %v2075, 1.442695
      %v2078 = vpow.pop %v2077
      %v2079 = vmul.f32 %v2076, 1.442695
      %v2080 = vpow.pop %v2079
      %v2081 = vsel %vm1460, %v2078, 0.0
      %2082 = vadd.xlane.f32.xlu0 %v2081
      %v2083 = vpop.xlane.xlu0 %2082
      %v2084 = vsel %vm1460, %v2080, 0.0
      %2085 = vadd.xlane.f32.xlu0 %v2084
      %v2086 = vpop.xlane.xlu0 %2085
      %v2087 = vrcp.pop %v2083
      %v2088 = vmul.f32 %v2078, %v2087
      %v2089 = vrcp.pop %v2086
      %v2090 = vmul.f32 %v2080, %v2089
      %v2091 = vrot.slane %v955, 4
      %v2092 = vsel %vm1460, %v2091, 0
      %v2095 = vsel %vm1460, %v2088, 0
      %v2098 = vsel %vm1460, %v2090, 0
      %2100 = vmatprep.subr.mxu0 0.0
      %2101 = vmatpush1.xpose.msra.mxu0 %v2095
      %2102 = vmatprep.subr.mxu0 0.0
      %2103 = vmatpush1.xpose.msra.mxu0 %v2098
      %2104 = vmatprep.subr.mxu0 0.0
      %2105 = vmatpush1.xpose.msra.mxu0 0.0
      %2106 = vmatprep.subr.mxu0 0.0
      %2107 = vmatpush1.xpose.msra.mxu0 0.0
      %2108 = vmatprep.subr.mxu0 0.0
      %2109 = vmatpush1.xpose.msra.mxu0 0.0
      %2110 = vmatprep.subr.mxu0 0.0
      %2111 = vmatpush1.xpose.msra.mxu0 0.0
      %2112 = vmatprep.subr.mxu0 0.0
      %2113 = vmatpush1.xpose.msra.mxu0 0.0
      %2114 = vmatprep.subr.mxu0 0.0
      %2115 = vmatpush1.xpose.msra.mxu0 0.0
      %2116 = vmatprep.subr.mxu0 0.0
      %2117 = vmatpush1.xpose.msra.mxu0 0.0
      %2118 = vmatprep.subr.mxu0 0.0
      %2119 = vmatpush1.xpose.msra.mxu0 0.0
      %2120 = vmatprep.subr.mxu0 0.0
      %2121 = vmatpush1.xpose.msra.mxu0 0.0
      %2122 = vmatprep.subr.mxu0 0.0
      %2123 = vmatpush1.xpose.msra.mxu0 0.0
      %2124 = vmatprep.subr.mxu0 0.0
      %2125 = vmatpush1.xpose.msra.mxu0 0.0
      %2126 = vmatprep.subr.mxu0 0.0
      %2127 = vmatpush1.xpose.msra.mxu0 0.0
      %2128 = vmatprep.subr.mxu0 0.0
      %2129 = vmatpush1.xpose.msra.mxu0 0.0
      %2130 = vmatprep.subr.mxu0 0.0
      %2131 = vmatpush1.xpose.msra.mxu0 0.0
      %2132 = vmatprep.subr.mxu0 0.0
      %2133 = vmatpush1.xpose.msra.mxu0 0.0
      %2134 = vmatprep.subr.mxu0 0.0
      %2135 = vmatpush1.xpose.msra.mxu0 0.0
      %2136 = vmatprep.subr.mxu0 0.0
      %2137 = vmatpush1.xpose.msra.mxu0 0.0
      %2138 = vmatprep.subr.mxu0 0.0
      %2139 = vmatpush1.xpose.msra.mxu0 0.0
      %2140 = vmatprep.subr.mxu0 0.0
      %2141 = vmatpush1.xpose.msra.mxu0 0.0
      %2142 = vmatprep.subr.mxu0 0.0
      %2143 = vmatpush1.xpose.msra.mxu0 0.0
      %2144 = vmatprep.subr.mxu0 0.0
      %2145 = vmatpush1.xpose.msra.mxu0 0.0
      %2146 = vmatprep.subr.mxu0 0.0
      %2147 = vmatpush1.xpose.msra.mxu0 0.0
      %2148 = vmatprep.subr.mxu0 0.0
      %2149 = vmatpush1.xpose.msra.mxu0 0.0
      %2150 = vmatprep.subr.mxu0 0.0
      %2151 = vmatpush1.xpose.msra.mxu0 0.0
      %2152 = vmatprep.subr.mxu0 0.0
      %2153 = vmatpush1.xpose.msra.mxu0 0.0
      %2154 = vmatprep.subr.mxu0 0.0
      %2155 = vmatpush1.xpose.msra.mxu0 0.0
      %2156 = vmatprep.subr.mxu0 0.0
      %2157 = vmatpush1.xpose.msra.mxu0 0.0
      %2158 = vmatprep.subr.mxu0 0.0
      %2159 = vmatpush1.xpose.msra.mxu0 0.0
      %2160 = vmatprep.subr.mxu0 0.0
      %2161 = vmatpush1.xpose.msra.mxu0 0.0
      %2162 = vmatprep.subr.mxu0 0.0
      %2163 = vmatpush1.xpose.msra.mxu0 0.0
      %2164 = vmatprep.mubr.f32.mxu0 0.0
      %2165 = vmatmul.mubr.f32.gmra.mrb[0].mxu0 %v2092
      %v2166 = vpop.f32.mrb[0].mxu0
      %v2167 = vadd.f32 0.0, %v2166
      %v2168 = vpop.f32.mrb[0].mxu0
      %2169 = vdwg.mxu0
      %v2170 = vrot.slane %v1029, 4
      %v2171 = vsel %vm1460, %v2170, 0
      %2173 = vmatprep.subr.mxu0 0.0
      %2174 = vmatpush1.xpose.msra.mxu0 %v2095
      %2175 = vmatprep.subr.mxu0 0.0
      %2176 = vmatpush1.xpose.msra.mxu0 %v2098
      %2177 = vmatprep.subr.mxu0 0.0
      %2178 = vmatpush1.xpose.msra.mxu0 0.0
      %2179 = vmatprep.subr.mxu0 0.0
      %2180 = vmatpush1.xpose.msra.mxu0 0.0
      %2181 = vmatprep.subr.mxu0 0.0
      %2182 = vmatpush1.xpose.msra.mxu0 0.0
      %2183 = vmatprep.subr.mxu0 0.0
      %2184 = vmatpush1.xpose.msra.mxu0 0.0
      %2185 = vmatprep.subr.mxu0 0.0
      %2186 = vmatpush1.xpose.msra.mxu0 0.0
      %2187 = vmatprep.subr.mxu0 0.0
      %2188 = vmatpush1.xpose.msra.mxu0 0.0
      %2189 = vmatprep.subr.mxu0 0.0
      %2190 = vmatpush1.xpose.msra.mxu0 0.0
      %2191 = vmatprep.subr.mxu0 0.0
      %2192 = vmatpush1.xpose.msra.mxu0 0.0
      %2193 = vmatprep.subr.mxu0 0.0
      %2194 = vmatpush1.xpose.msra.mxu0 0.0
      %2195 = vmatprep.subr.mxu0 0.0
      %2196 = vmatpush1.xpose.msra.mxu0 0.0
      %2197 = vmatprep.subr.mxu0 0.0
      %2198 = vmatpush1.xpose.msra.mxu0 0.0
      %2199 = vmatprep.subr.mxu0 0.0
      %2200 = vmatpush1.xpose.msra.mxu0 0.0
      %2201 = vmatprep.subr.mxu0 0.0
      %2202 = vmatpush1.xpose.msra.mxu0 0.0
      %2203 = vmatprep.subr.mxu0 0.0
      %2204 = vmatpush1.xpose.msra.mxu0 0.0
      %2205 = vmatprep.subr.mxu0 0.0
      %2206 = vmatpush1.xpose.msra.mxu0 0.0
      %2207 = vmatprep.subr.mxu0 0.0
      %2208 = vmatpush1.xpose.msra.mxu0 0.0
      %2209 = vmatprep.subr.mxu0 0.0
      %2210 = vmatpush1.xpose.msra.mxu0 0.0
      %2211 = vmatprep.subr.mxu0 0.0
      %2212 = vmatpush1.xpose.msra.mxu0 0.0
      %2213 = vmatprep.subr.mxu0 0.0
      %2214 = vmatpush1.xpose.msra.mxu0 0.0
      %2215 = vmatprep.subr.mxu0 0.0
      %2216 = vmatpush1.xpose.msra.mxu0 0.0
      %2217 = vmatprep.subr.mxu0 0.0
      %2218 = vmatpush1.xpose.msra.mxu0 0.0
      %2219 = vmatprep.subr.mxu0 0.0
      %2220 = vmatpush1.xpose.msra.mxu0 0.0
      %2221 = vmatprep.subr.mxu0 0.0
      %2222 = vmatpush1.xpose.msra.mxu0 0.0
      %2223 = vmatprep.subr.mxu0 0.0
      %2224 = vmatpush1.xpose.msra.mxu0 0.0
      %2225 = vmatprep.subr.mxu0 0.0
      %2226 = vmatpush1.xpose.msra.mxu0 0.0
      %2227 = vmatprep.subr.mxu0 0.0
      %2228 = vmatpush1.xpose.msra.mxu0 0.0
      %2229 = vmatprep.subr.mxu0 0.0
      %2230 = vmatpush1.xpose.msra.mxu0 0.0
      %2231 = vmatprep.subr.mxu0 0.0
      %2232 = vmatpush1.xpose.msra.mxu0 0.0
      %2233 = vmatprep.subr.mxu0 0.0
      %2234 = vmatpush1.xpose.msra.mxu0 0.0
      %2235 = vmatprep.subr.mxu0 0.0
      %2236 = vmatpush1.xpose.msra.mxu0 0.0
      %2237 = vmatprep.mubr.f32.mxu0 0.0
      %2238 = vmatmul.mubr.f32.gmra.mrb[0].mxu0 %v2171
      %v2239 = vpop.f32.mrb[0].mxu0
      %v2240 = vadd.f32 0.0, %v2239
      %v2241 = vpop.f32.mrb[0].mxu0
      %2242 = vdwg.mxu0
      %v2243 = vrot.slane %v1103, 4
      %v2244 = vsel %vm1460, %v2243, 0
      %2246 = vmatprep.subr.mxu0 0.0
      %2247 = vmatpush1.xpose.msra.mxu0 %v2095
      %2248 = vmatprep.subr.mxu0 0.0
      %2249 = vmatpush1.xpose.msra.mxu0 %v2098
      %2250 = vmatprep.subr.mxu0 0.0
      %2251 = vmatpush1.xpose.msra.mxu0 0.0
      %2252 = vmatprep.subr.mxu0 0.0
      %2253 = vmatpush1.xpose.msra.mxu0 0.0
      %2254 = vmatprep.subr.mxu0 0.0
      %2255 = vmatpush1.xpose.msra.mxu0 0.0
      %2256 = vmatprep.subr.mxu0 0.0
      %2257 = vmatpush1.xpose.msra.mxu0 0.0
      %2258 = vmatprep.subr.mxu0 0.0
      %2259 = vmatpush1.xpose.msra.mxu0 0.0
      %2260 = vmatprep.subr.mxu0 0.0
      %2261 = vmatpush1.xpose.msra.mxu0 0.0
      %2262 = vmatprep.subr.mxu0 0.0
      %2263 = vmatpush1.xpose.msra.mxu0 0.0
      %2264 = vmatprep.subr.mxu0 0.0
      %2265 = vmatpush1.xpose.msra.mxu0 0.0
      %2266 = vmatprep.subr.mxu0 0.0
      %2267 = vmatpush1.xpose.msra.mxu0 0.0
      %2268 = vmatprep.subr.mxu0 0.0
      %2269 = vmatpush1.xpose.msra.mxu0 0.0
      %2270 = vmatprep.subr.mxu0 0.0
      %2271 = vmatpush1.xpose.msra.mxu0 0.0
      %2272 = vmatprep.subr.mxu0 0.0
      %2273 = vmatpush1.xpose.msra.mxu0 0.0
      %2274 = vmatprep.subr.mxu0 0.0
      %2275 = vmatpush1.xpose.msra.mxu0 0.0
      %2276 = vmatprep.subr.mxu0 0.0
      %2277 = vmatpush1.xpose.msra.mxu0 0.0
      %2278 = vmatprep.subr.mxu0 0.0
      %2279 = vmatpush1.xpose.msra.mxu0 0.0
      %2280 = vmatprep.subr.mxu0 0.0
      %2281 = vmatpush1.xpose.msra.mxu0 0.0
      %2282 = vmatprep.subr.mxu0 0.0
      %2283 = vmatpush1.xpose.msra.mxu0 0.0
      %2284 = vmatprep.subr.mxu0 0.0
      %2285 = vmatpush1.xpose.msra.mxu0 0.0
      %2286 = vmatprep.subr.mxu0 0.0
      %2287 = vmatpush1.xpose.msra.mxu0 0.0
      %2288 = vmatprep.subr.mxu0 0.0
      %2289 = vmatpush1.xpose.msra.mxu0 0.0
      %2290 = vmatprep.subr.mxu0 0.0
      %2291 = vmatpush1.xpose.msra.mxu0 0.0
      %2292 = vmatprep.subr.mxu0 0.0
      %2293 = vmatpush1.xpose.msra.mxu0 0.0
      %2294 = vmatprep.subr.mxu0 0.0
      %2295 = vmatpush1.xpose.msra.mxu0 0.0
      %2296 = vmatprep.subr.mxu0 0.0
      %2297 = vmatpush1.xpose.msra.mxu0 0.0
      %2298 = vmatprep.subr.mxu0 0.0
      %2299 = vmatpush1.xpose.msra.mxu0 0.0
      %2300 = vmatprep.subr.mxu0 0.0
      %2301 = vmatpush1.xpose.msra.mxu0 0.0
      %2302 = vmatprep.subr.mxu0 0.0
      %2303 = vmatpush1.xpose.msra.mxu0 0.0
      %2304 = vmatprep.subr.mxu0 0.0
      %2305 = vmatpush1.xpose.msra.mxu0 0.0
      %2306 = vmatprep.subr.mxu0 0.0
      %2307 = vmatpush1.xpose.msra.mxu0 0.0
      %2308 = vmatprep.subr.mxu0 0.0
      %2309 = vmatpush1.xpose.msra.mxu0 0.0
      %2310 = vmatprep.mubr.f32.mxu0 0.0
      %2311 = vmatmul.mubr.f32.gmra.mrb[0].mxu0 %v2244
      %v2312 = vpop.f32.mrb[0].mxu0
      %v2313 = vadd.f32 0.0, %v2312
      %v2314 = vpop.f32.mrb[0].mxu0
      %2315 = vdwg.mxu0
      %v2317 = vrot.slane %v2167, 4
      %v2319 = vsel %vm1145, %v1559, %v2317
      %v2321 = vrot.slane %v2240, 4
      %v2323 = vsel %vm1145, %v1632, %v2321
      %v2325 = vrot.slane %v2313, 4
      %v2327 = vsel %vm1145, %v1705, %v2325
      %s2328 = scalar_lea.vmem %s1, 24
      %v2329 = vld [vmem:[%s2328] sm:$0xff]
      %s2330 = scalar_lea.vmem %s2, 24
      %v2331 = vld [vmem:[%s2330] sm:$0xff]
      %2333 = vset.pattern.permute.xlu0 0
      %2334 = vperm.xlu0 %2333, %v2331
      %v2335 = vpop.permute.xlu0 %2334
      %v2338 = vsel %vm378, %v2329, 0
      %2340 = vmatprep.subr.mxu0 0.0
      %2341 = vmatpush1.msra.mxu0 %v2319
      %2342 = vmatprep.subr.mxu0 0.0
      %2343 = vmatpush1.msra.mxu0 0.0
      %2344 = vmatprep.subr.mxu0 0.0
      %2345 = vmatpush1.msra.mxu0 0.0
      %2346 = vmatprep.subr.mxu0 0.0
      %2347 = vmatpush1.msra.mxu0 0.0
      %2348 = vmatprep.subr.mxu0 0.0
      %2349 = vmatpush1.msra.mxu0 0.0
      %2350 = vmatprep.subr.mxu0 0.0
      %2351 = vmatpush1.msra.mxu0 0.0
      %2352 = vmatprep.subr.mxu0 0.0
      %2353 = vmatpush1.msra.mxu0 0.0
      %2354 = vmatprep.subr.mxu0 0.0
      %2355 = vmatpush1.msra.mxu0 0.0
      %2356 = vmatprep.subr.mxu0 0.0
      %2357 = vmatpush1.msra.mxu0 0.0
      %2358 = vmatprep.subr.mxu0 0.0
      %2359 = vmatpush1.msra.mxu0 0.0
      %2360 = vmatprep.subr.mxu0 0.0
      %2361 = vmatpush1.msra.mxu0 0.0
      %2362 = vmatprep.subr.mxu0 0.0
      %2363 = vmatpush1.msra.mxu0 0.0
      %2364 = vmatprep.subr.mxu0 0.0
      %2365 = vmatpush1.msra.mxu0 0.0
      %2366 = vmatprep.subr.mxu0 0.0
      %2367 = vmatpush1.msra.mxu0 0.0
      %2368 = vmatprep.subr.mxu0 0.0
      %2369 = vmatpush1.msra.mxu0 0.0
      %2370 = vmatprep.subr.mxu0 0.0
      %2371 = vmatpush1.msra.mxu0 0.0
      %2372 = vmatprep.subr.mxu0 0.0
      %2373 = vmatpush1.msra.mxu0 0.0
      %2374 = vmatprep.subr.mxu0 0.0
      %2375 = vmatpush1.msra.mxu0 0.0
      %2376 = vmatprep.subr.mxu0 0.0
      %2377 = vmatpush1.msra.mxu0 0.0
      %2378 = vmatprep.subr.mxu0 0.0
      %2379 = vmatpush1.msra.mxu0 0.0
      %2380 = vmatprep.subr.mxu0 0.0
      %2381 = vmatpush1.msra.mxu0 0.0
      %2382 = vmatprep.subr.mxu0 0.0
      %2383 = vmatpush1.msra.mxu0 0.0
      %2384 = vmatprep.subr.mxu0 0.0
      %2385 = vmatpush1.msra.mxu0 0.0
      %2386 = vmatprep.subr.mxu0 0.0
      %2387 = vmatpush1.msra.mxu0 0.0
      %2388 = vmatprep.subr.mxu0 0.0
      %2389 = vmatpush1.msra.mxu0 0.0
      %2390 = vmatprep.subr.mxu0 0.0
      %2391 = vmatpush1.msra.mxu0 0.0
      %2392 = vmatprep.subr.mxu0 0.0
      %2393 = vmatpush1.msra.mxu0 0.0
      %2394 = vmatprep.subr.mxu0 0.0
      %2395 = vmatpush1.msra.mxu0 0.0
      %2396 = vmatprep.subr.mxu0 0.0
      %2397 = vmatpush1.msra.mxu0 0.0
      %2398 = vmatprep.subr.mxu0 0.0
      %2399 = vmatpush1.msra.mxu0 0.0
      %2400 = vmatprep.subr.mxu0 0.0
      %2401 = vmatpush1.msra.mxu0 0.0
      %2402 = vmatprep.subr.mxu0 0.0
      %2403 = vmatpush1.msra.mxu0 0.0
      %2404 = vmatprep.mubr.f32.mxu0 0.0
      %2405 = vmatmul.mubr.f32.gmra.mrb[0].mxu0 %v2338
      %v2406 = vpop.f32.mrb[0].mxu0
      %v2407 = vadd.f32 %v2335, %v2406
      %v2408 = vpop.f32.mrb[0].mxu0
      %2409 = vdwg.mxu0
      %2410 = vset.pattern.permute.xlu0 1
      %2411 = vperm.xlu0 %2410, %v2331
      %v2412 = vpop.permute.xlu0 %2411
      %2414 = vmatprep.subr.mxu0 0.0
      %2415 = vmatpush1.msra.mxu0 %v2323
      %2416 = vmatprep.subr.mxu0 0.0
      %2417 = vmatpush1.msra.mxu0 0.0
      %2418 = vmatprep.subr.mxu0 0.0
      %2419 = vmatpush1.msra.mxu0 0.0
      %2420 = vmatprep.subr.mxu0 0.0
      %2421 = vmatpush1.msra.mxu0 0.0
      %2422 = vmatprep.subr.mxu0 0.0
      %2423 = vmatpush1.msra.mxu0 0.0
      %2424 = vmatprep.subr.mxu0 0.0
      %2425 = vmatpush1.msra.mxu0 0.0
      %2426 = vmatprep.subr.mxu0 0.0
      %2427 = vmatpush1.msra.mxu0 0.0
      %2428 = vmatprep.subr.mxu0 0.0
      %2429 = vmatpush1.msra.mxu0 0.0
      %2430 = vmatprep.subr.mxu0 0.0
      %2431 = vmatpush1.msra.mxu0 0.0
      %2432 = vmatprep.subr.mxu0 0.0
      %2433 = vmatpush1.msra.mxu0 0.0
      %2434 = vmatprep.subr.mxu0 0.0
      %2435 = vmatpush1.msra.mxu0 0.0
      %2436 = vmatprep.subr.mxu0 0.0
      %2437 = vmatpush1.msra.mxu0 0.0
      %2438 = vmatprep.subr.mxu0 0.0
      %2439 = vmatpush1.msra.mxu0 0.0
      %2440 = vmatprep.subr.mxu0 0.0
      %2441 = vmatpush1.msra.mxu0 0.0
      %2442 = vmatprep.subr.mxu0 0.0
      %2443 = vmatpush1.msra.mxu0 0.0
      %2444 = vmatprep.subr.mxu0 0.0
      %2445 = vmatpush1.msra.mxu0 0.0
      %2446 = vmatprep.subr.mxu0 0.0
      %2447 = vmatpush1.msra.mxu0 0.0
      %2448 = vmatprep.subr.mxu0 0.0
      %2449 = vmatpush1.msra.mxu0 0.0
      %2450 = vmatprep.subr.mxu0 0.0
      %2451 = vmatpush1.msra.mxu0 0.0
      %2452 = vmatprep.subr.mxu0 0.0
      %2453 = vmatpush1.msra.mxu0 0.0
      %2454 = vmatprep.subr.mxu0 0.0
      %2455 = vmatpush1.msra.mxu0 0.0
      %2456 = vmatprep.subr.mxu0 0.0
      %2457 = vmatpush1.msra.mxu0 0.0
      %2458 = vmatprep.subr.mxu0 0.0
      %2459 = vmatpush1.msra.mxu0 0.0
      %2460 = vmatprep.subr.mxu0 0.0
      %2461 = vmatpush1.msra.mxu0 0.0
      %2462 = vmatprep.subr.mxu0 0.0
      %2463 = vmatpush1.msra.mxu0 0.0
      %2464 = vmatprep.subr.mxu0 0.0
      %2465 = vmatpush1.msra.mxu0 0.0
      %2466 = vmatprep.subr.mxu0 0.0
      %2467 = vmatpush1.msra.mxu0 0.0
      %2468 = vmatprep.subr.mxu0 0.0
      %2469 = vmatpush1.msra.mxu0 0.0
      %2470 = vmatprep.subr.mxu0 0.0
      %2471 = vmatpush1.msra.mxu0 0.0
      %2472 = vmatprep.subr.mxu0 0.0
      %2473 = vmatpush1.msra.mxu0 0.0
      %2474 = vmatprep.subr.mxu0 0.0
      %2475 = vmatpush1.msra.mxu0 0.0
      %2476 = vmatprep.subr.mxu0 0.0
      %2477 = vmatpush1.msra.mxu0 0.0
      %2478 = vmatprep.mubr.f32.mxu0 0.0
      %2479 = vmatmul.mubr.f32.gmra.mrb[0].mxu0 %v2338
      %v2480 = vpop.f32.mrb[0].mxu0
      %v2481 = vadd.f32 %v2412, %v2480
      %v2482 = vpop.f32.mrb[0].mxu0
      %2483 = vdwg.mxu0
      %2484 = vset.pattern.permute.xlu0 2
      %2485 = vperm.xlu0 %2484, %v2331
      %v2486 = vpop.permute.xlu0 %2485
      %2488 = vmatprep.subr.mxu0 0.0
      %2489 = vmatpush1.msra.mxu0 %v2327
      %2490 = vmatprep.subr.mxu0 0.0
      %2491 = vmatpush1.msra.mxu0 0.0
      %2492 = vmatprep.subr.mxu0 0.0
      %2493 = vmatpush1.msra.mxu0 0.0
      %2494 = vmatprep.subr.mxu0 0.0
      %2495 = vmatpush1.msra.mxu0 0.0
      %2496 = vmatprep.subr.mxu0 0.0
      %2497 = vmatpush1.msra.mxu0 0.0
      %2498 = vmatprep.subr.mxu0 0.0
      %2499 = vmatpush1.msra.mxu0 0.0
      %2500 = vmatprep.subr.mxu0 0.0
      %2501 = vmatpush1.msra.mxu0 0.0
      %2502 = vmatprep.subr.mxu0 0.0
      %2503 = vmatpush1.msra.mxu0 0.0
      %2504 = vmatprep.subr.mxu0 0.0
      %2505 = vmatpush1.msra.mxu0 0.0
      %2506 = vmatprep.subr.mxu0 0.0
      %2507 = vmatpush1.msra.mxu0 0.0
      %2508 = vmatprep.subr.mxu0 0.0
      %2509 = vmatpush1.msra.mxu0 0.0
      %2510 = vmatprep.subr.mxu0 0.0
      %2511 = vmatpush1.msra.mxu0 0.0
      %2512 = vmatprep.subr.mxu0 0.0
      %2513 = vmatpush1.msra.mxu0 0.0
      %2514 = vmatprep.subr.mxu0 0.0
      %2515 = vmatpush1.msra.mxu0 0.0
      %2516 = vmatprep.subr.mxu0 0.0
      %2517 = vmatpush1.msra.mxu0 0.0
      %2518 = vmatprep.subr.mxu0 0.0
      %2519 = vmatpush1.msra.mxu0 0.0
      %2520 = vmatprep.subr.mxu0 0.0
      %2521 = vmatpush1.msra.mxu0 0.0
      %2522 = vmatprep.subr.mxu0 0.0
      %2523 = vmatpush1.msra.mxu0 0.0
      %2524 = vmatprep.subr.mxu0 0.0
      %2525 = vmatpush1.msra.mxu0 0.0
      %2526 = vmatprep.subr.mxu0 0.0
      %2527 = vmatpush1.msra.mxu0 0.0
      %2528 = vmatprep.subr.mxu0 0.0
      %2529 = vmatpush1.msra.mxu0 0.0
      %2530 = vmatprep.subr.mxu0 0.0
      %2531 = vmatpush1.msra.mxu0 0.0
      %2532 = vmatprep.subr.mxu0 0.0
      %2533 = vmatpush1.msra.mxu0 0.0
      %2534 = vmatprep.subr.mxu0 0.0
      %2535 = vmatpush1.msra.mxu0 0.0
      %2536 = vmatprep.subr.mxu0 0.0
      %2537 = vmatpush1.msra.mxu0 0.0
      %2538 = vmatprep.subr.mxu0 0.0
      %2539 = vmatpush1.msra.mxu0 0.0
      %2540 = vmatprep.subr.mxu0 0.0
      %2541 = vmatpush1.msra.mxu0 0.0
      %2542 = vmatprep.subr.mxu0 0.0
      %2543 = vmatpush1.msra.mxu0 0.0
      %2544 = vmatprep.subr.mxu0 0.0
      %2545 = vmatpush1.msra.mxu0 0.0
      %2546 = vmatprep.subr.mxu0 0.0
      %2547 = vmatpush1.msra.mxu0 0.0
      %2548 = vmatprep.subr.mxu0 0.0
      %2549 = vmatpush1.msra.mxu0 0.0
      %2550 = vmatprep.subr.mxu0 0.0
      %2551 = vmatpush1.msra.mxu0 0.0
      %2552 = vmatprep.mubr.f32.mxu0 0.0
      %2553 = vmatmul.mubr.f32.gmra.mrb[0].mxu0 %v2338
      %v2554 = vpop.f32.mrb[0].mxu0
      %v2555 = vadd.f32 %v2486, %v2554
      %v2556 = vpop.f32.mrb[0].mxu0
      %2557 = vdwg.mxu0
      %v2558 = vmul.f32 %v2407, %v2407
      %v2559 = vmul.f32 %v2481, %v2481
      %v2560 = vadd.f32 %v2558, %v2559
      %v2561 = vmul.f32 %v2555, %v2555
      %v2562 = vadd.f32 %v2560, %v2561
      %v2563 = vrsqrt.pop %v2562
      %v2564 = vmul.f32 %v2562, %v2563
      %vm2565 = vcmp.eq.f32.partialorder %v2562, inf
      %v2566 = vsel %vm2565, %v2562, %v2564
      %vm2567 = vcmp.eq.f32.partialorder %v2562, 0.0
      %v2568 = vand.u32 %v2562, 2147483648
      %v2569 = vsel %vm2567, %v2568, %v2566
      %v2570 = vadd.f32 %v2569, 1e-06
      %v2571 = vsel %vm1460, %v2570, 0.0
      %v2572 = vrot.slane %v2571, 4
      %v2573 = vadd.f32 %v2571, %v2572
      %v2574 = vrot.slane %v2573, 2
      %v2575 = vadd.f32 %v2573, %v2574
      %v2576 = vrot.slane %v2575, 1
      %v2577 = vadd.f32 %v2575, %v2576
      %v2578 = vrcp.pop 8.0
      %v2579 = vmul.f32 %v2577, %v2578
      %v2580 = vsub.f32 %v2570, %v2579
      %v2581 = vmul.f32 %v2580, %v2580
      %v2582 = vsel %vm1460, %v2581, 0.0
      %v2583 = vrot.slane %v2582, 4
      %v2584 = vadd.f32 %v2582, %v2583
      %v2585 = vrot.slane %v2584, 2
      %v2586 = vadd.f32 %v2584, %v2585
      %v2587 = vrot.slane %v2586, 1
      %v2588 = vadd.f32 %v2586, %v2587
      %v2589 = vmul.f32 %v2588, %v2578
      %v2590 = vadd.f32 %v2589, 1e-05
      %v2591 = vrsqrt.pop %v2590
      %v2592 = vmul.f32 %v2580, %v2591
      %v2593 = vld [vmem:[%s3] sm:$0xff]
      %2595 = vset.pattern.permute.xlu0 0
      %2596 = vperm.xlu0 %2595, %v2593
      %v2597 = vpop.permute.xlu0 %2596
      %v2599 = vmul.f32 %v2592, %v2597
      %v2600 = vld [vmem:[%s4] sm:$0xff]
      %2602 = vset.pattern.permute.xlu0 0
      %2603 = vperm.xlu0 %2602, %v2600
      %v2604 = vpop.permute.xlu0 %2603
      %v2606 = vadd.f32 %v2599, %v2604
      %v2607 = vrcp.pop %v2570
      %v2608 = vmul.f32 %v2606, %v2607
      %v2609 = vmul.f32 %v2407, %v2608
      %v2610 = vadd.f32 %v2609, %v376
      %v2611 = vmul.f32 %v2481, %v2608
      %v2612 = vadd.f32 %v2611, %v477
      %v2613 = vmul.f32 %v2555, %v2608
      %v2614 = vadd.f32 %v2613, %v574
      %v2616 = vcombine.high %v2610, %v2610
      %v2618 = vunpack.c.l.s4 1966171168
      %v2619 = vunpack.c.0.s8 %v2618
      %v2620 = vlaneseq
      %v2621 = vshrl.u32 %v2620, 7
      %v2622 = vsub.s32 %v2619, %v2621
      %v2623 = vrot.slane %v2610, %v2622
      %v2625 = vunpack.c.l.s4 1966171168
      %v2626 = vunpack.c.0.s8 %v2625
      %v2627 = vlaneseq
      %v2628 = vshrl.u32 %v2627, 7
      %v2629 = vsub.s32 %v2626, %v2628
      %v2630 = vrot.slane %v2616, %v2629
      %v2631 = vcombine.high %v2623, %v2623
      %v2632 = vcombine.high %v2630, %v2630
      %v2634 = vunpack.c.l.s4 1966171168
      %v2635 = vunpack.c.0.s8 %v2634
      %v2636 = vlaneseq
      %v2637 = vshrl.u32 %v2636, 7
      %v2638 = vsub.s32 %v2635, %v2637
      %v2639 = vrot.slane %v2623, %v2638
      %v2641 = vunpack.c.l.s4 1966171168
      %v2642 = vunpack.c.0.s8 %v2641
      %v2643 = vlaneseq
      %v2644 = vshrl.u32 %v2643, 7
      %v2645 = vsub.s32 %v2642, %v2644
      %v2646 = vrot.slane %v2630, %v2645
      %v2648 = vunpack.c.l.s4 1966171168
      %v2649 = vunpack.c.0.s8 %v2648
      %v2650 = vlaneseq
      %v2651 = vshrl.u32 %v2650, 7
      %v2652 = vsub.s32 %v2649, %v2651
      %v2653 = vrot.slane %v2631, %v2652
      %v2655 = vunpack.c.l.s4 1966171168
      %v2656 = vunpack.c.0.s8 %v2655
      %v2657 = vlaneseq
      %v2658 = vshrl.u32 %v2657, 7
      %v2659 = vsub.s32 %v2656, %v2658
      %v2660 = vrot.slane %v2632, %v2659
      %v2661 = vcombine.high %v2639, %v2639
      %v2662 = vcombine.high %v2646, %v2646
      %v2663 = vcombine.high %v2653, %v2653
      %v2664 = vcombine.high %v2660, %v2660
      %vm2673 = vcmask 122880
      %2674 = vst.msk [vmem:[%s312] sm:$0x1] %vm2673, %v2639
      %2675 = vst.msk [vmem:[%s312 + $0x4] sm:$0x1] %vm2673, %v2653
      %2676 = vst.msk [vmem:[%s312 + $0x8] sm:$0x1] %vm2673, %v2661
      %2677 = vst.msk [vmem:[%s312 + $0xc] sm:$0x1] %vm2673, %v2663
      %2678 = vst.msk [vmem:[%s312 + $0x10] sm:$0x1] %vm2673, %v2646
      %2679 = vst.msk [vmem:[%s312 + $0x14] sm:$0x1] %vm2673, %v2660
      %2680 = vst.msk [vmem:[%s312 + $0x18] sm:$0x1] %vm2673, %v2662
      %2681 = vst.msk [vmem:[%s312 + $0x1c] sm:$0x1] %vm2673, %v2664
      %v2683 = vcombine.high %v2612, %v2612
      %v2685 = vunpack.c.l.s4 1966171168
      %v2686 = vunpack.c.0.s8 %v2685
      %v2687 = vlaneseq
      %v2688 = vshrl.u32 %v2687, 7
      %v2689 = vsub.s32 %v2686, %v2688
      %v2690 = vrot.slane %v2612, %v2689
      %v2692 = vunpack.c.l.s4 1966171168
      %v2693 = vunpack.c.0.s8 %v2692
      %v2694 = vlaneseq
      %v2695 = vshrl.u32 %v2694, 7
      %v2696 = vsub.s32 %v2693, %v2695
      %v2697 = vrot.slane %v2683, %v2696
      %v2698 = vcombine.high %v2690, %v2690
      %v2699 = vcombine.high %v2697, %v2697
      %v2701 = vunpack.c.l.s4 1966171168
      %v2702 = vunpack.c.0.s8 %v2701
      %v2703 = vlaneseq
      %v2704 = vshrl.u32 %v2703, 7
      %v2705 = vsub.s32 %v2702, %v2704
      %v2706 = vrot.slane %v2690, %v2705
      %v2708 = vunpack.c.l.s4 1966171168
      %v2709 = vunpack.c.0.s8 %v2708
      %v2710 = vlaneseq
      %v2711 = vshrl.u32 %v2710, 7
      %v2712 = vsub.s32 %v2709, %v2711
      %v2713 = vrot.slane %v2697, %v2712
      %v2715 = vunpack.c.l.s4 1966171168
      %v2716 = vunpack.c.0.s8 %v2715
      %v2717 = vlaneseq
      %v2718 = vshrl.u32 %v2717, 7
      %v2719 = vsub.s32 %v2716, %v2718
      %v2720 = vrot.slane %v2698, %v2719
      %v2722 = vunpack.c.l.s4 1966171168
      %v2723 = vunpack.c.0.s8 %v2722
      %v2724 = vlaneseq
      %v2725 = vshrl.u32 %v2724, 7
      %v2726 = vsub.s32 %v2723, %v2725
      %v2727 = vrot.slane %v2699, %v2726
      %v2728 = vcombine.high %v2706, %v2706
      %v2729 = vcombine.high %v2713, %v2713
      %v2730 = vcombine.high %v2720, %v2720
      %v2731 = vcombine.high %v2727, %v2727
      %2740 = vst.msk [vmem:[%s312 + $0x1] sm:$0x1] %vm2673, %v2706
      %2741 = vst.msk [vmem:[%s312 + $0x5] sm:$0x1] %vm2673, %v2720
      %2742 = vst.msk [vmem:[%s312 + $0x9] sm:$0x1] %vm2673, %v2728
      %2743 = vst.msk [vmem:[%s312 + $0xd] sm:$0x1] %vm2673, %v2730
      %2744 = vst.msk [vmem:[%s312 + $0x11] sm:$0x1] %vm2673, %v2713
      %2745 = vst.msk [vmem:[%s312 + $0x15] sm:$0x1] %vm2673, %v2727
      %2746 = vst.msk [vmem:[%s312 + $0x19] sm:$0x1] %vm2673, %v2729
      %2747 = vst.msk [vmem:[%s312 + $0x1d] sm:$0x1] %vm2673, %v2731
      %v2749 = vcombine.high %v2614, %v2614
      %v2751 = vunpack.c.l.s4 1966171168
      %v2752 = vunpack.c.0.s8 %v2751
      %v2753 = vlaneseq
      %v2754 = vshrl.u32 %v2753, 7
      %v2755 = vsub.s32 %v2752, %v2754
      %v2756 = vrot.slane %v2614, %v2755
      %v2758 = vunpack.c.l.s4 1966171168
      %v2759 = vunpack.c.0.s8 %v2758
      %v2760 = vlaneseq
      %v2761 = vshrl.u32 %v2760, 7
      %v2762 = vsub.s32 %v2759, %v2761
      %v2763 = vrot.slane %v2749, %v2762
      %v2764 = vcombine.high %v2756, %v2756
      %v2765 = vcombine.high %v2763, %v2763
      %v2767 = vunpack.c.l.s4 1966171168
      %v2768 = vunpack.c.0.s8 %v2767
      %v2769 = vlaneseq
      %v2770 = vshrl.u32 %v2769, 7
      %v2771 = vsub.s32 %v2768, %v2770
      %v2772 = vrot.slane %v2756, %v2771
      %v2774 = vunpack.c.l.s4 1966171168
      %v2775 = vunpack.c.0.s8 %v2774
      %v2776 = vlaneseq
      %v2777 = vshrl.u32 %v2776, 7
      %v2778 = vsub.s32 %v2775, %v2777
      %v2779 = vrot.slane %v2763, %v2778
      %v2781 = vunpack.c.l.s4 1966171168
      %v2782 = vunpack.c.0.s8 %v2781
      %v2783 = vlaneseq
      %v2784 = vshrl.u32 %v2783, 7
      %v2785 = vsub.s32 %v2782, %v2784
      %v2786 = vrot.slane %v2764, %v2785
      %v2788 = vunpack.c.l.s4 1966171168
      %v2789 = vunpack.c.0.s8 %v2788
      %v2790 = vlaneseq
      %v2791 = vshrl.u32 %v2790, 7
      %v2792 = vsub.s32 %v2789, %v2791
      %v2793 = vrot.slane %v2765, %v2792
      %v2794 = vcombine.high %v2772, %v2772
      %v2795 = vcombine.high %v2779, %v2779
      %v2796 = vcombine.high %v2786, %v2786
      %v2797 = vcombine.high %v2793, %v2793
      %2806 = vst.msk [vmem:[%s312 + $0x2] sm:$0x1] %vm2673, %v2772
      %2807 = vst.msk [vmem:[%s312 + $0x6] sm:$0x1] %vm2673, %v2786
      %2808 = vst.msk [vmem:[%s312 + $0xa] sm:$0x1] %vm2673, %v2794
      %2809 = vst.msk [vmem:[%s312 + $0xe] sm:$0x1] %vm2673, %v2796
      %2810 = vst.msk [vmem:[%s312 + $0x12] sm:$0x1] %vm2673, %v2779
      %2811 = vst.msk [vmem:[%s312 + $0x16] sm:$0x1] %vm2673, %v2793
      %2812 = vst.msk [vmem:[%s312 + $0x1a] sm:$0x1] %vm2673, %v2795
      %2813 = vst.msk [vmem:[%s312 + $0x1e] sm:$0x1] %vm2673, %v2797
      %v2814 = vld [vmem:[%s5] sm:$0xff]
      %v2815 = vld [vmem:[%s6] sm:$0xff]
      %2817 = vset.pattern.permute.xlu0 0
      %2818 = vperm.xlu0 %2817, %v2815
      %v2819 = vpop.permute.xlu0 %2818
      %v2822 = vsel %vm378, %v2814, 0
      %2824 = vmatprep.subr.mxu0 0.0
      %2825 = vmatpush1.msra.mxu0 %v2610
      %2826 = vmatprep.subr.mxu0 0.0
      %2827 = vmatpush1.msra.mxu0 0.0
      %2828 = vmatprep.subr.mxu0 0.0
      %2829 = vmatpush1.msra.mxu0 0.0
      %2830 = vmatprep.subr.mxu0 0.0
      %2831 = vmatpush1.msra.mxu0 0.0
      %2832 = vmatprep.subr.mxu0 0.0
      %2833 = vmatpush1.msra.mxu0 0.0
      %2834 = vmatprep.subr.mxu0 0.0
      %2835 = vmatpush1.msra.mxu0 0.0
      %2836 = vmatprep.subr.mxu0 0.0
      %2837 = vmatpush1.msra.mxu0 0.0
      %2838 = vmatprep.subr.mxu0 0.0
      %2839 = vmatpush1.msra.mxu0 0.0
      %2840 = vmatprep.subr.mxu0 0.0
      %2841 = vmatpush1.msra.mxu0 0.0
      %2842 = vmatprep.subr.mxu0 0.0
      %2843 = vmatpush1.msra.mxu0 0.0
      %2844 = vmatprep.subr.mxu0 0.0
      %2845 = vmatpush1.msra.mxu0 0.0
      %2846 = vmatprep.subr.mxu0 0.0
      %2847 = vmatpush1.msra.mxu0 0.0
      %2848 = vmatprep.subr.mxu0 0.0
      %2849 = vmatpush1.msra.mxu0 0.0
      %2850 = vmatprep.subr.mxu0 0.0
      %2851 = vmatpush1.msra.mxu0 0.0
      %2852 = vmatprep.subr.mxu0 0.0
      %2853 = vmatpush1.msra.mxu0 0.0
      %2854 = vmatprep.subr.mxu0 0.0
      %2855 = vmatpush1.msra.mxu0 0.0
      %2856 = vmatprep.subr.mxu0 0.0
      %2857 = vmatpush1.msra.mxu0 0.0
      %2858 = vmatprep.subr.mxu0 0.0
      %2859 = vmatpush1.msra.mxu0 0.0
      %2860 = vmatprep.subr.mxu0 0.0
      %2861 = vmatpush1.msra.mxu0 0.0
      %2862 = vmatprep.subr.mxu0 0.0
      %2863 = vmatpush1.msra.mxu0 0.0
      %2864 = vmatprep.subr.mxu0 0.0
      %2865 = vmatpush1.msra.mxu0 0.0
      %2866 = vmatprep.subr.mxu0 0.0
      %2867 = vmatpush1.msra.mxu0 0.0
      %2868 = vmatprep.subr.mxu0 0.0
      %2869 = vmatpush1.msra.mxu0 0.0
      %2870 = vmatprep.subr.mxu0 0.0
      %2871 = vmatpush1.msra.mxu0 0.0
      %2872 = vmatprep.subr.mxu0 0.0
      %2873 = vmatpush1.msra.mxu0 0.0
      %2874 = vmatprep.subr.mxu0 0.0
      %2875 = vmatpush1.msra.mxu0 0.0
      %2876 = vmatprep.subr.mxu0 0.0
      %2877 = vmatpush1.msra.mxu0 0.0
      %2878 = vmatprep.subr.mxu0 0.0
      %2879 = vmatpush1.msra.mxu0 0.0
      %2880 = vmatprep.subr.mxu0 0.0
      %2881 = vmatpush1.msra.mxu0 0.0
      %2882 = vmatprep.subr.mxu0 0.0
      %2883 = vmatpush1.msra.mxu0 0.0
      %2884 = vmatprep.subr.mxu0 0.0
      %2885 = vmatpush1.msra.mxu0 0.0
      %2886 = vmatprep.subr.mxu0 0.0
      %2887 = vmatpush1.msra.mxu0 0.0
      %2888 = vmatprep.mubr.f32.mxu0 0.0
      %2889 = vmatmul.mubr.f32.gmra.mrb[0].mxu0 %v2822
      %v2890 = vpop.f32.mrb[0].mxu0
      %v2891 = vadd.f32 %v2819, %v2890
      %v2892 = vpop.f32.mrb[0].mxu0
      %2893 = vdwg.mxu0
      %2894 = vset.pattern.permute.xlu0 1
      %2895 = vperm.xlu0 %2894, %v2815
      %v2896 = vpop.permute.xlu0 %2895
      %2898 = vmatprep.subr.mxu0 0.0
      %2899 = vmatpush1.msra.mxu0 %v2612
      %2900 = vmatprep.subr.mxu0 0.0
      %2901 = vmatpush1.msra.mxu0 0.0
      %2902 = vmatprep.subr.mxu0 0.0
      %2903 = vmatpush1.msra.mxu0 0.0
      %2904 = vmatprep.subr.mxu0 0.0
      %2905 = vmatpush1.msra.mxu0 0.0
      %2906 = vmatprep.subr.mxu0 0.0
      %2907 = vmatpush1.msra.mxu0 0.0
      %2908 = vmatprep.subr.mxu0 0.0
      %2909 = vmatpush1.msra.mxu0 0.0
      %2910 = vmatprep.subr.mxu0 0.0
      %2911 = vmatpush1.msra.mxu0 0.0
      %2912 = vmatprep.subr.mxu0 0.0
      %2913 = vmatpush1.msra.mxu0 0.0
      %2914 = vmatprep.subr.mxu0 0.0
      %2915 = vmatpush1.msra.mxu0 0.0
      %2916 = vmatprep.subr.mxu0 0.0
      %2917 = vmatpush1.msra.mxu0 0.0
      %2918 = vmatprep.subr.mxu0 0.0
      %2919 = vmatpush1.msra.mxu0 0.0
      %2920 = vmatprep.subr.mxu0 0.0
      %2921 = vmatpush1.msra.mxu0 0.0
      %2922 = vmatprep.subr.mxu0 0.0
      %2923 = vmatpush1.msra.mxu0 0.0
      %2924 = vmatprep.subr.mxu0 0.0
      %2925 = vmatpush1.msra.mxu0 0.0
      %2926 = vmatprep.subr.mxu0 0.0
      %2927 = vmatpush1.msra.mxu0 0.0
      %2928 = vmatprep.subr.mxu0 0.0
      %2929 = vmatpush1.msra.mxu0 0.0
      %2930 = vmatprep.subr.mxu0 0.0
      %2931 = vmatpush1.msra.mxu0 0.0
      %2932 = vmatprep.subr.mxu0 0.0
      %2933 = vmatpush1.msra.mxu0 0.0
      %2934 = vmatprep.subr.mxu0 0.0
      %2935 = vmatpush1.msra.mxu0 0.0
      %2936 = vmatprep.subr.mxu0 0.0
      %2937 = vmatpush1.msra.mxu0 0.0
      %2938 = vmatprep.subr.mxu0 0.0
      %2939 = vmatpush1.msra.mxu0 0.0
      %2940 = vmatprep.subr.mxu0 0.0
      %2941 = vmatpush1.msra.mxu0 0.0
      %2942 = vmatprep.subr.mxu0 0.0
      %2943 = vmatpush1.msra.mxu0 0.0
      %2944 = vmatprep.subr.mxu0 0.0
      %2945 = vmatpush1.msra.mxu0 0.0
      %2946 = vmatprep.subr.mxu0 0.0
      %2947 = vmatpush1.msra.mxu0 0.0
      %2948 = vmatprep.subr.mxu0 0.0
      %2949 = vmatpush1.msra.mxu0 0.0
      %2950 = vmatprep.subr.mxu0 0.0
      %2951 = vmatpush1.msra.mxu0 0.0
      %2952 = vmatprep.subr.mxu0 0.0
      %2953 = vmatpush1.msra.mxu0 0.0
      %2954 = vmatprep.subr.mxu0 0.0
      %2955 = vmatpush1.msra.mxu0 0.0
      %2956 = vmatprep.subr.mxu0 0.0
      %2957 = vmatpush1.msra.mxu0 0.0
      %2958 = vmatprep.subr.mxu0 0.0
      %2959 = vmatpush1.msra.mxu0 0.0
      %2960 = vmatprep.subr.mxu0 0.0
      %2961 = vmatpush1.msra.mxu0 0.0
      %2962 = vmatprep.mubr.f32.mxu0 0.0
      %2963 = vmatmul.mubr.f32.gmra.mrb[0].mxu0 %v2822
      %v2964 = vpop.f32.mrb[0].mxu0
      %v2965 = vadd.f32 %v2896, %v2964
      %v2966 = vpop.f32.mrb[0].mxu0
      %2967 = vdwg.mxu0
      %2968 = vset.pattern.permute.xlu0 2
      %2969 = vperm.xlu0 %2968, %v2815
      %v2970 = vpop.permute.xlu0 %2969
      %2972 = vmatprep.subr.mxu0 0.0
      %2973 = vmatpush1.msra.mxu0 %v2614
      %2974 = vmatprep.subr.mxu0 0.0
      %2975 = vmatpush1.msra.mxu0 0.0
      %2976 = vmatprep.subr.mxu0 0.0
      %2977 = vmatpush1.msra.mxu0 0.0
      %2978 = vmatprep.subr.mxu0 0.0
      %2979 = vmatpush1.msra.mxu0 0.0
      %2980 = vmatprep.subr.mxu0 0.0
      %2981 = vmatpush1.msra.mxu0 0.0
      %2982 = vmatprep.subr.mxu0 0.0
      %2983 = vmatpush1.msra.mxu0 0.0
      %2984 = vmatprep.subr.mxu0 0.0
      %2985 = vmatpush1.msra.mxu0 0.0
      %2986 = vmatprep.subr.mxu0 0.0
      %2987 = vmatpush1.msra.mxu0 0.0
      %2988 = vmatprep.subr.mxu0 0.0
      %2989 = vmatpush1.msra.mxu0 0.0
      %2990 = vmatprep.subr.mxu0 0.0
      %2991 = vmatpush1.msra.mxu0 0.0
      %2992 = vmatprep.subr.mxu0 0.0
      %2993 = vmatpush1.msra.mxu0 0.0
      %2994 = vmatprep.subr.mxu0 0.0
      %2995 = vmatpush1.msra.mxu0 0.0
      %2996 = vmatprep.subr.mxu0 0.0
      %2997 = vmatpush1.msra.mxu0 0.0
      %2998 = vmatprep.subr.mxu0 0.0
      %2999 = vmatpush1.msra.mxu0 0.0
      %3000 = vmatprep.subr.mxu0 0.0
      %3001 = vmatpush1.msra.mxu0 0.0
      %3002 = vmatprep.subr.mxu0 0.0
      %3003 = vmatpush1.msra.mxu0 0.0
      %3004 = vmatprep.subr.mxu0 0.0
      %3005 = vmatpush1.msra.mxu0 0.0
      %3006 = vmatprep.subr.mxu0 0.0
      %3007 = vmatpush1.msra.mxu0 0.0
      %3008 = vmatprep.subr.mxu0 0.0
      %3009 = vmatpush1.msra.mxu0 0.0
      %3010 = vmatprep.subr.mxu0 0.0
      %3011 = vmatpush1.msra.mxu0 0.0
      %3012 = vmatprep.subr.mxu0 0.0
      %3013 = vmatpush1.msra.mxu0 0.0
      %3014 = vmatprep.subr.mxu0 0.0
      %3015 = vmatpush1.msra.mxu0 0.0
      %3016 = vmatprep.subr.mxu0 0.0
      %3017 = vmatpush1.msra.mxu0 0.0
      %3018 = vmatprep.subr.mxu0 0.0
      %3019 = vmatpush1.msra.mxu0 0.0
      %3020 = vmatprep.subr.mxu0 0.0
      %3021 = vmatpush1.msra.mxu0 0.0
      %3022 = vmatprep.subr.mxu0 0.0
      %3023 = vmatpush1.msra.mxu0 0.0
      %3024 = vmatprep.subr.mxu0 0.0
      %3025 = vmatpush1.msra.mxu0 0.0
      %3026 = vmatprep.subr.mxu0 0.0
      %3027 = vmatpush1.msra.mxu0 0.0
      %3028 = vmatprep.subr.mxu0 0.0
      %3029 = vmatpush1.msra.mxu0 0.0
      %3030 = vmatprep.subr.mxu0 0.0
      %3031 = vmatpush1.msra.mxu0 0.0
      %3032 = vmatprep.subr.mxu0 0.0
      %3033 = vmatpush1.msra.mxu0 0.0
      %3034 = vmatprep.subr.mxu0 0.0
      %3035 = vmatpush1.msra.mxu0 0.0
      %3036 = vmatprep.mubr.f32.mxu0 0.0
      %3037 = vmatmul.mubr.f32.gmra.mrb[0].mxu0 %v2822
      %v3038 = vpop.f32.mrb[0].mxu0
      %v3039 = vadd.f32 %v2970, %v3038
      %v3040 = vpop.f32.mrb[0].mxu0
      %3041 = vdwg.mxu0
      %v3042 = vmul.f32 %v2891, %v2891
      %v3043 = vmul.f32 %v2965, %v2965
      %v3044 = vadd.f32 %v3042, %v3043
      %v3045 = vmul.f32 %v3039, %v3039
      %v3046 = vadd.f32 %v3044, %v3045
      %v3047 = vrsqrt.pop %v3046
      %v3048 = vmul.f32 %v3046, %v3047
      %vm3049 = vcmp.eq.f32.partialorder %v3046, inf
      %v3050 = vsel %vm3049, %v3046, %v3048
      %vm3051 = vcmp.eq.f32.partialorder %v3046, 0.0
      %v3052 = vand.u32 %v3046, 2147483648
      %v3053 = vsel %vm3051, %v3052, %v3050
      %v3054 = vadd.f32 %v3053, 1e-06
      %v3055 = vsel %vm1460, %v3054, 0.0
      %3056 = vadd.xlane.f32.xlu0 %v3055
      %v3057 = vpop.xlane.xlu0 %3056
      %vm3058 = vcmask 7168
      %3059 = vst.msk [vmem:[%s316] sm:$0xff] %vm3058, %v3057
      %v3060 = vmul.f32 %v3054, %v3054
      %v3061 = vsel %vm1460, %v3060, 0.0
      %3062 = vadd.xlane.f32.xlu0 %v3061
      %v3063 = vpop.xlane.xlu0 %3062
      %vm3064 = vcmask 15368
      %3065 = vst.msk [vmem:[%s316] sm:$0xff] %vm3064, %v3063
      %p3066 = scmp.lt.s32.totalorder %s20, 1
      %s3067 = scalar_select %p3066, %s20, 1
      %s3068 = smul.addr %s3067, 8
      %s3069 = smul.addr %s3068, 4
      %s3070 = scalar_lea.vmem %s7, %s3069
      %p3071 = scmp.lt.s32.totalorder %s20, 1
      %s3072 = scalar_select %p3071, %s20, 1
      %s3073 = smul.addr %s3072, 8
      %s3074 = scalar_lea.vmem %s8, %s3073
      // Predicated region
      $region49: #{transformer_block.2} parent=47 // pred_check
        %p3075 = pneg %p190
      $region50: #{transformer_block.2} parent=47 // pred_check_branch
        %3077 = sbr.rel (%p3075) target = $region52
      $region51: #{transformer_block.2} parent=47 // pred_region
        _
      $region52: #{transformer_block.2} parent=47 // pred_fallthru
        _
      // Predicated region
      $region53: #{transformer_block.2} parent=47 // pred_check
        %p3078 = pneg %p216
      $region54: #{transformer_block.2} parent=47 // pred_check_branch
        %3080 = sbr.rel (%p3078) target = $region56
      $region55: #{transformer_block.2} parent=47 // pred_region
        _
      $region56: #{transformer_block.2} parent=47 // pred_fallthru
        _
    $region48: #{transformer_block.2} parent=5 // pred_fallthru
      _
    %p3081 = scmp.le.s32.totalorder 2, %s15
    // Predicated region
    $region57: #{transformer_block.2} parent=5 // pred_check
      %p3082 = pneg %p3081
    $region58: #{transformer_block.2} parent=5 // pred_check_branch
      %3084 = sbr.rel (%p3082) target = $region60
    $region59: #{transformer_block.2} parent=5 // pred_region
      %s3085 = ssub.s32 %s15, 2
      // Predicated region
      $region61: #{transformer_block.2} parent=59 // pred_check
        %p3086 = pneg %p196
      $region62: #{transformer_block.2} parent=59 // pred_check_branch
        %3088 = sbr.rel (%p3086) target = $region64
      $region63: #{transformer_block.2} parent=59 // pred_region
        %p3089 = scmp.lt.s32.totalorder %s21, 1
        %s3090 = scalar_select %p3089, %s21, 1
        %s3091 = smul.addr %s3090, 8
        %s3092 = smul.addr %s3091, 4
        %s3093 = scalar_lea.vmem %s7, %s3092
      $region64: #{transformer_block.2} parent=59 // pred_fallthru
        _
      // Predicated region
      $region65: #{transformer_block.2} parent=59 // pred_check
        %p3094 = pneg %p222
      $region66: #{transformer_block.2} parent=59 // pred_check_branch
        %3096 = sbr.rel (%p3094) target = $region68
      $region67: #{transformer_block.2} parent=59 // pred_region
        %p3097 = scmp.lt.s32.totalorder %s21, 1
        %s3098 = scalar_select %p3097, %s21, 1
        %s3099 = smul.addr %s3098, 8
        %s3100 = scalar_lea.vmem %s8, %s3099
      $region68: #{transformer_block.2} parent=59 // pred_fallthru
        _
    $region60: #{transformer_block.2} parent=5 // pred_fallthru
      _
  $region6: #{transformer_block.2} parent=0 // loop_footer
    %s19 = sadd.s32 1, %s15
  $region7: #{transformer_block.2} parent=0 // loop_footer_branch
    %14 = sbr.rel target = $region3
  $region8: #{transformer_block.2} parent=0 // loop_exit
    _

</llo_original>
